<compile_context>
chip_gen: v7x
topology: tpu7x:2x2x1
jax: 0.10.0
libtpu: 0.0.40
codegen_flags: <defaults>
</compile_context>

<pallas_src>
import functools

import jax
import jax.numpy as jnp
from jax.experimental import pallas as pl
from jax.experimental.pallas import tpu as pltpu


def _round_up(v, m):
    return ((v + m - 1) // m) * m


def _vmem_capacity_bytes():
    """Per-core VMEM capacity (generation-aware); conservative fallback = v7x's 64 MiB."""
    try:
        cap = getattr(pltpu.get_tpu_info(), "vmem_capacity_bytes", None)
        if cap:
            return int(cap)
    except Exception:
        pass
    return 64 << 20


def _col_tile(n):
    """K (node-column) tile for the aggregation contraction.

    Must exactly divide N: a partial K tile would let out-of-bounds adj columns /
    proj rows contaminate in-bounds output rows. Fall back to the full dim otherwise
    (always a legal block size)."""
    for tk in (2048, 1024, 512, 256, 128):
        if n % tk == 0:
            return tk
    return n


def _row_tile(n, n_cols, elem_bytes, vmem_cap):
    """Row tile: largest tm whose double-buffered (tm, n_cols) slab fits a
    generation-aware budget (32 MiB on 128-MiB parts, 16 MiB on v7x), capped at 512,
    and guaranteeing >=2 row tiles so the 'parallel' axis feeds both v7x TensorCores."""
    budget = max(4 << 20, min(vmem_cap // 4, 32 << 20))
    tm = budget // (2 * max(n_cols, 1) * elem_bytes)
    tm = min(tm, 512, n)
    if tm < n:
        tm = max(8, (tm // 8) * 8)          # sublane aligned
    if n > 8 and pl.cdiv(n, tm) == 1:
        tm = max(8, _round_up(pl.cdiv(n, 2), 8))   # at least 2 parallel tiles
    return tm


# ---------------------------------------------------------------------------
# Kernels
# ---------------------------------------------------------------------------

def _han_project_kernel(x_ref, w_ref, o_ref):
    # proj = x @ W_all : (tm, F_in)bf16 @ (F_in, R*F_pad)bf16 -> bf16, f32 MXU accumulation.
    o_ref[...] = jnp.dot(
        x_ref[...], w_ref[...], preferred_element_type=jnp.float32
    ).astype(o_ref.dtype)


def _han_agg_kernel(adj_ref, proj_ref, mb_ref, o_ref, acc_ref, *, inv_r, apply_relu):
    r = pl.program_id(1)
    k = pl.program_id(2)
    nr = pl.num_programs(1)
    nk = pl.num_programs(2)

    @pl.when(jnp.logical_and(r == 0, k == 0))
    def _():
        acc_ref[...] = jnp.zeros_like(acc_ref)

    # sum over (r, k):  adj[r][row_tile, k_tile] @ proj[k_tile, r], f32 accumulation.
    acc_ref[...] += jnp.dot(
        adj_ref[0], proj_ref[...], preferred_element_type=jnp.float32
    )

    @pl.when(jnp.logical_and(r == nr - 1, k == nk - 1))
    def _():
        out = acc_ref[...] * inv_r + mb_ref[...]
        if apply_relu:
            out = jnp.maximum(out, 0.0)
        o_ref[...] = out.astype(o_ref.dtype)


# ---------------------------------------------------------------------------
# Layer wrapper
# ---------------------------------------------------------------------------

def han_layer(x, adj_stream, w, b, *, apply_relu, out_dtype):
    """One HANLayer forward.

    x          : (N, F_in)   float32 or bfloat16 node features
    adj_stream : (R, N, N)   bfloat16 dense adjacency (cast once per forward)
    w          : (R, F_out, F_in)  nn.Linear weight layout
    b          : (R, 1, F_out)
    """
    R, N, _ = adj_stream.shape
    F_out, F_in = w.shape[1], w.shape[2]
    F_pad = _round_up(F_out, 128)               # lane-dense output width

    vmem_cap = _vmem_capacity_bytes()
    vmem_limit = int(min(vmem_cap * 3 // 4, 100 << 20))

    tk = _col_tile(N)
    tm = _row_tile(N, tk, adj_stream.dtype.itemsize, vmem_cap)

    # ---- host-side layout plumbing (no in-kernel transposes) ----------------
    # W_all : (F_in, R*F_pad), column block r holds W[r]^T zero-padded to F_pad lanes.
    w_t = jnp.swapaxes(w, 1, 2)                                   # (R, F_in, F_out)
    w_t = jnp.pad(w_t, ((0, 0), (0, 0), (0, F_pad - F_out)))
    w_all = jnp.transpose(w_t, (1, 0, 2)).reshape(F_in, R * F_pad).astype(jnp.bfloat16)
    # mean-over-R bias, hoisted out of the reduction (mean is linear).
    mb = jnp.mean(b[:, 0, :], axis=0)
    mb = jnp.pad(mb, (0, F_pad - F_out)).reshape(1, F_pad).astype(jnp.float32)

    x_bf = x.astype(jnp.bfloat16)   # no-op for hidden layers (already bf16)

    # ---- 1) projection kernel: proj = x @ W_all (bf16 output) ---------------
    proj = pl.pallas_call(
        _han_project_kernel,
        out_shape=jax.ShapeDtypeStruct((N, R * F_pad), jnp.bfloat16),
        grid_spec=pltpu.PrefetchScalarGridSpec(
            num_scalar_prefetch=0,
            grid=(pl.cdiv(N, tm),),
            in_specs=[
                pl.BlockSpec((tm, F_in), lambda i: (i, 0)),
                pl.BlockSpec((F_in, R * F_pad), lambda i: (0, 0)),
            ],
            out_specs=pl.BlockSpec((tm, R * F_pad), lambda i: (i, 0)),
        ),
        compiler_params=pltpu.CompilerParams(
            dimension_semantics=("parallel",),
            vmem_limit_bytes=vmem_limit,
        ),
    )(x_bf, w_all)

    # ---- 2) aggregation kernel: mean_r adj[r] @ proj_r + mean_b (+ReLU) -----
    kernel = functools.partial(
        _han_agg_kernel, inv_r=1.0 / float(R), apply_relu=apply_relu
    )
    out = pl.pallas_call(
        kernel,
        out_shape=jax.ShapeDtypeStruct((N, F_pad), out_dtype),
        grid_spec=pltpu.PrefetchScalarGridSpec(
            num_scalar_prefetch=0,
            grid=(pl.cdiv(N, tm), R, pl.cdiv(N, tk)),
            in_specs=[
                pl.BlockSpec((1, tm, tk), lambda i, r, k: (r, i, k)),   # adj[r] tile
                pl.BlockSpec((tk, F_pad), lambda i, r, k: (k, r)),      # proj K-tile of r
                pl.BlockSpec((1, F_pad), lambda i, r, k: (0, 0)),       # mean bias (resident)
            ],
            out_specs=pl.BlockSpec((tm, F_pad), lambda i, r, k: (i, 0)),
            scratch_shapes=[pltpu.VMEM((tm, F_pad), jnp.float32)],      # f32 accumulator
        ),
        compiler_params=pltpu.CompilerParams(
            dimension_semantics=("parallel", "arbitrary", "arbitrary"),
            vmem_limit_bytes=vmem_limit,
        ),
    )(adj_stream, proj, mb)

    if F_pad != F_out:
        out = out[:, :F_out]
    return out


# ---------------------------------------------------------------------------
# Full model
# ---------------------------------------------------------------------------

def init_han_params(key, in_features, hidden_features, out_features,
                    num_relations, num_layers):
    """Deterministic parameter init mimicking nn.Linear shapes (W:(out,in), b:(out,))."""
    params = []
    layer_dims = []
    for i in range(num_layers - 1):
        layer_dims.append((in_features if i == 0 else hidden_features, hidden_features))
    layer_dims.append((hidden_features, out_features))

    for (f_in, f_out) in layer_dims:
        key, kw, kb = jax.random.split(key, 3)
        bound = 1.0 / jnp.sqrt(jnp.float32(f_in))
        w = jax.random.uniform(kw, (num_relations, f_out, f_in), jnp.float32,
                               minval=-bound, maxval=bound)
        b = jax.random.uniform(kb, (num_relations, 1, f_out), jnp.float32,
                               minval=-bound, maxval=bound)
        params.append((w, b))
    return params


def han_forward(x, adj, params):
    """(num_layers-1) hidden HANLayers with ReLU (+identity dropout), then output layer."""
    adj_stream = adj.astype(jnp.bfloat16)   # halve the dominant HBM streaming traffic
    n_layers = len(params)
    for i, (w, b) in enumerate(params):
        last = i == n_layers - 1
        x = han_layer(x, adj_stream, w, b,
                      apply_relu=not last,
                      out_dtype=jnp.float32 if last else jnp.bfloat16)
        # TODO(synk): training-mode dropout not implemented (identity in eval mode).
    return x


def _reference_forward(x, adj, params):
    """Pure-JAX f32 reference for correctness checking."""
    n_layers = len(params)
    for i, (w, b) in enumerate(params):
        outs = []
        for r in range(adj.shape[0]):
            h = adj[r] @ x
            h = h @ w[r].T + b[r]
            outs.append(h)
        x = jnp.mean(jnp.stack(outs, axis=0), axis=0)
        if i != n_layers - 1:
            x = jax.nn.relu(x)
    return x


if __name__ == "__main__":
    # Small synthetic problem consistent with the module's forward pass.
    num_nodes = 256
    in_features = 64
    hidden_features = 128
    out_features = 8
    num_relations = 3
    num_layers = 3

    key = jax.random.PRNGKey(0)
    key, kx, kadj, kparams = jax.random.split(key, 4)

    x = jax.random.normal(kx, (num_nodes, in_features), jnp.float32)
    # Dense, row-normalized "adjacency" matrices per relation.
    adj_raw = jax.random.uniform(kadj, (num_relations, num_nodes, num_nodes), jnp.float32)
    adj = adj_raw / jnp.sum(adj_raw, axis=-1, keepdims=True)

    params = init_han_params(kparams, in_features, hidden_features, out_features,
                             num_relations, num_layers)

    han_fwd = jax.jit(han_forward)
    out = han_fwd(x, adj, params)
    out = jax.block_until_ready(out)

    ref = _reference_forward(x, adj, params)
    assert out.shape == (num_nodes, out_features)
    # bf16 streaming of adj / x / W / proj changes rounding vs the f32 reference;
    # tolerances sized accordingly.
    assert jnp.allclose(out, ref, atol=3e-2, rtol=3e-2), "mismatch vs reference"

    print("KERNEL_OK")
</pallas_src>

<mosaic_0001>
module attributes {stable_mosaic.version = 11 : i64} {
  func.func @_han_project_kernel(%arg0: i32, %arg1: memref<128x64xbf16, #tpu.memory_space<vmem>>, %arg2: memref<64x384xbf16, #tpu.memory_space<vmem>>, %arg3: memref<128x384xbf16, #tpu.memory_space<vmem>>) attributes {dimension_semantics = [#tpu.dimension_semantics<parallel>], iteration_bounds = array<i64: 2>, scalar_prefetch = 0 : i64, scratch_operands = 0 : i64, tpu.core_type = #tpu.core_type<tc>, window_params = [{transform_indices = @transform_0, window_bounds = array<i64: 128, 64>}, {pipeline_mode = #tpu.pipeline_mode<synchronous>, transform_indices = @transform_1, window_bounds = array<i64: 64, 384>}, {transform_indices = @transform_2, window_bounds = array<i64: 128, 384>}]} {
    %c0 = arith.constant 0 : index
    %c0_0 = arith.constant 0 : index
    %0 = vector.load %arg1[%c0, %c0_0] : memref<128x64xbf16, #tpu.memory_space<vmem>>, vector<128x64xbf16>
    %c0_1 = arith.constant 0 : index
    %c0_2 = arith.constant 0 : index
    %1 = vector.load %arg2[%c0_1, %c0_2] : memref<64x384xbf16, #tpu.memory_space<vmem>>, vector<64x384xbf16>
    %cst = arith.constant dense<0.000000e+00> : vector<128x384xf32>
    %2 = tpu.matmul %0, %1, %cst {dimension_numbers = #tpu.dot_dimension_numbers<[1], [0], [0], [1], [0, 0, 1, 1], [], []>} : vector<128x64xbf16>, vector<64x384xbf16>, vector<128x384xf32> -> vector<128x384xf32>
    %3 = arith.truncf %2 : vector<128x384xf32> to vector<128x384xbf16>
    %c0_3 = arith.constant 0 : index
    %c0_4 = arith.constant 0 : index
    %4 = vector.load %arg3[%c0_3, %c0_4] : memref<128x384xbf16, #tpu.memory_space<vmem>>, vector<128x384xbf16>
    tpu.vector_store %arg3[%c0_3, %c0_4], %3 {strides = array<i32>} : memref<128x384xbf16, #tpu.memory_space<vmem>>, vector<128x384xbf16>,
    return
  }
  func.func @transform_0(%arg0: i32) -> (i32, i32) {
    %c0_i32 = arith.constant 0 : i32
    %c0_i32_0 = arith.constant 0 : i32
    return %arg0, %c0_i32 : i32, i32
  }
  func.func @transform_1(%arg0: i32) -> (i32, i32) {
    %c0_i32 = arith.constant 0 : i32
    %c0_i32_0 = arith.constant 0 : i32
    %c0_i32_1 = arith.constant 0 : i32
    return %c0_i32, %c0_i32_0 : i32, i32
  }
  func.func @transform_2(%arg0: i32) -> (i32, i32) {
    %c0_i32 = arith.constant 0 : i32
    %c0_i32_0 = arith.constant 0 : i32
    return %arg0, %c0_i32 : i32, i32
  }
}

module attributes {stable_mosaic.version = 11 : i64} {
  func.func @_han_agg_kernel(%arg0: i32, %arg1: i32, %arg2: i32, %arg3: memref<1x128x256xbf16, #tpu.memory_space<vmem>>, %arg4: memref<256x128xbf16, #tpu.memory_space<vmem>>, %arg5: memref<1x128xf32, #tpu.memory_space<vmem>>, %arg6: memref<128x128xbf16, #tpu.memory_space<vmem>>, %arg7: memref<128x128xf32, #tpu.memory_space<vmem>>) attributes {dimension_semantics = [#tpu.dimension_semantics<parallel>, #tpu.dimension_semantics<arbitrary>, #tpu.dimension_semantics<arbitrary>], iteration_bounds = array<i64: 2, 3, 1>, scalar_prefetch = 0 : i64, scratch_operands = 1 : i64, tpu.core_type = #tpu.core_type<tc>, window_params = [{transform_indices = @transform_0, window_bounds = array<i64: 1, 128, 256>}, {transform_indices = @transform_1, window_bounds = array<i64: 256, 128>}, {pipeline_mode = #tpu.pipeline_mode<synchronous>, transform_indices = @transform_2, window_bounds = array<i64: 1, 128>}, {transform_indices = @transform_3, window_bounds = array<i64: 128, 128>}]} {
    %c0_i32 = arith.constant 0 : i32
    %0 = arith.cmpi eq, %arg1, %c0_i32 : i32
    %c0_i32_0 = arith.constant 0 : i32
    %1 = arith.cmpi eq, %arg2, %c0_i32_0 : i32
    %2 = arith.andi %0, %1 : i1
    %3 = arith.extui %2 : i1 to i32
    %c0_i32_1 = arith.constant 0 : i32
    %4 = arith.cmpi ne, %3, %c0_i32_1 : i32
    scf.if %4 {
      %cst_12 = arith.constant 0.000000e+00 : f32
      %17 = vector.broadcast %cst_12 : f32 to vector<128x128xf32>
      %c0_13 = arith.constant 0 : index
      %c0_14 = arith.constant 0 : index
      %18 = vector.load %arg7[%c0_13, %c0_14] : memref<128x128xf32, #tpu.memory_space<vmem>>, vector<128x128xf32>
      tpu.vector_store %arg7[%c0_13, %c0_14], %17 {strides = array<i32>} : memref<128x128xf32, #tpu.memory_space<vmem>>, vector<128x128xf32>,
    } else {
    }
    %c0 = arith.constant 0 : index
    %c0_2 = arith.constant 0 : index
    %5 = vector.load %arg7[%c0, %c0_2] : memref<128x128xf32, #tpu.memory_space<vmem>>, vector<128x128xf32>
    %c0_3 = arith.constant 0 : index
    %c0_4 = arith.constant 0 : index
    %c0_5 = arith.constant 0 : index
    %6 = vector.load %arg3[%c0_3, %c0_4, %c0_5] : memref<1x128x256xbf16, #tpu.memory_space<vmem>>, vector<1x128x256xbf16>
    %7 = vector.shape_cast %6 : vector<1x128x256xbf16> to vector<128x256xbf16>
    %c0_6 = arith.constant 0 : index
    %c0_7 = arith.constant 0 : index
    %8 = vector.load %arg4[%c0_6, %c0_7] : memref<256x128xbf16, #tpu.memory_space<vmem>>, vector<256x128xbf16>
    %cst = arith.constant dense<0.000000e+00> : vector<128x128xf32>
    %9 = tpu.matmul %7, %8, %cst {dimension_numbers = #tpu.dot_dimension_numbers<[1], [0], [0], [1], [0, 0, 1, 1], [], []>} : vector<128x256xbf16>, vector<256x128xbf16>, vector<128x128xf32> -> vector<128x128xf32>
    %10 = arith.addf %5, %9 : vector<128x128xf32>
    %c0_8 = arith.constant 0 : index
    %c0_9 = arith.constant 0 : index
    %11 = vector.load %arg7[%c0_8, %c0_9] : memref<128x128xf32, #tpu.memory_space<vmem>>, vector<128x128xf32>
    tpu.vector_store %arg7[%c0_8, %c0_9], %10 {strides = array<i32>} : memref<128x128xf32, #tpu.memory_space<vmem>>, vector<128x128xf32>,
    %c2_i32 = arith.constant 2 : i32
    %12 = arith.cmpi eq, %arg1, %c2_i32 : i32
    %c0_i32_10 = arith.constant 0 : i32
    %13 = arith.cmpi eq, %arg2, %c0_i32_10 : i32
    %14 = arith.andi %12, %13 : i1
    %15 = arith.extui %14 : i1 to i32
    %c0_i32_11 = arith.constant 0 : i32
    %16 = arith.cmpi ne, %15, %c0_i32_11 : i32
    scf.if %16 {
      %c0_12 = arith.constant 0 : index
      %c0_13 = arith.constant 0 : index
      %17 = vector.load %arg7[%c0_12, %c0_13] : memref<128x128xf32, #tpu.memory_space<vmem>>, vector<128x128xf32>
      %cst_14 = arith.constant 0.333333343 : f32
      %18 = vector.broadcast %cst_14 : f32 to vector<128x128xf32>
      %19 = arith.mulf %17, %18 : vector<128x128xf32>
      %c0_15 = arith.constant 0 : index
      %c0_16 = arith.constant 0 : index
      %20 = vector.load %arg5[%c0_15, %c0_16] : memref<1x128xf32, #tpu.memory_space<vmem>>, vector<1x128xf32>
      %21 = vector.broadcast %20 : vector<1x128xf32> to vector<128x128xf32>
      %22 = arith.addf %19, %21 : vector<128x128xf32>
      %cst_17 = arith.constant 0.000000e+00 : f32
      %23 = vector.broadcast %cst_17 : f32 to vector<128x128xf32>
      %24 = arith.maximumf %22, %23 : vector<128x128xf32>
      %25 = arith.truncf %24 : vector<128x128xf32> to vector<128x128xbf16>
      %c0_18 = arith.constant 0 : index
      %c0_19 = arith.constant 0 : index
      %26 = vector.load %arg6[%c0_18, %c0_19] : memref<128x128xbf16, #tpu.memory_space<vmem>>, vector<128x128xbf16>
      tpu.vector_store %arg6[%c0_18, %c0_19], %25 {strides = array<i32>} : memref<128x128xbf16, #tpu.memory_space<vmem>>, vector<128x128xbf16>,
    } else {
    }
    return
  }
  func.func @transform_0(%arg0: i32, %arg1: i32, %arg2: i32) -> (i32, i32, i32) {
    %c0_i32 = arith.constant 0 : i32
    return %arg1, %arg0, %arg2 : i32, i32, i32
  }
  func.func @transform_1(%arg0: i32, %arg1: i32, %arg2: i32) -> (i32, i32) {
    %c0_i32 = arith.constant 0 : i32
    return %arg2, %arg1 : i32, i32
  }
  func.func @transform_2(%arg0: i32, %arg1: i32, %arg2: i32) -> (i32, i32) {
    %c0_i32 = arith.constant 0 : i32
    %c0_i32_0 = arith.constant 0 : i32
    %c0_i32_1 = arith.constant 0 : i32
    return %c0_i32, %c0_i32_0 : i32, i32
  }
  func.func @transform_3(%arg0: i32, %arg1: i32, %arg2: i32) -> (i32, i32) {
    %c0_i32 = arith.constant 0 : i32
    %c0_i32_0 = arith.constant 0 : i32
    return %arg0, %c0_i32 : i32, i32
  }
}

module attributes {stable_mosaic.version = 11 : i64} {
  func.func @_han_project_kernel(%arg0: i32, %arg1: memref<128x128xbf16, #tpu.memory_space<vmem>>, %arg2: memref<128x384xbf16, #tpu.memory_space<vmem>>, %arg3: memref<128x384xbf16, #tpu.memory_space<vmem>>) attributes {dimension_semantics = [#tpu.dimension_semantics<parallel>], iteration_bounds = array<i64: 2>, scalar_prefetch = 0 : i64, scratch_operands = 0 : i64, tpu.core_type = #tpu.core_type<tc>, window_params = [{transform_indices = @transform_0, window_bounds = array<i64: 128, 128>}, {pipeline_mode = #tpu.pipeline_mode<synchronous>, transform_indices = @transform_1, window_bounds = array<i64: 128, 384>}, {transform_indices = @transform_2, window_bounds = array<i64: 128, 384>}]} {
    %c0 = arith.constant 0 : index
    %c0_0 = arith.constant 0 : index
    %0 = vector.load %arg1[%c0, %c0_0] : memref<128x128xbf16, #tpu.memory_space<vmem>>, vector<128x128xbf16>
    %c0_1 = arith.constant 0 : index
    %c0_2 = arith.constant 0 : index
    %1 = vector.load %arg2[%c0_1, %c0_2] : memref<128x384xbf16, #tpu.memory_space<vmem>>, vector<128x384xbf16>
    %cst = arith.constant dense<0.000000e+00> : vector<128x384xf32>
    %2 = tpu.matmul %0, %1, %cst {dimension_numbers = #tpu.dot_dimension_numbers<[1], [0], [0], [1], [0, 0, 1, 1], [], []>} : vector<128x128xbf16>, vector<128x384xbf16>, vector<128x384xf32> -> vector<128x384xf32>
    %3 = arith.truncf %2 : vector<128x384xf32> to vector<128x384xbf16>
    %c0_3 = arith.constant 0 : index
    %c0_4 = arith.constant 0 : index
    %4 = vector.load %arg3[%c0_3, %c0_4] : memref<128x384xbf16, #tpu.memory_space<vmem>>, vector<128x384xbf16>
    tpu.vector_store %arg3[%c0_3, %c0_4], %3 {strides = array<i32>} : memref<128x384xbf16, #tpu.memory_space<vmem>>, vector<128x384xbf16>,
    return
  }
  func.func @transform_0(%arg0: i32) -> (i32, i32) {
    %c0_i32 = arith.constant 0 : i32
    %c0_i32_0 = arith.constant 0 : i32
    return %arg0, %c0_i32 : i32, i32
  }
  func.func @transform_1(%arg0: i32) -> (i32, i32) {
    %c0_i32 = arith.constant 0 : i32
    %c0_i32_0 = arith.constant 0 : i32
    %c0_i32_1 = arith.constant 0 : i32
    return %c0_i32, %c0_i32_0 : i32, i32
  }
  func.func @transform_2(%arg0: i32) -> (i32, i32) {
    %c0_i32 = arith.constant 0 : i32
    %c0_i32_0 = arith.constant 0 : i32
    return %arg0, %c0_i32 : i32, i32
  }
}

module attributes {stable_mosaic.version = 11 : i64} {
  func.func @_han_agg_kernel(%arg0: i32, %arg1: i32, %arg2: i32, %arg3: memref<1x128x256xbf16, #tpu.memory_space<vmem>>, %arg4: memref<256x128xbf16, #tpu.memory_space<vmem>>, %arg5: memref<1x128xf32, #tpu.memory_space<vmem>>, %arg6: memref<128x128xf32, #tpu.memory_space<vmem>>, %arg7: memref<128x128xf32, #tpu.memory_space<vmem>>) attributes {dimension_semantics = [#tpu.dimension_semantics<parallel>, #tpu.dimension_semantics<arbitrary>, #tpu.dimension_semantics<arbitrary>], iteration_bounds = array<i64: 2, 3, 1>, scalar_prefetch = 0 : i64, scratch_operands = 1 : i64, tpu.core_type = #tpu.core_type<tc>, window_params = [{transform_indices = @transform_0, window_bounds = array<i64: 1, 128, 256>}, {transform_indices = @transform_1, window_bounds = array<i64: 256, 128>}, {pipeline_mode = #tpu.pipeline_mode<synchronous>, transform_indices = @transform_2, window_bounds = array<i64: 1, 128>}, {transform_indices = @transform_3, window_bounds = array<i64: 128, 128>}]} {
    %c0_i32 = arith.constant 0 : i32
    %0 = arith.cmpi eq, %arg1, %c0_i32 : i32
    %c0_i32_0 = arith.constant 0 : i32
    %1 = arith.cmpi eq, %arg2, %c0_i32_0 : i32
    %2 = arith.andi %0, %1 : i1
    %3 = arith.extui %2 : i1 to i32
    %c0_i32_1 = arith.constant 0 : i32
    %4 = arith.cmpi ne, %3, %c0_i32_1 : i32
    scf.if %4 {
      %cst_12 = arith.constant 0.000000e+00 : f32
      %17 = vector.broadcast %cst_12 : f32 to vector<128x128xf32>
      %c0_13 = arith.constant 0 : index
      %c0_14 = arith.constant 0 : index
      %18 = vector.load %arg7[%c0_13, %c0_14] : memref<128x128xf32, #tpu.memory_space<vmem>>, vector<128x128xf32>
      tpu.vector_store %arg7[%c0_13, %c0_14], %17 {strides = array<i32>} : memref<128x128xf32, #tpu.memory_space<vmem>>, vector<128x128xf32>,
    } else {
    }
    %c0 = arith.constant 0 : index
    %c0_2 = arith.constant 0 : index
    %5 = vector.load %arg7[%c0, %c0_2] : memref<128x128xf32, #tpu.memory_space<vmem>>, vector<128x128xf32>
    %c0_3 = arith.constant 0 : index
    %c0_4 = arith.constant 0 : index
    %c0_5 = arith.constant 0 : index
    %6 = vector.load %arg3[%c0_3, %c0_4, %c0_5] : memref<1x128x256xbf16, #tpu.memory_space<vmem>>, vector<1x128x256xbf16>
    %7 = vector.shape_cast %6 : vector<1x128x256xbf16> to vector<128x256xbf16>
    %c0_6 = arith.constant 0 : index
    %c0_7 = arith.constant 0 : index
    %8 = vector.load %arg4[%c0_6, %c0_7] : memref<256x128xbf16, #tpu.memory_space<vmem>>, vector<256x128xbf16>
    %cst = arith.constant dense<0.000000e+00> : vector<128x128xf32>
    %9 = tpu.matmul %7, %8, %cst {dimension_numbers = #tpu.dot_dimension_numbers<[1], [0], [0], [1], [0, 0, 1, 1], [], []>} : vector<128x256xbf16>, vector<256x128xbf16>, vector<128x128xf32> -> vector<128x128xf32>
    %10 = arith.addf %5, %9 : vector<128x128xf32>
    %c0_8 = arith.constant 0 : index
    %c0_9 = arith.constant 0 : index
    %11 = vector.load %arg7[%c0_8, %c0_9] : memref<128x128xf32, #tpu.memory_space<vmem>>, vector<128x128xf32>
    tpu.vector_store %arg7[%c0_8, %c0_9], %10 {strides = array<i32>} : memref<128x128xf32, #tpu.memory_space<vmem>>, vector<128x128xf32>,
    %c2_i32 = arith.constant 2 : i32
    %12 = arith.cmpi eq, %arg1, %c2_i32 : i32
    %c0_i32_10 = arith.constant 0 : i32
    %13 = arith.cmpi eq, %arg2, %c0_i32_10 : i32
    %14 = arith.andi %12, %13 : i1
    %15 = arith.extui %14 : i1 to i32
    %c0_i32_11 = arith.constant 0 : i32
    %16 = arith.cmpi ne, %15, %c0_i32_11 : i32
    scf.if %16 {
      %c0_12 = arith.constant 0 : index
      %c0_13 = arith.constant 0 : index
      %17 = vector.load %arg7[%c0_12, %c0_13] : memref<128x128xf32, #tpu.memory_space<vmem>>, vector<128x128xf32>
      %cst_14 = arith.constant 0.333333343 : f32
      %18 = vector.broadcast %cst_14 : f32 to vector<128x128xf32>
      %19 = arith.mulf %17, %18 : vector<128x128xf32>
      %c0_15 = arith.constant 0 : index
      %c0_16 = arith.constant 0 : index
      %20 = vector.load %arg5[%c0_15, %c0_16] : memref<1x128xf32, #tpu.memory_space<vmem>>, vector<1x128xf32>
      %21 = vector.broadcast %20 : vector<1x128xf32> to vector<128x128xf32>
      %22 = arith.addf %19, %21 : vector<128x128xf32>
      %c0_17 = arith.constant 0 : index
      %c0_18 = arith.constant 0 : index
      %23 = vector.load %arg6[%c0_17, %c0_18] : memref<128x128xf32, #tpu.memory_space<vmem>>, vector<128x128xf32>
      tpu.vector_store %arg6[%c0_17, %c0_18], %22 {strides = array<i32>} : memref<128x128xf32, #tpu.memory_space<vmem>>, vector<128x128xf32>,
    } else {
    }
    return
  }
  func.func @transform_0(%arg0: i32, %arg1: i32, %arg2: i32) -> (i32, i32, i32) {
    %c0_i32 = arith.constant 0 : i32
    return %arg1, %arg0, %arg2 : i32, i32, i32
  }
  func.func @transform_1(%arg0: i32, %arg1: i32, %arg2: i32) -> (i32, i32) {
    %c0_i32 = arith.constant 0 : i32
    return %arg2, %arg1 : i32, i32
  }
  func.func @transform_2(%arg0: i32, %arg1: i32, %arg2: i32) -> (i32, i32) {
    %c0_i32 = arith.constant 0 : i32
    %c0_i32_0 = arith.constant 0 : i32
    %c0_i32_1 = arith.constant 0 : i32
    return %c0_i32, %c0_i32_0 : i32, i32
  }
  func.func @transform_3(%arg0: i32, %arg1: i32, %arg2: i32) -> (i32, i32) {
    %c0_i32 = arith.constant 0 : i32
    %c0_i32_0 = arith.constant 0 : i32
    return %arg0, %c0_i32 : i32, i32
  }
}

</mosaic_0001>

<llo_original>
// kernel: han_forward.6
$region0: #{han_forward.6}
  #allocation0 [shape = 'u32[]', space=smem, size = 0x4, offset = 0x4, fixed_abs, tag = 'smem constant byte address 0x4 - core index']
  #allocation1 [shape = 'u32[144,128]{1,0:T(1,128)}', space=vmem, size = 0x12000, scoped, tag = 'internal scratch']
  %s0 = inlined_call_operand.vmem [shape: bf16[256,64], index: 0, kind: input, shape index: {}]
  %s1 = inlined_call_operand.vmem [shape: bf16[64,384], index: 1, kind: input, shape index: {}]
  %s2 = inlined_call_operand.vmem [shape: bf16[256,384], index: 2, kind: output, shape index: {}]
  %s3 = sld [smem:[#allocation0]]
  $region41: #{han_forward.6} parent=0
    _
  %s5 = ssub.s32 1, %s3
  %s6 = scalar_select 0, %s5, %s3
  loop: start=0, step=1, limit=4
  $region2: #{han_forward.6} parent=0 // loop_pre_header
    _
  $region3: #{han_forward.6} parent=0 // loop_header
    %s8 = sphi 0, %s12
    %p9 = scmp.ge.s32.totalorder %s8, 4
    %s18 = sphi 0, %s20
    %s21 = sphi 0, %s18
    %s22 = sphi 0, %s21
    %s38 = sphi 0, %s22
    %s42 = sphi 0, %s42
    %s44 = sphi 0, %s42
    %s45 = sphi 0, %s44
    %s59 = sphi 0, %s45
    %s65 = sphi 0, %s67
    %s68 = sphi 0, %s65
    %s69 = sphi 0, %s68
    %s85 = sphi 0, %s69
  $region4: #{han_forward.6} parent=0 // loop_header_branch
    %11 = sbr.rel (%p9) target = $region8
  $region5: #{han_forward.6} parent=0 // loop_body
    %s13 = ssub.s32 %s8, 1
    %s14 = ssub.s32 %s8, 2
    %s15 = sadd.s32 %s8, 1
    %s16 = ssub.s32 %s8, %s15
    %p17 = scmp.eq.s32.totalorder %s16, 0
    %s19 = sadd.s32 %s18, 1
    %s20 = scalar_select %p17, %s18, %s19
    %p23 = pneg %p17
    %p24 = scmp.eq.s32.totalorder %s8, 1
    %p25 = por %p23, %p24
    %p26 = scmp.ne.s32.totalorder %s18, %s21
    %p27 = scmp.eq.s32.totalorder %s8, 0
    %p28 = por %p26, %p27
    %p29 = scmp.ne.s32.totalorder %s18, %s21
    %p30 = scmp.eq.s32.totalorder %s13, 1
    %p31 = por %p29, %p30
    %p32 = scmp.ne.s32.totalorder %s21, %s22
    %p33 = scmp.eq.s32.totalorder %s13, 0
    %p34 = por %p32, %p33
    %p35 = scmp.ne.s32.totalorder %s21, %s22
    %p36 = scmp.eq.s32.totalorder %s14, 1
    %p37 = por %p35, %p36
    %p39 = scmp.ne.s32.totalorder %s22, %s38
    %p40 = scmp.eq.s32.totalorder %s14, 0
    %p41 = por %p39, %p40
    %s43 = sadd.s32 %s42, 1
    %p46 = scmp.eq.s32.totalorder %s8, 1
    %p47 = scmp.ne.s32.totalorder %s42, %s44
    %p48 = scmp.eq.s32.totalorder %s8, 0
    %p49 = por %p47, %p48
    %p50 = scmp.ne.s32.totalorder %s42, %s44
    %p51 = scmp.eq.s32.totalorder %s13, 1
    %p52 = por %p50, %p51
    %p53 = scmp.ne.s32.totalorder %s44, %s45
    %p54 = scmp.eq.s32.totalorder %s13, 0
    %p55 = por %p53, %p54
    %p56 = scmp.ne.s32.totalorder %s44, %s45
    %p57 = scmp.eq.s32.totalorder %s14, 1
    %p58 = por %p56, %p57
    %p60 = scmp.ne.s32.totalorder %s45, %s59
    %p61 = scmp.eq.s32.totalorder %s14, 0
    %p62 = por %p60, %p61
    %s63 = ssub.s32 %s8, %s15
    %p64 = scmp.eq.s32.totalorder %s63, 0
    %s66 = sadd.s32 %s65, 1
    %s67 = scalar_select %p64, %s65, %s66
    %p70 = pneg %p64
    %p71 = scmp.eq.s32.totalorder %s8, 1
    %p72 = por %p70, %p71
    %p73 = scmp.ne.s32.totalorder %s65, %s68
    %p74 = scmp.eq.s32.totalorder %s8, 0
    %p75 = por %p73, %p74
    %p76 = scmp.ne.s32.totalorder %s65, %s68
    %p77 = scmp.eq.s32.totalorder %s13, 1
    %p78 = por %p76, %p77
    %p79 = scmp.ne.s32.totalorder %s68, %s69
    %p80 = scmp.eq.s32.totalorder %s13, 0
    %p81 = por %p79, %p80
    %p82 = scmp.ne.s32.totalorder %s68, %s69
    %p83 = scmp.eq.s32.totalorder %s14, 1
    %p84 = por %p82, %p83
    %p86 = scmp.ne.s32.totalorder %s69, %s85
    %p87 = scmp.eq.s32.totalorder %s14, 0
    %p88 = por %p86, %p87
    %p89 = scmp.le.s32.totalorder 1, %s8
    %p90 = scmp.lt.s32.totalorder %s8, 3
    %p91 = pnand %p89, %p90
    %p92 = pneg %p91
    // Predicated region
    $region9: #{han_forward.6} parent=5 // pred_check
      _
    $region10: #{han_forward.6} parent=5 // pred_check_branch
      %94 = sbr.rel (%p91) target = $region12
    $region11: #{han_forward.6} parent=5 // pred_region
      %s95 = ssub.s32 %s8, 1
      // Predicated region
      $region13: #{han_forward.6} parent=11 // pred_check
        %p96 = pneg %p55
      $region14: #{han_forward.6} parent=11 // pred_check_branch
        %98 = sbr.rel (%p96) target = $region16
      $region15: #{han_forward.6} parent=11 // pred_region
        _
      $region16: #{han_forward.6} parent=11 // pred_fallthru
        _
    $region12: #{han_forward.6} parent=5 // pred_fallthru
      _
    %p99 = scmp.lt.s32.totalorder %s8, 2
    // Predicated region
    $region17: #{han_forward.6} parent=5 // pred_check
      %p100 = pneg %p99
    $region18: #{han_forward.6} parent=5 // pred_check_branch
      %102 = sbr.rel (%p100) target = $region20
    $region19: #{han_forward.6} parent=5 // pred_region
      // Predicated region
      $region21: #{han_forward.6} parent=19 // pred_check
        %p103 = pneg %p28
      $region22: #{han_forward.6} parent=19 // pred_check_branch
        %105 = sbr.rel (%p103) target = $region24
      $region23: #{han_forward.6} parent=19 // pred_region
        %s106 = smul.u32 16, %s8
        %p107 = scmp.lt.s32.totalorder %s106, 31
        %s108 = scalar_select %p107, %s106, 31
        %s109 = smul.addr %s108, 4
        %s110 = scalar_lea.vmem %s0, %s109
        %s111 = smul.u32 16, %s8
      $region24: #{han_forward.6} parent=19 // pred_fallthru
        _
    $region20: #{han_forward.6} parent=5 // pred_fallthru
      _
    %p112 = scmp.le.s32.totalorder 1, %s8
    %p113 = scmp.lt.s32.totalorder %s8, 3
    %p114 = pnand %p112, %p113
    %p115 = pneg %p114
    // Predicated region
    $region25: #{han_forward.6} parent=5 // pred_check
      _
    $region26: #{han_forward.6} parent=5 // pred_check_branch
      %117 = sbr.rel (%p114) target = $region28
    $region27: #{han_forward.6} parent=5 // pred_region
      %s118 = ssub.s32 %s8, 1
      %s119 = smul.u32 16, %s13
      %p120 = scmp.lt.s32.totalorder %s119, 31
      %s121 = scalar_select %p120, %s119, 31
      %s122 = smul.addr %s121, 4
      %s123 = scalar_lea.vmem %s0, %s122
      %p124 = pneg %p34
      %p125 = pneg %p31
      %p126 = pneg %p55
      %p127 = pneg %p52
      %p128 = pneg %p81
      %p129 = pneg %p78
      %s130 = smul.u32 16, %s13
      %p131 = scmp.lt.s32.totalorder %s130, 31
      %s132 = scalar_select %p131, %s130, 31
      %s133 = smul.addr %s132, 3
      %s134 = smul.addr %s133, 4
      %s135 = scalar_lea.vmem %s2, %s134
      %s136 = smul.u32 16, %s13
      %p137 = scmp.lt.s32.totalorder %s136, 31
      %s138 = scalar_select %p137, %s136, 31
      %s139 = smul.addr %s138, 4
      %s140 = scalar_lea.vmem %s0, %s139
      %s141 = smul.u32 16, %s13
      %s142 = smul.u32 16, %s13
      %p143 = scmp.lt.s32.totalorder %s142, 31
      %s144 = scalar_select %p143, %s142, 31
      %s145 = smul.addr %s144, 3
      %s146 = smul.addr %s145, 4
      %s147 = scalar_lea.vmem %s2, %s146
      %s148 = smul.u32 16, %s13
      %v150 = vld [vmem:[%s140] sm:$0xf]
      %v151 = vld [vmem:[%s140 + $0x4] sm:$0xf]
      %v152 = vld [vmem:[%s140 + $0x8] sm:$0xf]
      %v153 = vld [vmem:[%s140 + $0xc] sm:$0xf]
      %v154 = vld [vmem:[%s140 + $0x10] sm:$0xf]
      %v155 = vld [vmem:[%s140 + $0x14] sm:$0xf]
      %v156 = vld [vmem:[%s140 + $0x18] sm:$0xf]
      %v157 = vld [vmem:[%s140 + $0x1c] sm:$0xf]
      %v158 = vld [vmem:[%s140 + $0x20] sm:$0xf]
      %v159 = vld [vmem:[%s140 + $0x24] sm:$0xf]
      %v160 = vld [vmem:[%s140 + $0x28] sm:$0xf]
      %v161 = vld [vmem:[%s140 + $0x2c] sm:$0xf]
      %v162 = vld [vmem:[%s140 + $0x30] sm:$0xf]
      %v163 = vld [vmem:[%s140 + $0x34] sm:$0xf]
      %v164 = vld [vmem:[%s140 + $0x38] sm:$0xf]
      %v165 = vld [vmem:[%s140 + $0x3c] sm:$0xf]
      %v166 = vld [vmem:[%s1] sm:$0xff]
      %v167 = vld [vmem:[%s1 + $0x8] sm:$0xf]
      %v168 = vld [vmem:[%s1 + $0xc] sm:$0xff]
      %v169 = vld [vmem:[%s1 + $0x14] sm:$0xf]
      %v170 = vld [vmem:[%s1 + $0x18] sm:$0xff]
      %v171 = vld [vmem:[%s1 + $0x20] sm:$0xf]
      %v172 = vld [vmem:[%s1 + $0x24] sm:$0xff]
      %v173 = vld [vmem:[%s1 + $0x2c] sm:$0xf]
      %v174 = vld [vmem:[%s1 + $0x30] sm:$0xff]
      %v175 = vld [vmem:[%s1 + $0x38] sm:$0xf]
      %v176 = vld [vmem:[%s1 + $0x3c] sm:$0xff]
      %v177 = vld [vmem:[%s1 + $0x44] sm:$0xf]
      %v178 = vld [vmem:[%s1 + $0x48] sm:$0xff]
      %v179 = vld [vmem:[%s1 + $0x50] sm:$0xf]
      %v180 = vld [vmem:[%s1 + $0x54] sm:$0xff]
      %v181 = vld [vmem:[%s1 + $0x5c] sm:$0xf]
      %v198 = vunpack.c.l.b16 %v150
      %v199 = vunpack.c.l.b16 %v151
      %v200 = vunpack.c.l.b16 %v152
      %v201 = vunpack.c.l.b16 %v153
      %v202 = vunpack.c.l.b16 %v154
      %v203 = vunpack.c.l.b16 %v155
      %v204 = vunpack.c.l.b16 %v156
      %v205 = vunpack.c.l.b16 %v157
      %v206 = vunpack.c.l.b16 %v158
      %v207 = vunpack.c.l.b16 %v159
      %v208 = vunpack.c.l.b16 %v160
      %v209 = vunpack.c.l.b16 %v161
      %v210 = vunpack.c.l.b16 %v162
      %v211 = vunpack.c.l.b16 %v163
      %v212 = vunpack.c.l.b16 %v164
      %v213 = vunpack.c.l.b16 %v165
      %v214 = vpack.c.b16 %v199, %v198
      %v215 = vpack.c.b16 %v201, %v200
      %v216 = vpack.c.b16 %v203, %v202
      %v217 = vpack.c.b16 %v205, %v204
      %v218 = vpack.c.b16 %v207, %v206
      %v219 = vpack.c.b16 %v209, %v208
      %v220 = vpack.c.b16 %v211, %v210
      %v221 = vpack.c.b16 %v213, %v212
      %v238 = vunpack.c.l.b16 %v166
      %v239 = vunpack.c.h.b16 %v166
      %v240 = vunpack.c.l.b16 %v167
      %v241 = vunpack.c.l.b16 %v168
      %v242 = vunpack.c.h.b16 %v168
      %v243 = vunpack.c.l.b16 %v169
      %v244 = vunpack.c.l.b16 %v170
      %v245 = vunpack.c.h.b16 %v170
      %v246 = vunpack.c.l.b16 %v171
      %v247 = vunpack.c.l.b16 %v172
      %v248 = vunpack.c.h.b16 %v172
      %v249 = vunpack.c.l.b16 %v173
      %v250 = vunpack.c.l.b16 %v174
      %v251 = vunpack.c.h.b16 %v174
      %v252 = vunpack.c.l.b16 %v175
      %v253 = vunpack.c.l.b16 %v176
      %v254 = vunpack.c.h.b16 %v176
      %v255 = vunpack.c.l.b16 %v177
      %v256 = vunpack.c.l.b16 %v178
      %v257 = vunpack.c.h.b16 %v178
      %v258 = vunpack.c.l.b16 %v179
      %v259 = vunpack.c.l.b16 %v180
      %v260 = vunpack.c.h.b16 %v180
      %v261 = vunpack.c.l.b16 %v181
      %v262 = vpack.c.b16 %v241, %v238
      %v263 = vpack.c.b16 %v242, %v239
      %v264 = vpack.c.b16 %v243, %v240
      %v265 = vpack.c.b16 %v247, %v244
      %v266 = vpack.c.b16 %v248, %v245
      %v267 = vpack.c.b16 %v249, %v246
      %v268 = vpack.c.b16 %v253, %v250
      %v269 = vpack.c.b16 %v254, %v251
      %v270 = vpack.c.b16 %v255, %v252
      %v271 = vpack.c.b16 %v259, %v256
      %v272 = vpack.c.b16 %v260, %v257
      %v273 = vpack.c.b16 %v261, %v258
      %vm286 = vcmask 523264
      %v288 = vsel %vm286, %v214, 0
      %v291 = vsel %vm286, %v215, 0
      %v294 = vsel %vm286, %v216, 0
      %v297 = vsel %vm286, %v217, 0
      %v300 = vsel %vm286, %v218, 0
      %v303 = vsel %vm286, %v219, 0
      %v306 = vsel %vm286, %v220, 0
      %v309 = vsel %vm286, %v221, 0
      %311 = vmatprep.subr.bf16.mxu0 %v263
      %312 = vmatpush1.bf16.msra.mxu0 %v262
      %313 = vmatprep.subr.bf16.mxu0 %v266
      %314 = vmatpush1.bf16.msra.mxu0 %v265
      %315 = vmatprep.subr.bf16.mxu0 %v269
      %316 = vmatpush1.bf16.msra.mxu0 %v268
      %317 = vmatprep.subr.bf16.mxu0 %v272
      %318 = vmatpush1.bf16.msra.mxu0 %v271
      %319 = vmatprep.subr.bf16.mxu0 0
      %320 = vmatpush1.bf16.msra.mxu0 0
      %321 = vmatprep.subr.bf16.mxu0 0
      %322 = vmatpush1.bf16.msra.mxu0 0
      %323 = vmatprep.subr.bf16.mxu0 0
      %324 = vmatpush1.bf16.msra.mxu0 0
      %325 = vmatprep.subr.bf16.mxu0 0
      %326 = vmatpush1.bf16.msra.mxu0 0
      %327 = vmatprep.subr.bf16.mxu0 0
      %328 = vmatpush1.bf16.msra.mxu0 0
      %329 = vmatprep.subr.bf16.mxu0 0
      %330 = vmatpush1.bf16.msra.mxu0 0
      %331 = vmatprep.subr.bf16.mxu0 0
      %332 = vmatpush1.bf16.msra.mxu0 0
      %333 = vmatprep.subr.bf16.mxu0 0
      %334 = vmatpush1.bf16.msra.mxu0 0
      %335 = vmatprep.subr.bf16.mxu0 0
      %336 = vmatpush1.bf16.msra.mxu0 0
      %337 = vmatprep.subr.bf16.mxu0 0
      %338 = vmatpush1.bf16.msra.mxu0 0
      %339 = vmatprep.subr.bf16.mxu0 0
      %340 = vmatpush1.bf16.msra.mxu0 0
      %341 = vmatprep.subr.bf16.mxu0 0
      %342 = vmatpush1.bf16.msra.mxu0 0
      %343 = vmatprep.mubr.bf16.mxu0 0
      %344 = vmatmul.mubr.bf16.gmra.mrb[0].mxu0 %v288
      %v345 = vpop.f32.mrb[0].mxu0
      %v346 = vadd.f32 0.0, %v345
      %v347 = vpop.f32.mrb[0].mxu0
      %v348 = vadd.f32 0.0, %v347
      %v349 = vpop.f32.mrb[0].mxu0
      %v350 = vadd.f32 0.0, %v349
      %v351 = vpop.f32.mrb[0].mxu0
      %v352 = vadd.f32 0.0, %v351
      %353 = vmatprep.mubr.bf16.mxu0 0
      %354 = vmatmul.mubr.bf16.gmra.mrb[0].mxu0 %v291
      %v355 = vpop.f32.mrb[0].mxu0
      %v356 = vadd.f32 0.0, %v355
      %v357 = vpop.f32.mrb[0].mxu0
      %v358 = vadd.f32 0.0, %v357
      %v359 = vpop.f32.mrb[0].mxu0
      %v360 = vadd.f32 0.0, %v359
      %v361 = vpop.f32.mrb[0].mxu0
      %v362 = vadd.f32 0.0, %v361
      %363 = vmatprep.mubr.bf16.mxu0 0
      %364 = vmatmul.mubr.bf16.gmra.mrb[0].mxu0 %v294
      %v365 = vpop.f32.mrb[0].mxu0
      %v366 = vadd.f32 0.0, %v365
      %v367 = vpop.f32.mrb[0].mxu0
      %v368 = vadd.f32 0.0, %v367
      %v369 = vpop.f32.mrb[0].mxu0
      %v370 = vadd.f32 0.0, %v369
      %v371 = vpop.f32.mrb[0].mxu0
      %v372 = vadd.f32 0.0, %v371
      %373 = vmatprep.mubr.bf16.mxu0 0
      %374 = vmatmul.mubr.bf16.gmra.mrb[0].mxu0 %v297
      %v375 = vpop.f32.mrb[0].mxu0
      %v376 = vadd.f32 0.0, %v375
      %v377 = vpop.f32.mrb[0].mxu0
      %v378 = vadd.f32 0.0, %v377
      %v379 = vpop.f32.mrb[0].mxu0
      %v380 = vadd.f32 0.0, %v379
      %v381 = vpop.f32.mrb[0].mxu0
      %v382 = vadd.f32 0.0, %v381
      %383 = vmatprep.mubr.bf16.mxu0 0
      %384 = vmatmul.mubr.bf16.gmra.mrb[0].mxu0 %v300
      %v385 = vpop.f32.mrb[0].mxu0
      %v386 = vadd.f32 0.0, %v385
      %v387 = vpop.f32.mrb[0].mxu0
      %v388 = vadd.f32 0.0, %v387
      %v389 = vpop.f32.mrb[0].mxu0
      %v390 = vadd.f32 0.0, %v389
      %v391 = vpop.f32.mrb[0].mxu0
      %v392 = vadd.f32 0.0, %v391
      %393 = vmatprep.mubr.bf16.mxu0 0
      %394 = vmatmul.mubr.bf16.gmra.mrb[0].mxu0 %v303
      %v395 = vpop.f32.mrb[0].mxu0
      %v396 = vadd.f32 0.0, %v395
      %v397 = vpop.f32.mrb[0].mxu0
      %v398 = vadd.f32 0.0, %v397
      %v399 = vpop.f32.mrb[0].mxu0
      %v400 = vadd.f32 0.0, %v399
      %v401 = vpop.f32.mrb[0].mxu0
      %v402 = vadd.f32 0.0, %v401
      %403 = vmatprep.mubr.bf16.mxu0 0
      %404 = vmatmul.mubr.bf16.gmra.mrb[0].mxu0 %v306
      %v405 = vpop.f32.mrb[0].mxu0
      %v406 = vadd.f32 0.0, %v405
      %v407 = vpop.f32.mrb[0].mxu0
      %v408 = vadd.f32 0.0, %v407
      %v409 = vpop.f32.mrb[0].mxu0
      %v410 = vadd.f32 0.0, %v409
      %v411 = vpop.f32.mrb[0].mxu0
      %v412 = vadd.f32 0.0, %v411
      %413 = vmatprep.mubr.bf16.mxu0 0
      %414 = vmatmul.mubr.bf16.gmra.mrb[0].mxu0 %v309
      %v415 = vpop.f32.mrb[0].mxu0
      %v416 = vadd.f32 0.0, %v415
      %v417 = vpop.f32.mrb[0].mxu0
      %v418 = vadd.f32 0.0, %v417
      %v419 = vpop.f32.mrb[0].mxu0
      %v420 = vadd.f32 0.0, %v419
      %v421 = vpop.f32.mrb[0].mxu0
      %v422 = vadd.f32 0.0, %v421
      %423 = vdwg.mxu0
      %424 = vmatprep.subr.bf16.mxu0 0
      %425 = vmatpush1.bf16.msra.mxu0 %v264
      %426 = vmatprep.subr.bf16.mxu0 0
      %427 = vmatpush1.bf16.msra.mxu0 %v267
      %428 = vmatprep.subr.bf16.mxu0 0
      %429 = vmatpush1.bf16.msra.mxu0 %v270
      %430 = vmatprep.subr.bf16.mxu0 0
      %431 = vmatpush1.bf16.msra.mxu0 %v273
      %432 = vmatprep.subr.bf16.mxu0 0
      %433 = vmatpush1.bf16.msra.mxu0 0
      %434 = vmatprep.subr.bf16.mxu0 0
      %435 = vmatpush1.bf16.msra.mxu0 0
      %436 = vmatprep.subr.bf16.mxu0 0
      %437 = vmatpush1.bf16.msra.mxu0 0
      %438 = vmatprep.subr.bf16.mxu0 0
      %439 = vmatpush1.bf16.msra.mxu0 0
      %440 = vmatprep.subr.bf16.mxu0 0
      %441 = vmatpush1.bf16.msra.mxu0 0
      %442 = vmatprep.subr.bf16.mxu0 0
      %443 = vmatpush1.bf16.msra.mxu0 0
      %444 = vmatprep.subr.bf16.mxu0 0
      %445 = vmatpush1.bf16.msra.mxu0 0
      %446 = vmatprep.subr.bf16.mxu0 0
      %447 = vmatpush1.bf16.msra.mxu0 0
      %448 = vmatprep.subr.bf16.mxu0 0
      %449 = vmatpush1.bf16.msra.mxu0 0
      %450 = vmatprep.subr.bf16.mxu0 0
      %451 = vmatpush1.bf16.msra.mxu0 0
      %452 = vmatprep.subr.bf16.mxu0 0
      %453 = vmatpush1.bf16.msra.mxu0 0
      %454 = vmatprep.subr.bf16.mxu0 0
      %455 = vmatpush1.bf16.msra.mxu0 0
      %456 = vmatprep.mubr.bf16.mxu0 0
      %457 = vmatmul.mubr.bf16.gmra.mrb[0].mxu0 %v288
      %v458 = vpop.f32.mrb[0].mxu0
      %v459 = vadd.f32 0.0, %v458
      %v460 = vpop.f32.mrb[0].mxu0
      %v461 = vpop.f32.mrb[0].mxu0
      %v462 = vadd.f32 0.0, %v461
      %v463 = vpop.f32.mrb[0].mxu0
      %464 = vmatprep.mubr.bf16.mxu0 0
      %465 = vmatmul.mubr.bf16.gmra.mrb[0].mxu0 %v291
      %v466 = vpop.f32.mrb[0].mxu0
      %v467 = vadd.f32 0.0, %v466
      %v468 = vpop.f32.mrb[0].mxu0
      %v469 = vpop.f32.mrb[0].mxu0
      %v470 = vadd.f32 0.0, %v469
      %v471 = vpop.f32.mrb[0].mxu0
      %472 = vmatprep.mubr.bf16.mxu0 0
      %473 = vmatmul.mubr.bf16.gmra.mrb[0].mxu0 %v294
      %v474 = vpop.f32.mrb[0].mxu0
      %v475 = vadd.f32 0.0, %v474
      %v476 = vpop.f32.mrb[0].mxu0
      %v477 = vpop.f32.mrb[0].mxu0
      %v478 = vadd.f32 0.0, %v477
      %v479 = vpop.f32.mrb[0].mxu0
      %480 = vmatprep.mubr.bf16.mxu0 0
      %481 = vmatmul.mubr.bf16.gmra.mrb[0].mxu0 %v297
      %v482 = vpop.f32.mrb[0].mxu0
      %v483 = vadd.f32 0.0, %v482
      %v484 = vpop.f32.mrb[0].mxu0
      %v485 = vpop.f32.mrb[0].mxu0
      %v486 = vadd.f32 0.0, %v485
      %v487 = vpop.f32.mrb[0].mxu0
      %488 = vmatprep.mubr.bf16.mxu0 0
      %489 = vmatmul.mubr.bf16.gmra.mrb[0].mxu0 %v300
      %v490 = vpop.f32.mrb[0].mxu0
      %v491 = vadd.f32 0.0, %v490
      %v492 = vpop.f32.mrb[0].mxu0
      %v493 = vpop.f32.mrb[0].mxu0
      %v494 = vadd.f32 0.0, %v493
      %v495 = vpop.f32.mrb[0].mxu0
      %496 = vmatprep.mubr.bf16.mxu0 0
      %497 = vmatmul.mubr.bf16.gmra.mrb[0].mxu0 %v303
      %v498 = vpop.f32.mrb[0].mxu0
      %v499 = vadd.f32 0.0, %v498
      %v500 = vpop.f32.mrb[0].mxu0
      %v501 = vpop.f32.mrb[0].mxu0
      %v502 = vadd.f32 0.0, %v501
      %v503 = vpop.f32.mrb[0].mxu0
      %504 = vmatprep.mubr.bf16.mxu0 0
      %505 = vmatmul.mubr.bf16.gmra.mrb[0].mxu0 %v306
      %v506 = vpop.f32.mrb[0].mxu0
      %v507 = vadd.f32 0.0, %v506
      %v508 = vpop.f32.mrb[0].mxu0
      %v509 = vpop.f32.mrb[0].mxu0
      %v510 = vadd.f32 0.0, %v509
      %v511 = vpop.f32.mrb[0].mxu0
      %512 = vmatprep.mubr.bf16.mxu0 0
      %513 = vmatmul.mubr.bf16.gmra.mrb[0].mxu0 %v309
      %v514 = vpop.f32.mrb[0].mxu0
      %v515 = vadd.f32 0.0, %v514
      %v516 = vpop.f32.mrb[0].mxu0
      %v517 = vpop.f32.mrb[0].mxu0
      %v518 = vadd.f32 0.0, %v517
      %v519 = vpop.f32.mrb[0].mxu0
      %520 = vdwg.mxu0
      %v521 = vpack.c.bf16 %v350, %v346
      %v522 = vpack.c.bf16 %v352, %v348
      %v523 = vpack.c.bf16 %v462, %v459
      %v524 = vpack.c.bf16 %v360, %v356
      %v525 = vpack.c.bf16 %v362, %v358
      %v526 = vpack.c.bf16 %v470, %v467
      %v527 = vpack.c.bf16 %v370, %v366
      %v528 = vpack.c.bf16 %v372, %v368
      %v529 = vpack.c.bf16 %v478, %v475
      %v530 = vpack.c.bf16 %v380, %v376
      %v531 = vpack.c.bf16 %v382, %v378
      %v532 = vpack.c.bf16 %v486, %v483
      %v533 = vpack.c.bf16 %v390, %v386
      %v534 = vpack.c.bf16 %v392, %v388
      %v535 = vpack.c.bf16 %v494, %v491
      %v536 = vpack.c.bf16 %v400, %v396
      %v537 = vpack.c.bf16 %v402, %v398
      %v538 = vpack.c.bf16 %v502, %v499
      %v539 = vpack.c.bf16 %v410, %v406
      %v540 = vpack.c.bf16 %v412, %v408
      %v541 = vpack.c.bf16 %v510, %v507
      %v542 = vpack.c.bf16 %v420, %v416
      %v543 = vpack.c.bf16 %v422, %v418
      %v544 = vpack.c.bf16 %v518, %v515
      %v569 = vunpack.c.l.b16 %v521
      %v570 = vunpack.c.l.b16 %v522
      %v571 = vunpack.c.l.b16 %v523
      %v572 = vunpack.c.h.b16 %v521
      %v573 = vunpack.c.h.b16 %v522
      %v574 = vunpack.c.h.b16 %v523
      %v575 = vunpack.c.l.b16 %v524
      %v576 = vunpack.c.l.b16 %v525
      %v577 = vunpack.c.l.b16 %v526
      %v578 = vunpack.c.h.b16 %v524
      %v579 = vunpack.c.h.b16 %v525
      %v580 = vunpack.c.h.b16 %v526
      %v581 = vunpack.c.l.b16 %v527
      %v582 = vunpack.c.l.b16 %v528
      %v583 = vunpack.c.l.b16 %v529
      %v584 = vunpack.c.h.b16 %v527
      %v585 = vunpack.c.h.b16 %v528
      %v586 = vunpack.c.h.b16 %v529
      %v587 = vunpack.c.l.b16 %v530
      %v588 = vunpack.c.l.b16 %v531
      %v589 = vunpack.c.l.b16 %v532
      %v590 = vunpack.c.h.b16 %v530
      %v591 = vunpack.c.h.b16 %v531
      %v592 = vunpack.c.h.b16 %v532
      %v593 = vunpack.c.l.b16 %v533
      %v594 = vunpack.c.l.b16 %v534
      %v595 = vunpack.c.l.b16 %v535
      %v596 = vunpack.c.h.b16 %v533
      %v597 = vunpack.c.h.b16 %v534
      %v598 = vunpack.c.h.b16 %v535
      %v599 = vunpack.c.l.b16 %v536
      %v600 = vunpack.c.l.b16 %v537
      %v601 = vunpack.c.l.b16 %v538
      %v602 = vunpack.c.h.b16 %v536
      %v603 = vunpack.c.h.b16 %v537
      %v604 = vunpack.c.h.b16 %v538
      %v605 = vunpack.c.l.b16 %v539
      %v606 = vunpack.c.l.b16 %v540
      %v607 = vunpack.c.l.b16 %v541
      %v608 = vunpack.c.h.b16 %v539
      %v609 = vunpack.c.h.b16 %v540
      %v610 = vunpack.c.h.b16 %v541
      %v611 = vunpack.c.l.b16 %v542
      %v612 = vunpack.c.l.b16 %v543
      %v613 = vunpack.c.l.b16 %v544
      %v614 = vunpack.c.h.b16 %v542
      %v615 = vunpack.c.h.b16 %v543
      %v616 = vunpack.c.h.b16 %v544
      %v617 = vpack.c.b16 %v570, %v569
      %v618 = vpack.c.b16 %v571, %v571
      %v619 = vpack.c.b16 %v573, %v572
      %v620 = vpack.c.b16 %v574, %v574
      %v621 = vpack.c.b16 %v576, %v575
      %v622 = vpack.c.b16 %v577, %v577
      %v623 = vpack.c.b16 %v579, %v578
      %v624 = vpack.c.b16 %v580, %v580
      %v625 = vpack.c.b16 %v582, %v581
      %v626 = vpack.c.b16 %v583, %v583
      %v627 = vpack.c.b16 %v585, %v584
      %v628 = vpack.c.b16 %v586, %v586
      %v629 = vpack.c.b16 %v588, %v587
      %v630 = vpack.c.b16 %v589, %v589
      %v631 = vpack.c.b16 %v591, %v590
      %v632 = vpack.c.b16 %v592, %v592
      %v633 = vpack.c.b16 %v594, %v593
      %v634 = vpack.c.b16 %v595, %v595
      %v635 = vpack.c.b16 %v597, %v596
      %v636 = vpack.c.b16 %v598, %v598
      %v637 = vpack.c.b16 %v600, %v599
      %v638 = vpack.c.b16 %v601, %v601
      %v639 = vpack.c.b16 %v603, %v602
      %v640 = vpack.c.b16 %v604, %v604
      %v641 = vpack.c.b16 %v606, %v605
      %v642 = vpack.c.b16 %v607, %v607
      %v643 = vpack.c.b16 %v609, %v608
      %v644 = vpack.c.b16 %v610, %v610
      %v645 = vpack.c.b16 %v612, %v611
      %v646 = vpack.c.b16 %v613, %v613
      %v647 = vpack.c.b16 %v615, %v614
      %v648 = vpack.c.b16 %v616, %v616
      %681 = vst [vmem:[%s147] sm:$0xff] %v617
      %682 = vst [vmem:[%s147 + $0x8] sm:$0xf] %v618
      %683 = vst [vmem:[%s147 + $0xc] sm:$0xff] %v619
      %684 = vst [vmem:[%s147 + $0x14] sm:$0xf] %v620
      %685 = vst [vmem:[%s147 + $0x18] sm:$0xff] %v621
      %686 = vst [vmem:[%s147 + $0x20] sm:$0xf] %v622
      %687 = vst [vmem:[%s147 + $0x24] sm:$0xff] %v623
      %688 = vst [vmem:[%s147 + $0x2c] sm:$0xf] %v624
      %689 = vst [vmem:[%s147 + $0x30] sm:$0xff] %v625
      %690 = vst [vmem:[%s147 + $0x38] sm:$0xf] %v626
      %691 = vst [vmem:[%s147 + $0x3c] sm:$0xff] %v627
      %692 = vst [vmem:[%s147 + $0x44] sm:$0xf] %v628
      %693 = vst [vmem:[%s147 + $0x48] sm:$0xff] %v629
      %694 = vst [vmem:[%s147 + $0x50] sm:$0xf] %v630
      %695 = vst [vmem:[%s147 + $0x54] sm:$0xff] %v631
      %696 = vst [vmem:[%s147 + $0x5c] sm:$0xf] %v632
      %697 = vst [vmem:[%s147 + $0x60] sm:$0xff] %v633
      %698 = vst [vmem:[%s147 + $0x68] sm:$0xf] %v634
      %699 = vst [vmem:[%s147 + $0x6c] sm:$0xff] %v635
      %700 = vst [vmem:[%s147 + $0x74] sm:$0xf] %v636
      %701 = vst [vmem:[%s147 + $0x78] sm:$0xff] %v637
      %702 = vst [vmem:[%s147 + $0x80] sm:$0xf] %v638
      %703 = vst [vmem:[%s147 + $0x84] sm:$0xff] %v639
      %704 = vst [vmem:[%s147 + $0x8c] sm:$0xf] %v640
      %705 = vst [vmem:[%s147 + $0x90] sm:$0xff] %v641
      %706 = vst [vmem:[%s147 + $0x98] sm:$0xf] %v642
      %707 = vst [vmem:[%s147 + $0x9c] sm:$0xff] %v643
      %708 = vst [vmem:[%s147 + $0xa4] sm:$0xf] %v644
      %709 = vst [vmem:[%s147 + $0xa8] sm:$0xff] %v645
      %710 = vst [vmem:[%s147 + $0xb0] sm:$0xf] %v646
      %711 = vst [vmem:[%s147 + $0xb4] sm:$0xff] %v647
      %712 = vst [vmem:[%s147 + $0xbc] sm:$0xf] %v648
      %s713 = smul.u32 16, %s13
      %p714 = scmp.lt.s32.totalorder %s713, 31
      %s715 = scalar_select %p714, %s713, 31
      %s716 = smul.addr %s715, 3
      %s717 = smul.addr %s716, 4
      %s718 = scalar_lea.vmem %s2, %s717
      // Predicated region
      $region29: #{han_forward.6} parent=27 // pred_check
        %p719 = pneg %p78
      $region30: #{han_forward.6} parent=27 // pred_check_branch
        %721 = sbr.rel (%p719) target = $region32
      $region31: #{han_forward.6} parent=27 // pred_region
        %s722 = smul.u32 16, %s13
      $region32: #{han_forward.6} parent=27 // pred_fallthru
        _
    $region28: #{han_forward.6} parent=5 // pred_fallthru
      _
    %p723 = scmp.le.s32.totalorder 2, %s8
    // Predicated region
    $region33: #{han_forward.6} parent=5 // pred_check
      %p724 = pneg %p723
    $region34: #{han_forward.6} parent=5 // pred_check_branch
      %726 = sbr.rel (%p724) target = $region36
    $region35: #{han_forward.6} parent=5 // pred_region
      %s727 = ssub.s32 %s8, 2
      // Predicated region
      $region37: #{han_forward.6} parent=35 // pred_check
        %p728 = pneg %p84
      $region38: #{han_forward.6} parent=35 // pred_check_branch
        %730 = sbr.rel (%p728) target = $region40
      $region39: #{han_forward.6} parent=35 // pred_region
        %s731 = smul.u32 16, %s14
        %p732 = scmp.lt.s32.totalorder %s731, 31
        %s733 = scalar_select %p732, %s731, 31
        %s734 = smul.addr %s733, 3
        %s735 = smul.addr %s734, 4
        %s736 = scalar_lea.vmem %s2, %s735
      $region40: #{han_forward.6} parent=35 // pred_fallthru
        _
    $region36: #{han_forward.6} parent=5 // pred_fallthru
      _
  $region6: #{han_forward.6} parent=0 // loop_footer
    %s12 = sadd.s32 1, %s8
  $region7: #{han_forward.6} parent=0 // loop_footer_branch
    %7 = sbr.rel target = $region3
  $region8: #{han_forward.6} parent=0 // loop_exit
    _

// kernel: han_forward.7
$region0: #{han_forward.7}
  #allocation0 [shape = 'u32[]', space=smem, size = 0x4, offset = 0x4, fixed_abs, tag = 'smem constant byte address 0x4 - core index']
  #allocation1 [shape = 'u32[144,128]{1,0:T(1,128)}', space=vmem, size = 0x12000, scoped, tag = 'internal scratch']
  #allocation2 [shape = 'f32[128,128]{1,0:T(8,128)}', space=vmem, size = 0x10000, scoped, tag = 'scratch operand']
  %s0 = inlined_call_operand.vmem [shape: bf16[3,256,256], index: 0, kind: input, shape index: {}]
  %s1 = inlined_call_operand.vmem [shape: bf16[256,384], index: 1, kind: input, shape index: {}]
  %s2 = inlined_call_operand.vmem [shape: f32[1,128], index: 2, kind: input, shape index: {}]
  %s3 = inlined_call_operand.vmem [shape: bf16[256,128], index: 3, kind: output, shape index: {}]
  %s4 = sld [smem:[#allocation0]]
  $region94: #{han_forward.7} parent=0
    _
  %s6 = ssub.s32 1, %s4
  %s7 = scalar_select 0, %s6, %s4
  $region1: #{han_forward.7} parent=0
    #allocation3 [shape = 'u8[131072]{0}', space=vmem, size = 0x20000, scoped, tag = 'input window, operand 1']
    loop: start=0, step=1, limit=8
    $region2: #{han_forward.7} parent=1 // loop_pre_header
      _
    $region3: #{han_forward.7} parent=1 // loop_header
      %s9 = sphi 0, %s13
      %p10 = scmp.ge.s32.totalorder %s9, 8
      %s16 = sphi 0, %s35
      %s17 = sphi 0, %s31
      %s18 = sphi 0, %s27
      %s19 = sphi 0, %s16
      %s20 = sphi 0, %s17
      %s21 = sphi 0, %s18
      %s22 = sphi 0, %s19
      %s23 = sphi 0, %s20
      %s24 = sphi 0, %s21
      %s42 = sphi 0, %s44
      %s45 = sphi 0, %s42
      %s46 = sphi 0, %s45
      %s62 = sphi 0, %s46
      %s70 = sphi 0, %s72
      %s73 = sphi 0, %s70
      %s74 = sphi 0, %s73
      %s90 = sphi 0, %s74
      %s94 = sphi 0, %s94
      %s96 = sphi 0, %s94
      %s97 = sphi 0, %s96
      %s111 = sphi 0, %s97
      %s117 = sphi 0, %s119
      %s120 = sphi 0, %s117
      %s121 = sphi 0, %s120
      %s137 = sphi 0, %s121
    $region4: #{han_forward.7} parent=1 // loop_header_branch
      %12 = sbr.rel (%p10) target = $region8
    $region5: #{han_forward.7} parent=1 // loop_body
      %s14 = ssub.s32 %s9, 1
      %s15 = ssub.s32 %s9, 2
      %s25 = sadd.s32 1, %s18
      %p26 = scmp.ge.s32.totalorder %s25, 1
      %s27 = scalar_select %p26, 0, %s25
      %s28 = sadd.s32 1, %s17
      %s29 = scalar_select %p26, %s28, %s17
      %p30 = scmp.ge.s32.totalorder %s29, 3
      %s31 = scalar_select %p30, 0, %s29
      %s32 = sadd.s32 1, %s16
      %s33 = scalar_select %p30, %s32, %s16
      %p34 = scmp.ge.s32.totalorder %s33, 2
      %s35 = scalar_select %p34, 0, %s33
      %s36 = ssub.s32 %s17, %s31
      %s37 = ssub.s32 %s16, %s35
      %s38 = sor.u32 %s36, %s37
      %s39 = ssub.s32 %s18, %s27
      %s40 = sor.u32 %s38, %s39
      %p41 = scmp.eq.s32.totalorder %s40, 0
      %s43 = sadd.s32 %s42, 1
      %s44 = scalar_select %p41, %s42, %s43
      %p47 = pneg %p41
      %p48 = scmp.eq.s32.totalorder %s9, 5
      %p49 = por %p47, %p48
      %p50 = scmp.ne.s32.totalorder %s42, %s45
      %p51 = scmp.eq.s32.totalorder %s9, 0
      %p52 = por %p50, %p51
      %p53 = scmp.ne.s32.totalorder %s42, %s45
      %p54 = scmp.eq.s32.totalorder %s14, 5
      %p55 = por %p53, %p54
      %p56 = scmp.ne.s32.totalorder %s45, %s46
      %p57 = scmp.eq.s32.totalorder %s14, 0
      %p58 = por %p56, %p57
      %p59 = scmp.ne.s32.totalorder %s45, %s46
      %p60 = scmp.eq.s32.totalorder %s15, 5
      %p61 = por %p59, %p60
      %p63 = scmp.ne.s32.totalorder %s46, %s62
      %p64 = scmp.eq.s32.totalorder %s15, 0
      %p65 = por %p63, %p64
      %s66 = ssub.s32 %s18, %s27
      %s67 = ssub.s32 %s17, %s31
      %s68 = sor.u32 %s66, %s67
      %p69 = scmp.eq.s32.totalorder %s68, 0
      %s71 = sadd.s32 %s70, 1
      %s72 = scalar_select %p69, %s70, %s71
      %p75 = pneg %p69
      %p76 = scmp.eq.s32.totalorder %s9, 5
      %p77 = por %p75, %p76
      %p78 = scmp.ne.s32.totalorder %s70, %s73
      %p79 = scmp.eq.s32.totalorder %s9, 0
      %p80 = por %p78, %p79
      %p81 = scmp.ne.s32.totalorder %s70, %s73
      %p82 = scmp.eq.s32.totalorder %s14, 5
      %p83 = por %p81, %p82
      %p84 = scmp.ne.s32.totalorder %s73, %s74
      %p85 = scmp.eq.s32.totalorder %s14, 0
      %p86 = por %p84, %p85
      %p87 = scmp.ne.s32.totalorder %s73, %s74
      %p88 = scmp.eq.s32.totalorder %s15, 5
      %p89 = por %p87, %p88
      %p91 = scmp.ne.s32.totalorder %s74, %s90
      %p92 = scmp.eq.s32.totalorder %s15, 0
      %p93 = por %p91, %p92
      %s95 = sadd.s32 %s94, 1
      %p98 = scmp.eq.s32.totalorder %s9, 5
      %p99 = scmp.ne.s32.totalorder %s94, %s96
      %p100 = scmp.eq.s32.totalorder %s9, 0
      %p101 = por %p99, %p100
      %p102 = scmp.ne.s32.totalorder %s94, %s96
      %p103 = scmp.eq.s32.totalorder %s14, 5
      %p104 = por %p102, %p103
      %p105 = scmp.ne.s32.totalorder %s96, %s97
      %p106 = scmp.eq.s32.totalorder %s14, 0
      %p107 = por %p105, %p106
      %p108 = scmp.ne.s32.totalorder %s96, %s97
      %p109 = scmp.eq.s32.totalorder %s15, 5
      %p110 = por %p108, %p109
      %p112 = scmp.ne.s32.totalorder %s97, %s111
      %p113 = scmp.eq.s32.totalorder %s15, 0
      %p114 = por %p112, %p113
      %s115 = ssub.s32 %s16, %s35
      %p116 = scmp.eq.s32.totalorder %s115, 0
      %s118 = sadd.s32 %s117, 1
      %s119 = scalar_select %p116, %s117, %s118
      %p122 = pneg %p116
      %p123 = scmp.eq.s32.totalorder %s9, 5
      %p124 = por %p122, %p123
      %p125 = scmp.ne.s32.totalorder %s117, %s120
      %p126 = scmp.eq.s32.totalorder %s9, 0
      %p127 = por %p125, %p126
      %p128 = scmp.ne.s32.totalorder %s117, %s120
      %p129 = scmp.eq.s32.totalorder %s14, 5
      %p130 = por %p128, %p129
      %p131 = scmp.ne.s32.totalorder %s120, %s121
      %p132 = scmp.eq.s32.totalorder %s14, 0
      %p133 = por %p131, %p132
      %p134 = scmp.ne.s32.totalorder %s120, %s121
      %p135 = scmp.eq.s32.totalorder %s15, 5
      %p136 = por %p134, %p135
      %p138 = scmp.ne.s32.totalorder %s121, %s137
      %p139 = scmp.eq.s32.totalorder %s15, 0
      %p140 = por %p138, %p139
      %p141 = scmp.le.s32.totalorder 1, %s9
      %p142 = scmp.lt.s32.totalorder %s9, 7
      %p143 = pnand %p141, %p142
      %p144 = pneg %p143
      // Predicated region
      $region9: #{han_forward.7} parent=5 // pred_check
        _
      $region10: #{han_forward.7} parent=5 // pred_check_branch
        %146 = sbr.rel (%p143) target = $region12
      $region11: #{han_forward.7} parent=5 // pred_region
        %s147 = ssub.s32 %s9, 1
        // Predicated region
        $region13: #{han_forward.7} parent=11 // pred_check
          %p148 = pneg %p107
        $region14: #{han_forward.7} parent=11 // pred_check_branch
          %150 = sbr.rel (%p148) target = $region16
        $region15: #{han_forward.7} parent=11 // pred_region
          _
        $region16: #{han_forward.7} parent=11 // pred_fallthru
          _
      $region12: #{han_forward.7} parent=5 // pred_fallthru
        _
      %p151 = scmp.lt.s32.totalorder %s9, 6
      // Predicated region
      $region17: #{han_forward.7} parent=5 // pred_check
        %p152 = pneg %p151
      $region18: #{han_forward.7} parent=5 // pred_check_branch
        %154 = sbr.rel (%p152) target = $region20
      $region19: #{han_forward.7} parent=5 // pred_region
        // Predicated region
        $region21: #{han_forward.7} parent=19 // pred_check
          %p155 = pneg %p52
        $region22: #{han_forward.7} parent=19 // pred_check_branch
          %157 = sbr.rel (%p155) target = $region24
        $region23: #{han_forward.7} parent=19 // pred_region
          %s158 = smul.u32 16, %s16
          %s159 = smul.u32 2, %s18
          %p160 = scmp.lt.s32.totalorder %s17, 2
          %s161 = scalar_select %p160, %s17, 2
          %p162 = scmp.lt.s32.totalorder %s158, 31
          %s163 = scalar_select %p162, %s158, 31
          %p164 = scmp.lt.s32.totalorder %s159, 1
          %s165 = scalar_select %p164, %s159, 1
          %s166 = smul.addr %s163, 2
          %s167 = sadd.s32 %s165, %s166
          %s168 = smul.addr %s161, 64
          %s169 = sadd.s32 %s167, %s168
          %s170 = smul.addr %s169, 4
          %s171 = scalar_lea.vmem %s0, %s170
          %s172 = smul.u32 16, %s16
          %s173 = smul.u32 2, %s18
        $region24: #{han_forward.7} parent=19 // pred_fallthru
          _
        // Predicated region
        $region25: #{han_forward.7} parent=19 // pred_check
          %p174 = pneg %p80
        $region26: #{han_forward.7} parent=19 // pred_check_branch
          %176 = sbr.rel (%p174) target = $region28
        $region27: #{han_forward.7} parent=19 // pred_region
          %s177 = sand.u32 %s70, 1
          %s178 = sand.u32 %s70, 1
          %s179 = smul.addr %s178, 128
          %s180 = scalar_lea.vmem [#allocation3], %s179
          %s181 = smul.u32 32, %s18
          %s182 = smul.addr %s181, 3
          %s183 = sadd.s32 %s17, %s182
          %s184 = smul.addr %s183, 4
          %s185 = scalar_lea.vmem %s1, %s184
          // Predicated region
          $region29: #{han_forward.7} parent=27 // pred_check
            _
          $region30: #{han_forward.7} parent=27 // pred_check_branch
            %187 = sbr.rel (0) target = $region32
          $region31: #{han_forward.7} parent=27 // pred_region
            // Predicated region
            $region33: #{han_forward.7} parent=31 // pred_check
              _
            $region34: #{han_forward.7} parent=31 // pred_check_branch
              %189 = sbr.rel target = $region36
            $region35: #{han_forward.7} parent=31 // pred_region
              // Predicated region
              $region48: #{han_forward.7} parent=35 // pred_check
                _
              $region49: #{han_forward.7} parent=35 // pred_check_branch
                %266 = sbr.rel (0) target = $region51
              $region50: #{han_forward.7} parent=35 // pred_region
                loop: start=0, step=1, limit=1
                $region52: #{han_forward.7} parent=50 // loop_pre_header
                  _
                $region53: #{han_forward.7} parent=50 // loop_header
                  %s268 = sphi 0, %s272
                  %p269 = scmp.ge.s32.totalorder %s268, 1
                  %s273 = sphi %s185, %s185
                  %s274 = sphi %s180, %s180
                $region54: #{han_forward.7} parent=50 // loop_header_branch
                  %271 = sbr.rel (%p269) target = $region58
                $region55: #{han_forward.7} parent=50 // loop_body
                  _
                $region56: #{han_forward.7} parent=50 // loop_footer
                  %s272 = sadd.s32 1, %s268
                $region57: #{han_forward.7} parent=50 // loop_footer_branch
                  %267 = sbr.rel target = $region53
                $region58: #{han_forward.7} parent=50 // loop_exit
                  _
                loop: start=0, step=1, limit=1
                $region59: #{han_forward.7} parent=50 // loop_pre_header
                  _
                $region60: #{han_forward.7} parent=50 // loop_header
                  %s277 = sphi 0, %s281
                  %p278 = scmp.ge.s32.totalorder %s277, 1
                  %s282 = sphi %s185, %s185
                  %s283 = sphi %s180, %s180
                $region61: #{han_forward.7} parent=50 // loop_header_branch
                  %280 = sbr.rel (%p278) target = $region65
                $region62: #{han_forward.7} parent=50 // loop_body
                  %v284 = vld [vmem:[%s282] sm:$0xf]
                  %285 = vst [vmem:[%s283] sm:$0xf] %v284
                  %v286 = vld [vmem:[%s282 + $0xc] sm:$0xf]
                  %287 = vst [vmem:[%s283 + $0x4] sm:$0xf] %v286
                  %v288 = vld [vmem:[%s282 + $0x18] sm:$0xf]
                  %289 = vst [vmem:[%s283 + $0x8] sm:$0xf] %v288
                  %v290 = vld [vmem:[%s282 + $0x24] sm:$0xf]
                  %291 = vst [vmem:[%s283 + $0xc] sm:$0xf] %v290
                  %v292 = vld [vmem:[%s282 + $0x30] sm:$0xf]
                  %293 = vst [vmem:[%s283 + $0x10] sm:$0xf] %v292
                  %v294 = vld [vmem:[%s282 + $0x3c] sm:$0xf]
                  %295 = vst [vmem:[%s283 + $0x14] sm:$0xf] %v294
                  %v296 = vld [vmem:[%s282 + $0x48] sm:$0xf]
                  %297 = vst [vmem:[%s283 + $0x18] sm:$0xf] %v296
                  %v298 = vld [vmem:[%s282 + $0x54] sm:$0xf]
                  %299 = vst [vmem:[%s283 + $0x1c] sm:$0xf] %v298
                  %v300 = vld [vmem:[%s282 + $0x60] sm:$0xf]
                  %301 = vst [vmem:[%s283 + $0x20] sm:$0xf] %v300
                  %v302 = vld [vmem:[%s282 + $0x6c] sm:$0xf]
                  %303 = vst [vmem:[%s283 + $0x24] sm:$0xf] %v302
                  %v304 = vld [vmem:[%s282 + $0x78] sm:$0xf]
                  %305 = vst [vmem:[%s283 + $0x28] sm:$0xf] %v304
                  %v306 = vld [vmem:[%s282 + $0x84] sm:$0xf]
                  %307 = vst [vmem:[%s283 + $0x2c] sm:$0xf] %v306
                  %v308 = vld [vmem:[%s282 + $0x90] sm:$0xf]
                  %309 = vst [vmem:[%s283 + $0x30] sm:$0xf] %v308
                  %v310 = vld [vmem:[%s282 + $0x9c] sm:$0xf]
                  %311 = vst [vmem:[%s283 + $0x34] sm:$0xf] %v310
                  %v312 = vld [vmem:[%s282 + $0xa8] sm:$0xf]
                  %313 = vst [vmem:[%s283 + $0x38] sm:$0xf] %v312
                  %v314 = vld [vmem:[%s282 + $0xb4] sm:$0xf]
                  %315 = vst [vmem:[%s283 + $0x3c] sm:$0xf] %v314
                  %v316 = vld [vmem:[%s282 + $0xc0] sm:$0xf]
                  %317 = vst [vmem:[%s283 + $0x40] sm:$0xf] %v316
                  %v318 = vld [vmem:[%s282 + $0xcc] sm:$0xf]
                  %319 = vst [vmem:[%s283 + $0x44] sm:$0xf] %v318
                  %v320 = vld [vmem:[%s282 + $0xd8] sm:$0xf]
                  %321 = vst [vmem:[%s283 + $0x48] sm:$0xf] %v320
                  %v322 = vld [vmem:[%s282 + $0xe4] sm:$0xf]
                  %323 = vst [vmem:[%s283 + $0x4c] sm:$0xf] %v322
                  %v324 = vld [vmem:[%s282 + $0xf0] sm:$0xf]
                  %325 = vst [vmem:[%s283 + $0x50] sm:$0xf] %v324
                  %v326 = vld [vmem:[%s282 + $0xfc] sm:$0xf]
                  %327 = vst [vmem:[%s283 + $0x54] sm:$0xf] %v326
                  %v328 = vld [vmem:[%s282 + $0x108] sm:$0xf]
                  %329 = vst [vmem:[%s283 + $0x58] sm:$0xf] %v328
                  %v330 = vld [vmem:[%s282 + $0x114] sm:$0xf]
                  %331 = vst [vmem:[%s283 + $0x5c] sm:$0xf] %v330
                  %v332 = vld [vmem:[%s282 + $0x120] sm:$0xf]
                  %333 = vst [vmem:[%s283 + $0x60] sm:$0xf] %v332
                  %v334 = vld [vmem:[%s282 + $0x12c] sm:$0xf]
                  %335 = vst [vmem:[%s283 + $0x64] sm:$0xf] %v334
                  %v336 = vld [vmem:[%s282 + $0x138] sm:$0xf]
                  %337 = vst [vmem:[%s283 + $0x68] sm:$0xf] %v336
                  %v338 = vld [vmem:[%s282 + $0x144] sm:$0xf]
                  %339 = vst [vmem:[%s283 + $0x6c] sm:$0xf] %v338
                  %v340 = vld [vmem:[%s282 + $0x150] sm:$0xf]
                  %341 = vst [vmem:[%s283 + $0x70] sm:$0xf] %v340
                  %v342 = vld [vmem:[%s282 + $0x15c] sm:$0xf]
                  %343 = vst [vmem:[%s283 + $0x74] sm:$0xf] %v342
                  %v344 = vld [vmem:[%s282 + $0x168] sm:$0xf]
                  %345 = vst [vmem:[%s283 + $0x78] sm:$0xf] %v344
                  %v346 = vld [vmem:[%s282 + $0x174] sm:$0xf]
                  %347 = vst [vmem:[%s283 + $0x7c] sm:$0xf] %v346
                $region63: #{han_forward.7} parent=50 // loop_footer
                  %s281 = sadd.s32 1, %s277
                $region64: #{han_forward.7} parent=50 // loop_footer_branch
                  %276 = sbr.rel target = $region60
                $region65: #{han_forward.7} parent=50 // loop_exit
                  _
              $region51: #{han_forward.7} parent=35 // pred_fallthru
                _
            $region36: #{han_forward.7} parent=31 // pred_fallthru
              _
            // Predicated region
            $region37: #{han_forward.7} parent=31 // pred_check
              _
            $region38: #{han_forward.7} parent=31 // pred_check_branch
              %191 = sbr.rel (0) target = $region40
            $region39: #{han_forward.7} parent=31 // pred_region
              loop: start=0, step=1, limit=1
              $region41: #{han_forward.7} parent=39 // loop_pre_header
                _
              $region42: #{han_forward.7} parent=39 // loop_header
                %s194 = sphi 0, %s198
                %p195 = scmp.ge.s32.totalorder %s194, 1
                %s199 = sphi %s185, %s185
                %s200 = sphi %s180, %s180
              $region43: #{han_forward.7} parent=39 // loop_header_branch
                %197 = sbr.rel (%p195) target = $region47
              $region44: #{han_forward.7} parent=39 // loop_body
                %v201 = vld [vmem:[%s199] sm:$0xf]
                %202 = vst [vmem:[%s200] sm:$0xf] %v201
                %v203 = vld [vmem:[%s199 + $0xc] sm:$0xf]
                %204 = vst [vmem:[%s200 + $0x4] sm:$0xf] %v203
                %v205 = vld [vmem:[%s199 + $0x18] sm:$0xf]
                %206 = vst [vmem:[%s200 + $0x8] sm:$0xf] %v205
                %v207 = vld [vmem:[%s199 + $0x24] sm:$0xf]
                %208 = vst [vmem:[%s200 + $0xc] sm:$0xf] %v207
                %v209 = vld [vmem:[%s199 + $0x30] sm:$0xf]
                %210 = vst [vmem:[%s200 + $0x10] sm:$0xf] %v209
                %v211 = vld [vmem:[%s199 + $0x3c] sm:$0xf]
                %212 = vst [vmem:[%s200 + $0x14] sm:$0xf] %v211
                %v213 = vld [vmem:[%s199 + $0x48] sm:$0xf]
                %214 = vst [vmem:[%s200 + $0x18] sm:$0xf] %v213
                %v215 = vld [vmem:[%s199 + $0x54] sm:$0xf]
                %216 = vst [vmem:[%s200 + $0x1c] sm:$0xf] %v215
                %v217 = vld [vmem:[%s199 + $0x60] sm:$0xf]
                %218 = vst [vmem:[%s200 + $0x20] sm:$0xf] %v217
                %v219 = vld [vmem:[%s199 + $0x6c] sm:$0xf]
                %220 = vst [vmem:[%s200 + $0x24] sm:$0xf] %v219
                %v221 = vld [vmem:[%s199 + $0x78] sm:$0xf]
                %222 = vst [vmem:[%s200 + $0x28] sm:$0xf] %v221
                %v223 = vld [vmem:[%s199 + $0x84] sm:$0xf]
                %224 = vst [vmem:[%s200 + $0x2c] sm:$0xf] %v223
                %v225 = vld [vmem:[%s199 + $0x90] sm:$0xf]
                %226 = vst [vmem:[%s200 + $0x30] sm:$0xf] %v225
                %v227 = vld [vmem:[%s199 + $0x9c] sm:$0xf]
                %228 = vst [vmem:[%s200 + $0x34] sm:$0xf] %v227
                %v229 = vld [vmem:[%s199 + $0xa8] sm:$0xf]
                %230 = vst [vmem:[%s200 + $0x38] sm:$0xf] %v229
                %v231 = vld [vmem:[%s199 + $0xb4] sm:$0xf]
                %232 = vst [vmem:[%s200 + $0x3c] sm:$0xf] %v231
                %v233 = vld [vmem:[%s199 + $0xc0] sm:$0xf]
                %234 = vst [vmem:[%s200 + $0x40] sm:$0xf] %v233
                %v235 = vld [vmem:[%s199 + $0xcc] sm:$0xf]
                %236 = vst [vmem:[%s200 + $0x44] sm:$0xf] %v235
                %v237 = vld [vmem:[%s199 + $0xd8] sm:$0xf]
                %238 = vst [vmem:[%s200 + $0x48] sm:$0xf] %v237
                %v239 = vld [vmem:[%s199 + $0xe4] sm:$0xf]
                %240 = vst [vmem:[%s200 + $0x4c] sm:$0xf] %v239
                %v241 = vld [vmem:[%s199 + $0xf0] sm:$0xf]
                %242 = vst [vmem:[%s200 + $0x50] sm:$0xf] %v241
                %v243 = vld [vmem:[%s199 + $0xfc] sm:$0xf]
                %244 = vst [vmem:[%s200 + $0x54] sm:$0xf] %v243
                %v245 = vld [vmem:[%s199 + $0x108] sm:$0xf]
                %246 = vst [vmem:[%s200 + $0x58] sm:$0xf] %v245
                %v247 = vld [vmem:[%s199 + $0x114] sm:$0xf]
                %248 = vst [vmem:[%s200 + $0x5c] sm:$0xf] %v247
                %v249 = vld [vmem:[%s199 + $0x120] sm:$0xf]
                %250 = vst [vmem:[%s200 + $0x60] sm:$0xf] %v249
                %v251 = vld [vmem:[%s199 + $0x12c] sm:$0xf]
                %252 = vst [vmem:[%s200 + $0x64] sm:$0xf] %v251
                %v253 = vld [vmem:[%s199 + $0x138] sm:$0xf]
                %254 = vst [vmem:[%s200 + $0x68] sm:$0xf] %v253
                %v255 = vld [vmem:[%s199 + $0x144] sm:$0xf]
                %256 = vst [vmem:[%s200 + $0x6c] sm:$0xf] %v255
                %v257 = vld [vmem:[%s199 + $0x150] sm:$0xf]
                %258 = vst [vmem:[%s200 + $0x70] sm:$0xf] %v257
                %v259 = vld [vmem:[%s199 + $0x15c] sm:$0xf]
                %260 = vst [vmem:[%s200 + $0x74] sm:$0xf] %v259
                %v261 = vld [vmem:[%s199 + $0x168] sm:$0xf]
                %262 = vst [vmem:[%s200 + $0x78] sm:$0xf] %v261
                %v263 = vld [vmem:[%s199 + $0x174] sm:$0xf]
                %264 = vst [vmem:[%s200 + $0x7c] sm:$0xf] %v263
              $region45: #{han_forward.7} parent=39 // loop_footer
                %s198 = sadd.s32 1, %s194
              $region46: #{han_forward.7} parent=39 // loop_footer_branch
                %193 = sbr.rel target = $region42
              $region47: #{han_forward.7} parent=39 // loop_exit
                _
            $region40: #{han_forward.7} parent=31 // pred_fallthru
              _
          $region32: #{han_forward.7} parent=27 // pred_fallthru
            _
          %348 = vnop
        $region28: #{han_forward.7} parent=19 // pred_fallthru
          _
      $region20: #{han_forward.7} parent=5 // pred_fallthru
        _
      %p349 = scmp.le.s32.totalorder 1, %s9
      %p350 = scmp.lt.s32.totalorder %s9, 7
      %p351 = pnand %p349, %p350
      %p352 = pneg %p351
      // Predicated region
      $region66: #{han_forward.7} parent=5 // pred_check
        _
      $region67: #{han_forward.7} parent=5 // pred_check_branch
        %354 = sbr.rel (%p351) target = $region69
      $region68: #{han_forward.7} parent=5 // pred_region
        %s355 = ssub.s32 %s9, 1
        %s356 = sand.u32 %s73, 1
        %s357 = sand.u32 %s73, 1
        %s358 = smul.addr %s357, 128
        %s359 = scalar_lea.vmem [#allocation3], %s358
        // Predicated region
        $region70: #{han_forward.7} parent=68 // pred_check
          %p360 = pneg %p86
        $region71: #{han_forward.7} parent=68 // pred_check_branch
          %362 = sbr.rel (%p360) target = $region73
        $region72: #{han_forward.7} parent=68 // pred_region
          _
        $region73: #{han_forward.7} parent=68 // pred_fallthru
          _
        %s363 = smul.u32 16, %s19
        %s364 = smul.u32 2, %s21
        %p365 = scmp.lt.s32.totalorder %s20, 2
        %s366 = scalar_select %p365, %s20, 2
        %p367 = scmp.lt.s32.totalorder %s363, 31
        %s368 = scalar_select %p367, %s363, 31
        %p369 = scmp.lt.s32.totalorder %s364, 1
        %s370 = scalar_select %p369, %s364, 1
        %s371 = smul.addr %s368, 2
        %s372 = sadd.s32 %s370, %s371
        %s373 = smul.addr %s366, 64
        %s374 = sadd.s32 %s372, %s373
        %s375 = smul.addr %s374, 4
        %s376 = scalar_lea.vmem %s0, %s375
        %p377 = pneg %p58
        %p378 = pneg %p55
        %s379 = sand.u32 %s73, 1
        %s380 = sand.u32 %s73, 1
        %s381 = smul.addr %s380, 128
        %s382 = scalar_lea.vmem [#allocation3], %s381
        %p383 = pneg %p86
        %p384 = pneg %p83
        %p385 = pneg %p107
        %p386 = pneg %p104
        %p387 = pneg %p133
        %p388 = pneg %p130
        %s389 = smul.u32 16, %s19
        %p390 = scmp.lt.s32.totalorder %s389, 31
        %s391 = scalar_select %p390, %s389, 31
        %s392 = smul.addr %s391, 4
        %s393 = scalar_lea.vmem %s3, %s392
        %s394 = smul.u32 16, %s19
        %s395 = smul.u32 2, %s21
        %p396 = scmp.lt.s32.totalorder %s20, 2
        %s397 = scalar_select %p396, %s20, 2
        %p398 = scmp.lt.s32.totalorder %s394, 31
        %s399 = scalar_select %p398, %s394, 31
        %p400 = scmp.lt.s32.totalorder %s395, 1
        %s401 = scalar_select %p400, %s395, 1
        %s402 = smul.addr %s399, 2
        %s403 = sadd.s32 %s401, %s402
        %s404 = smul.addr %s397, 64
        %s405 = sadd.s32 %s403, %s404
        %s406 = smul.addr %s405, 4
        %s407 = scalar_lea.vmem %s0, %s406
        %s408 = smul.u32 16, %s19
        %s409 = smul.u32 2, %s21
        %s410 = smul.u32 32, %s21
        %s411 = smul.u32 16, %s19
        %p412 = scmp.lt.s32.totalorder %s411, 31
        %s413 = scalar_select %p412, %s411, 31
        %s414 = smul.addr %s413, 4
        %s415 = scalar_lea.vmem %s3, %s414
        %s416 = smul.u32 16, %s19
        %p418 = scmp.eq.s32.totalorder %s20, 0
        %p419 = scmp.eq.s32.totalorder %s21, 0
        %p420 = pnand %p418, %p419
        %p421 = pneg %p420
        // Predicated region
        $region74: #{han_forward.7} parent=68 // pred_check
          _
        $region75: #{han_forward.7} parent=68 // pred_check_branch
          %423 = sbr.rel (%p420) target = $region77
        $region76: #{han_forward.7} parent=68 // pred_region
          %424 = vst [vmem:[#allocation2] sm:$0xff] 0.0
          %425 = vst [vmem:[#allocation2 + $0x8] sm:$0xff] 0.0
          %426 = vst [vmem:[#allocation2 + $0x10] sm:$0xff] 0.0
          %427 = vst [vmem:[#allocation2 + $0x18] sm:$0xff] 0.0
          %428 = vst [vmem:[#allocation2 + $0x20] sm:$0xff] 0.0
          %429 = vst [vmem:[#allocation2 + $0x28] sm:$0xff] 0.0
          %430 = vst [vmem:[#allocation2 + $0x30] sm:$0xff] 0.0
          %431 = vst [vmem:[#allocation2 + $0x38] sm:$0xff] 0.0
          %432 = vst [vmem:[#allocation2 + $0x40] sm:$0xff] 0.0
          %433 = vst [vmem:[#allocation2 + $0x48] sm:$0xff] 0.0
          %434 = vst [vmem:[#allocation2 + $0x50] sm:$0xff] 0.0
          %435 = vst [vmem:[#allocation2 + $0x58] sm:$0xff] 0.0
          %436 = vst [vmem:[#allocation2 + $0x60] sm:$0xff] 0.0
          %437 = vst [vmem:[#allocation2 + $0x68] sm:$0xff] 0.0
          %438 = vst [vmem:[#allocation2 + $0x70] sm:$0xff] 0.0
          %439 = vst [vmem:[#allocation2 + $0x78] sm:$0xff] 0.0
        $region77: #{han_forward.7} parent=68 // pred_fallthru
          _
        %v440 = vld [vmem:[#allocation2] sm:$0xff]
        %v441 = vld [vmem:[#allocation2 + $0x8] sm:$0xff]
        %v442 = vld [vmem:[#allocation2 + $0x10] sm:$0xff]
        %v443 = vld [vmem:[#allocation2 + $0x18] sm:$0xff]
        %v444 = vld [vmem:[#allocation2 + $0x20] sm:$0xff]
        %v445 = vld [vmem:[#allocation2 + $0x28] sm:$0xff]
        %v446 = vld [vmem:[#allocation2 + $0x30] sm:$0xff]
        %v447 = vld [vmem:[#allocation2 + $0x38] sm:$0xff]
        %v448 = vld [vmem:[#allocation2 + $0x40] sm:$0xff]
        %v449 = vld [vmem:[#allocation2 + $0x48] sm:$0xff]
        %v450 = vld [vmem:[#allocation2 + $0x50] sm:$0xff]
        %v451 = vld [vmem:[#allocation2 + $0x58] sm:$0xff]
        %v452 = vld [vmem:[#allocation2 + $0x60] sm:$0xff]
        %v453 = vld [vmem:[#allocation2 + $0x68] sm:$0xff]
        %v454 = vld [vmem:[#allocation2 + $0x70] sm:$0xff]
        %v455 = vld [vmem:[#allocation2 + $0x78] sm:$0xff]
        %v456 = vld [vmem:[%s407] sm:$0xff]
        %v457 = vld [vmem:[%s407 + $0x8] sm:$0xff]
        %v458 = vld [vmem:[%s407 + $0x10] sm:$0xff]
        %v459 = vld [vmem:[%s407 + $0x18] sm:$0xff]
        %v460 = vld [vmem:[%s407 + $0x20] sm:$0xff]
        %v461 = vld [vmem:[%s407 + $0x28] sm:$0xff]
        %v462 = vld [vmem:[%s407 + $0x30] sm:$0xff]
        %v463 = vld [vmem:[%s407 + $0x38] sm:$0xff]
        %v464 = vld [vmem:[%s407 + $0x40] sm:$0xff]
        %v465 = vld [vmem:[%s407 + $0x48] sm:$0xff]
        %v466 = vld [vmem:[%s407 + $0x50] sm:$0xff]
        %v467 = vld [vmem:[%s407 + $0x58] sm:$0xff]
        %v468 = vld [vmem:[%s407 + $0x60] sm:$0xff]
        %v469 = vld [vmem:[%s407 + $0x68] sm:$0xff]
        %v470 = vld [vmem:[%s407 + $0x70] sm:$0xff]
        %v471 = vld [vmem:[%s407 + $0x78] sm:$0xff]
        %v472 = vld [vmem:[%s359] sm:$0xf]
        %v473 = vld [vmem:[%s359 + $0x4] sm:$0xf]
        %v474 = vld [vmem:[%s359 + $0x8] sm:$0xf]
        %v475 = vld [vmem:[%s359 + $0xc] sm:$0xf]
        %v476 = vld [vmem:[%s359 + $0x10] sm:$0xf]
        %v477 = vld [vmem:[%s359 + $0x14] sm:$0xf]
        %v478 = vld [vmem:[%s359 + $0x18] sm:$0xf]
        %v479 = vld [vmem:[%s359 + $0x1c] sm:$0xf]
        %v480 = vld [vmem:[%s359 + $0x20] sm:$0xf]
        %v481 = vld [vmem:[%s359 + $0x24] sm:$0xf]
        %v482 = vld [vmem:[%s359 + $0x28] sm:$0xf]
        %v483 = vld [vmem:[%s359 + $0x2c] sm:$0xf]
        %v484 = vld [vmem:[%s359 + $0x30] sm:$0xf]
        %v485 = vld [vmem:[%s359 + $0x34] sm:$0xf]
        %v486 = vld [vmem:[%s359 + $0x38] sm:$0xf]
        %v487 = vld [vmem:[%s359 + $0x3c] sm:$0xf]
        %v488 = vld [vmem:[%s359 + $0x40] sm:$0xf]
        %v489 = vld [vmem:[%s359 + $0x44] sm:$0xf]
        %v490 = vld [vmem:[%s359 + $0x48] sm:$0xf]
        %v491 = vld [vmem:[%s359 + $0x4c] sm:$0xf]
        %v492 = vld [vmem:[%s359 + $0x50] sm:$0xf]
        %v493 = vld [vmem:[%s359 + $0x54] sm:$0xf]
        %v494 = vld [vmem:[%s359 + $0x58] sm:$0xf]
        %v495 = vld [vmem:[%s359 + $0x5c] sm:$0xf]
        %v496 = vld [vmem:[%s359 + $0x60] sm:$0xf]
        %v497 = vld [vmem:[%s359 + $0x64] sm:$0xf]
        %v498 = vld [vmem:[%s359 + $0x68] sm:$0xf]
        %v499 = vld [vmem:[%s359 + $0x6c] sm:$0xf]
        %v500 = vld [vmem:[%s359 + $0x70] sm:$0xf]
        %v501 = vld [vmem:[%s359 + $0x74] sm:$0xf]
        %v502 = vld [vmem:[%s359 + $0x78] sm:$0xf]
        %v503 = vld [vmem:[%s359 + $0x7c] sm:$0xf]
        %v520 = vunpack.c.l.b16 %v456
        %v521 = vunpack.c.h.b16 %v456
        %v522 = vunpack.c.l.b16 %v457
        %v523 = vunpack.c.h.b16 %v457
        %v524 = vunpack.c.l.b16 %v458
        %v525 = vunpack.c.h.b16 %v458
        %v526 = vunpack.c.l.b16 %v459
        %v527 = vunpack.c.h.b16 %v459
        %v528 = vunpack.c.l.b16 %v460
        %v529 = vunpack.c.h.b16 %v460
        %v530 = vunpack.c.l.b16 %v461
        %v531 = vunpack.c.h.b16 %v461
        %v532 = vunpack.c.l.b16 %v462
        %v533 = vunpack.c.h.b16 %v462
        %v534 = vunpack.c.l.b16 %v463
        %v535 = vunpack.c.h.b16 %v463
        %v536 = vunpack.c.l.b16 %v464
        %v537 = vunpack.c.h.b16 %v464
        %v538 = vunpack.c.l.b16 %v465
        %v539 = vunpack.c.h.b16 %v465
        %v540 = vunpack.c.l.b16 %v466
        %v541 = vunpack.c.h.b16 %v466
        %v542 = vunpack.c.l.b16 %v467
        %v543 = vunpack.c.h.b16 %v467
        %v544 = vunpack.c.l.b16 %v468
        %v545 = vunpack.c.h.b16 %v468
        %v546 = vunpack.c.l.b16 %v469
        %v547 = vunpack.c.h.b16 %v469
        %v548 = vunpack.c.l.b16 %v470
        %v549 = vunpack.c.h.b16 %v470
        %v550 = vunpack.c.l.b16 %v471
        %v551 = vunpack.c.h.b16 %v471
        %v552 = vpack.c.b16 %v522, %v520
        %v553 = vpack.c.b16 %v523, %v521
        %v554 = vpack.c.b16 %v526, %v524
        %v555 = vpack.c.b16 %v527, %v525
        %v556 = vpack.c.b16 %v530, %v528
        %v557 = vpack.c.b16 %v531, %v529
        %v558 = vpack.c.b16 %v534, %v532
        %v559 = vpack.c.b16 %v535, %v533
        %v560 = vpack.c.b16 %v538, %v536
        %v561 = vpack.c.b16 %v539, %v537
        %v562 = vpack.c.b16 %v542, %v540
        %v563 = vpack.c.b16 %v543, %v541
        %v564 = vpack.c.b16 %v546, %v544
        %v565 = vpack.c.b16 %v547, %v545
        %v566 = vpack.c.b16 %v550, %v548
        %v567 = vpack.c.b16 %v551, %v549
        %v616 = vunpack.c.l.b16 %v472
        %v617 = vunpack.c.l.b16 %v473
        %v618 = vunpack.c.l.b16 %v474
        %v619 = vunpack.c.l.b16 %v475
        %v620 = vunpack.c.l.b16 %v476
        %v621 = vunpack.c.l.b16 %v477
        %v622 = vunpack.c.l.b16 %v478
        %v623 = vunpack.c.l.b16 %v479
        %v624 = vunpack.c.l.b16 %v480
        %v625 = vunpack.c.l.b16 %v481
        %v626 = vunpack.c.l.b16 %v482
        %v627 = vunpack.c.l.b16 %v483
        %v628 = vunpack.c.l.b16 %v484
        %v629 = vunpack.c.l.b16 %v485
        %v630 = vunpack.c.l.b16 %v486
        %v631 = vunpack.c.l.b16 %v487
        %v632 = vunpack.c.l.b16 %v488
        %v633 = vunpack.c.l.b16 %v489
        %v634 = vunpack.c.l.b16 %v490
        %v635 = vunpack.c.l.b16 %v491
        %v636 = vunpack.c.l.b16 %v492
        %v637 = vunpack.c.l.b16 %v493
        %v638 = vunpack.c.l.b16 %v494
        %v639 = vunpack.c.l.b16 %v495
        %v640 = vunpack.c.l.b16 %v496
        %v641 = vunpack.c.l.b16 %v497
        %v642 = vunpack.c.l.b16 %v498
        %v643 = vunpack.c.l.b16 %v499
        %v644 = vunpack.c.l.b16 %v500
        %v645 = vunpack.c.l.b16 %v501
        %v646 = vunpack.c.l.b16 %v502
        %v647 = vunpack.c.l.b16 %v503
        %v648 = vpack.c.b16 %v617, %v616
        %v649 = vpack.c.b16 %v619, %v618
        %v650 = vpack.c.b16 %v621, %v620
        %v651 = vpack.c.b16 %v623, %v622
        %v652 = vpack.c.b16 %v625, %v624
        %v653 = vpack.c.b16 %v627, %v626
        %v654 = vpack.c.b16 %v629, %v628
        %v655 = vpack.c.b16 %v631, %v630
        %v656 = vpack.c.b16 %v633, %v632
        %v657 = vpack.c.b16 %v635, %v634
        %v658 = vpack.c.b16 %v637, %v636
        %v659 = vpack.c.b16 %v639, %v638
        %v660 = vpack.c.b16 %v641, %v640
        %v661 = vpack.c.b16 %v643, %v642
        %v662 = vpack.c.b16 %v645, %v644
        %v663 = vpack.c.b16 %v647, %v646
        %680 = vmatprep.subr.bf16.mxu0 0
        %681 = vmatpush1.bf16.msra.mxu0 %v648
        %682 = vmatprep.subr.bf16.mxu0 0
        %683 = vmatpush1.bf16.msra.mxu0 %v649
        %684 = vmatprep.subr.bf16.mxu0 0
        %685 = vmatpush1.bf16.msra.mxu0 %v650
        %686 = vmatprep.subr.bf16.mxu0 0
        %687 = vmatpush1.bf16.msra.mxu0 %v651
        %688 = vmatprep.subr.bf16.mxu0 0
        %689 = vmatpush1.bf16.msra.mxu0 %v652
        %690 = vmatprep.subr.bf16.mxu0 0
        %691 = vmatpush1.bf16.msra.mxu0 %v653
        %692 = vmatprep.subr.bf16.mxu0 0
        %693 = vmatpush1.bf16.msra.mxu0 %v654
        %694 = vmatprep.subr.bf16.mxu0 0
        %695 = vmatpush1.bf16.msra.mxu0 %v655
        %696 = vmatprep.subr.bf16.mxu0 0
        %697 = vmatpush1.bf16.msra.mxu0 %v656
        %698 = vmatprep.subr.bf16.mxu0 0
        %699 = vmatpush1.bf16.msra.mxu0 %v657
        %700 = vmatprep.subr.bf16.mxu0 0
        %701 = vmatpush1.bf16.msra.mxu0 %v658
        %702 = vmatprep.subr.bf16.mxu0 0
        %703 = vmatpush1.bf16.msra.mxu0 %v659
        %704 = vmatprep.subr.bf16.mxu0 0
        %705 = vmatpush1.bf16.msra.mxu0 %v660
        %706 = vmatprep.subr.bf16.mxu0 0
        %707 = vmatpush1.bf16.msra.mxu0 %v661
        %708 = vmatprep.subr.bf16.mxu0 0
        %709 = vmatpush1.bf16.msra.mxu0 %v662
        %710 = vmatprep.subr.bf16.mxu0 0
        %711 = vmatpush1.bf16.msra.mxu0 %v663
        %712 = vmatprep.mubr.bf16.mxu0 %v553
        %713 = vmatmul.mubr.bf16.gmra.mrb[0].mxu0 %v552
        %v714 = vpop.f32.mrb[0].mxu0
        %v715 = vadd.f32 0.0, %v714
        %v716 = vpop.f32.mrb[0].mxu0
        %v717 = vpop.f32.mrb[0].mxu0
        %v718 = vadd.f32 0.0, %v717
        %v719 = vpop.f32.mrb[0].mxu0
        %720 = vmatprep.mubr.bf16.mxu0 %v555
        %721 = vmatmul.mubr.bf16.gmra.mrb[0].mxu0 %v554
        %v722 = vpop.f32.mrb[0].mxu0
        %v723 = vadd.f32 0.0, %v722
        %v724 = vpop.f32.mrb[0].mxu0
        %v725 = vpop.f32.mrb[0].mxu0
        %v726 = vadd.f32 0.0, %v725
        %v727 = vpop.f32.mrb[0].mxu0
        %728 = vmatprep.mubr.bf16.mxu0 %v557
        %729 = vmatmul.mubr.bf16.gmra.mrb[0].mxu0 %v556
        %v730 = vpop.f32.mrb[0].mxu0
        %v731 = vadd.f32 0.0, %v730
        %v732 = vpop.f32.mrb[0].mxu0
        %v733 = vpop.f32.mrb[0].mxu0
        %v734 = vadd.f32 0.0, %v733
        %v735 = vpop.f32.mrb[0].mxu0
        %736 = vmatprep.mubr.bf16.mxu0 %v559
        %737 = vmatmul.mubr.bf16.gmra.mrb[0].mxu0 %v558
        %v738 = vpop.f32.mrb[0].mxu0
        %v739 = vadd.f32 0.0, %v738
        %v740 = vpop.f32.mrb[0].mxu0
        %v741 = vpop.f32.mrb[0].mxu0
        %v742 = vadd.f32 0.0, %v741
        %v743 = vpop.f32.mrb[0].mxu0
        %744 = vmatprep.mubr.bf16.mxu0 %v561
        %745 = vmatmul.mubr.bf16.gmra.mrb[0].mxu0 %v560
        %v746 = vpop.f32.mrb[0].mxu0
        %v747 = vadd.f32 0.0, %v746
        %v748 = vpop.f32.mrb[0].mxu0
        %v749 = vpop.f32.mrb[0].mxu0
        %v750 = vadd.f32 0.0, %v749
        %v751 = vpop.f32.mrb[0].mxu0
        %752 = vmatprep.mubr.bf16.mxu0 %v563
        %753 = vmatmul.mubr.bf16.gmra.mrb[0].mxu0 %v562
        %v754 = vpop.f32.mrb[0].mxu0
        %v755 = vadd.f32 0.0, %v754
        %v756 = vpop.f32.mrb[0].mxu0
        %v757 = vpop.f32.mrb[0].mxu0
        %v758 = vadd.f32 0.0, %v757
        %v759 = vpop.f32.mrb[0].mxu0
        %760 = vmatprep.mubr.bf16.mxu0 %v565
        %761 = vmatmul.mubr.bf16.gmra.mrb[0].mxu0 %v564
        %v762 = vpop.f32.mrb[0].mxu0
        %v763 = vadd.f32 0.0, %v762
        %v764 = vpop.f32.mrb[0].mxu0
        %v765 = vpop.f32.mrb[0].mxu0
        %v766 = vadd.f32 0.0, %v765
        %v767 = vpop.f32.mrb[0].mxu0
        %768 = vmatprep.mubr.bf16.mxu0 %v567
        %769 = vmatmul.mubr.bf16.gmra.mrb[0].mxu0 %v566
        %v770 = vpop.f32.mrb[0].mxu0
        %v771 = vadd.f32 0.0, %v770
        %v772 = vpop.f32.mrb[0].mxu0
        %v773 = vpop.f32.mrb[0].mxu0
        %v774 = vadd.f32 0.0, %v773
        %v775 = vpop.f32.mrb[0].mxu0
        %776 = vdwg.mxu0
        %v777 = vadd.f32 %v440, %v715
        %v778 = vadd.f32 %v441, %v718
        %v779 = vadd.f32 %v442, %v723
        %v780 = vadd.f32 %v443, %v726
        %v781 = vadd.f32 %v444, %v731
        %v782 = vadd.f32 %v445, %v734
        %v783 = vadd.f32 %v446, %v739
        %v784 = vadd.f32 %v447, %v742
        %v785 = vadd.f32 %v448, %v747
        %v786 = vadd.f32 %v449, %v750
        %v787 = vadd.f32 %v450, %v755
        %v788 = vadd.f32 %v451, %v758
        %v789 = vadd.f32 %v452, %v763
        %v790 = vadd.f32 %v453, %v766
        %v791 = vadd.f32 %v454, %v771
        %v792 = vadd.f32 %v455, %v774
        %793 = vst [vmem:[#allocation2] sm:$0xff] %v777
        %794 = vst [vmem:[#allocation2 + $0x8] sm:$0xff] %v778
        %795 = vst [vmem:[#allocation2 + $0x10] sm:$0xff] %v779
        %796 = vst [vmem:[#allocation2 + $0x18] sm:$0xff] %v780
        %797 = vst [vmem:[#allocation2 + $0x20] sm:$0xff] %v781
        %798 = vst [vmem:[#allocation2 + $0x28] sm:$0xff] %v782
        %799 = vst [vmem:[#allocation2 + $0x30] sm:$0xff] %v783
        %800 = vst [vmem:[#allocation2 + $0x38] sm:$0xff] %v784
        %801 = vst [vmem:[#allocation2 + $0x40] sm:$0xff] %v785
        %802 = vst [vmem:[#allocation2 + $0x48] sm:$0xff] %v786
        %803 = vst [vmem:[#allocation2 + $0x50] sm:$0xff] %v787
        %804 = vst [vmem:[#allocation2 + $0x58] sm:$0xff] %v788
        %805 = vst [vmem:[#allocation2 + $0x60] sm:$0xff] %v789
        %806 = vst [vmem:[#allocation2 + $0x68] sm:$0xff] %v790
        %807 = vst [vmem:[#allocation2 + $0x70] sm:$0xff] %v791
        %808 = vst [vmem:[#allocation2 + $0x78] sm:$0xff] %v792
        %p809 = scmp.eq.s32.totalorder %s20, 2
        %p810 = pnand %p809, %p419
        %p811 = pneg %p810
        // Predicated region
        $region78: #{han_forward.7} parent=68 // pred_check
          _
        $region79: #{han_forward.7} parent=68 // pred_check_branch
          %813 = sbr.rel (%p810) target = $region81
        $region80: #{han_forward.7} parent=68 // pred_region
          %v814 = vld [vmem:[#allocation2] sm:$0xff]
          %v815 = vld [vmem:[#allocation2 + $0x8] sm:$0xff]
          %v816 = vld [vmem:[#allocation2 + $0x10] sm:$0xff]
          %v817 = vld [vmem:[#allocation2 + $0x18] sm:$0xff]
          %v818 = vld [vmem:[#allocation2 + $0x20] sm:$0xff]
          %v819 = vld [vmem:[#allocation2 + $0x28] sm:$0xff]
          %v820 = vld [vmem:[#allocation2 + $0x30] sm:$0xff]
          %v821 = vld [vmem:[#allocation2 + $0x38] sm:$0xff]
          %v822 = vld [vmem:[#allocation2 + $0x40] sm:$0xff]
          %v823 = vld [vmem:[#allocation2 + $0x48] sm:$0xff]
          %v824 = vld [vmem:[#allocation2 + $0x50] sm:$0xff]
          %v825 = vld [vmem:[#allocation2 + $0x58] sm:$0xff]
          %v826 = vld [vmem:[#allocation2 + $0x60] sm:$0xff]
          %v827 = vld [vmem:[#allocation2 + $0x68] sm:$0xff]
          %v828 = vld [vmem:[#allocation2 + $0x70] sm:$0xff]
          %v829 = vld [vmem:[#allocation2 + $0x78] sm:$0xff]
          %v830 = vmul.f32 %v814, 0.33333334
          %v831 = vmul.f32 %v815, 0.33333334
          %v832 = vmul.f32 %v816, 0.33333334
          %v833 = vmul.f32 %v817, 0.33333334
          %v834 = vmul.f32 %v818, 0.33333334
          %v835 = vmul.f32 %v819, 0.33333334
          %v836 = vmul.f32 %v820, 0.33333334
          %v837 = vmul.f32 %v821, 0.33333334
          %v838 = vmul.f32 %v822, 0.33333334
          %v839 = vmul.f32 %v823, 0.33333334
          %v840 = vmul.f32 %v824, 0.33333334
          %v841 = vmul.f32 %v825, 0.33333334
          %v842 = vmul.f32 %v826, 0.33333334
          %v843 = vmul.f32 %v827, 0.33333334
          %v844 = vmul.f32 %v828, 0.33333334
          %v845 = vmul.f32 %v829, 0.33333334
          %v846 = vld [vmem:[%s2] sm:$0x1]
          %v848 = vlaneseq
          %v849 = vshrl.u32 %v848, 7
          %v850 = vsub.s32 0, %v849
          %v851 = vrot.slane %v846, %v850
          %v853 = vadd.f32 %v830, %v851
          %v854 = vadd.f32 %v831, %v851
          %v855 = vadd.f32 %v832, %v851
          %v856 = vadd.f32 %v833, %v851
          %v857 = vadd.f32 %v834, %v851
          %v858 = vadd.f32 %v835, %v851
          %v859 = vadd.f32 %v836, %v851
          %v860 = vadd.f32 %v837, %v851
          %v861 = vadd.f32 %v838, %v851
          %v862 = vadd.f32 %v839, %v851
          %v863 = vadd.f32 %v840, %v851
          %v864 = vadd.f32 %v841, %v851
          %v865 = vadd.f32 %v842, %v851
          %v866 = vadd.f32 %v843, %v851
          %v867 = vadd.f32 %v844, %v851
          %v868 = vadd.f32 %v845, %v851
          %v869 = vmax.f32 %v853, 0.0
          %v870 = vmax.f32 %v854, 0.0
          %v871 = vmax.f32 %v855, 0.0
          %v872 = vmax.f32 %v856, 0.0
          %v873 = vmax.f32 %v857, 0.0
          %v874 = vmax.f32 %v858, 0.0
          %v875 = vmax.f32 %v859, 0.0
          %v876 = vmax.f32 %v860, 0.0
          %v877 = vmax.f32 %v861, 0.0
          %v878 = vmax.f32 %v862, 0.0
          %v879 = vmax.f32 %v863, 0.0
          %v880 = vmax.f32 %v864, 0.0
          %v881 = vmax.f32 %v865, 0.0
          %v882 = vmax.f32 %v866, 0.0
          %v883 = vmax.f32 %v867, 0.0
          %v884 = vmax.f32 %v868, 0.0
          %v885 = vpack.c.bf16 %v870, %v869
          %v886 = vpack.c.bf16 %v872, %v871
          %v887 = vpack.c.bf16 %v874, %v873
          %v888 = vpack.c.bf16 %v876, %v875
          %v889 = vpack.c.bf16 %v878, %v877
          %v890 = vpack.c.bf16 %v880, %v879
          %v891 = vpack.c.bf16 %v882, %v881
          %v892 = vpack.c.bf16 %v884, %v883
          %v901 = vunpack.c.l.b16 %v885
          %v902 = vunpack.c.h.b16 %v885
          %v903 = vunpack.c.l.b16 %v886
          %v904 = vunpack.c.h.b16 %v886
          %v905 = vunpack.c.l.b16 %v887
          %v906 = vunpack.c.h.b16 %v887
          %v907 = vunpack.c.l.b16 %v888
          %v908 = vunpack.c.h.b16 %v888
          %v909 = vunpack.c.l.b16 %v889
          %v910 = vunpack.c.h.b16 %v889
          %v911 = vunpack.c.l.b16 %v890
          %v912 = vunpack.c.h.b16 %v890
          %v913 = vunpack.c.l.b16 %v891
          %v914 = vunpack.c.h.b16 %v891
          %v915 = vunpack.c.l.b16 %v892
          %v916 = vunpack.c.h.b16 %v892
          %v917 = vpack.c.b16 %v901, %v901
          %v918 = vpack.c.b16 %v902, %v902
          %v919 = vpack.c.b16 %v903, %v903
          %v920 = vpack.c.b16 %v904, %v904
          %v921 = vpack.c.b16 %v905, %v905
          %v922 = vpack.c.b16 %v906, %v906
          %v923 = vpack.c.b16 %v907, %v907
          %v924 = vpack.c.b16 %v908, %v908
          %v925 = vpack.c.b16 %v909, %v909
          %v926 = vpack.c.b16 %v910, %v910
          %v927 = vpack.c.b16 %v911, %v911
          %v928 = vpack.c.b16 %v912, %v912
          %v929 = vpack.c.b16 %v913, %v913
          %v930 = vpack.c.b16 %v914, %v914
          %v931 = vpack.c.b16 %v915, %v915
          %v932 = vpack.c.b16 %v916, %v916
          %949 = vst [vmem:[%s415] sm:$0xf] %v917
          %950 = vst [vmem:[%s415 + $0x4] sm:$0xf] %v918
          %951 = vst [vmem:[%s415 + $0x8] sm:$0xf] %v919
          %952 = vst [vmem:[%s415 + $0xc] sm:$0xf] %v920
          %953 = vst [vmem:[%s415 + $0x10] sm:$0xf] %v921
          %954 = vst [vmem:[%s415 + $0x14] sm:$0xf] %v922
          %955 = vst [vmem:[%s415 + $0x18] sm:$0xf] %v923
          %956 = vst [vmem:[%s415 + $0x1c] sm:$0xf] %v924
          %957 = vst [vmem:[%s415 + $0x20] sm:$0xf] %v925
          %958 = vst [vmem:[%s415 + $0x24] sm:$0xf] %v926
          %959 = vst [vmem:[%s415 + $0x28] sm:$0xf] %v927
          %960 = vst [vmem:[%s415 + $0x2c] sm:$0xf] %v928
          %961 = vst [vmem:[%s415 + $0x30] sm:$0xf] %v929
          %962 = vst [vmem:[%s415 + $0x34] sm:$0xf] %v930
          %963 = vst [vmem:[%s415 + $0x38] sm:$0xf] %v931
          %964 = vst [vmem:[%s415 + $0x3c] sm:$0xf] %v932
        $region81: #{han_forward.7} parent=68 // pred_fallthru
          _
        %s965 = smul.u32 16, %s19
        %p966 = scmp.lt.s32.totalorder %s965, 31
        %s967 = scalar_select %p966, %s965, 31
        %s968 = smul.addr %s967, 4
        %s969 = scalar_lea.vmem %s3, %s968
        // Predicated region
        $region82: #{han_forward.7} parent=68 // pred_check
          %p970 = pneg %p130
        $region83: #{han_forward.7} parent=68 // pred_check_branch
          %972 = sbr.rel (%p970) target = $region85
        $region84: #{han_forward.7} parent=68 // pred_region
          %s973 = smul.u32 16, %s19
        $region85: #{han_forward.7} parent=68 // pred_fallthru
          _
      $region69: #{han_forward.7} parent=5 // pred_fallthru
        _
      %p974 = scmp.le.s32.totalorder 2, %s9
      // Predicated region
      $region86: #{han_forward.7} parent=5 // pred_check
        %p975 = pneg %p974
      $region87: #{han_forward.7} parent=5 // pred_check_branch
        %977 = sbr.rel (%p975) target = $region89
      $region88: #{han_forward.7} parent=5 // pred_region
        %s978 = ssub.s32 %s9, 2
        // Predicated region
        $region90: #{han_forward.7} parent=88 // pred_check
          %p979 = pneg %p136
        $region91: #{han_forward.7} parent=88 // pred_check_branch
          %981 = sbr.rel (%p979) target = $region93
        $region92: #{han_forward.7} parent=88 // pred_region
          %s982 = smul.u32 16, %s22
          %p983 = scmp.lt.s32.totalorder %s982, 31
          %s984 = scalar_select %p983, %s982, 31
          %s985 = smul.addr %s984, 4
          %s986 = scalar_lea.vmem %s3, %s985
        $region93: #{han_forward.7} parent=88 // pred_fallthru
          _
      $region89: #{han_forward.7} parent=5 // pred_fallthru
        _
    $region6: #{han_forward.7} parent=1 // loop_footer
      %s13 = sadd.s32 1, %s9
    $region7: #{han_forward.7} parent=1 // loop_footer_branch
      %8 = sbr.rel target = $region3
    $region8: #{han_forward.7} parent=1 // loop_exit
      _

// kernel: han_forward.8
$region0: #{han_forward.8}
  #allocation0 [shape = 'u32[]', space=smem, size = 0x4, offset = 0x4, fixed_abs, tag = 'smem constant byte address 0x4 - core index']
  #allocation1 [shape = 'u32[144,128]{1,0:T(1,128)}', space=vmem, size = 0x12000, scoped, tag = 'internal scratch']
  %s0 = inlined_call_operand.vmem [shape: bf16[256,128], index: 0, kind: input, shape index: {}]
  %s1 = inlined_call_operand.vmem [shape: bf16[128,384], index: 1, kind: input, shape index: {}]
  %s2 = inlined_call_operand.vmem [shape: bf16[256,384], index: 2, kind: output, shape index: {}]
  %s3 = sld [smem:[#allocation0]]
  $region41: #{han_forward.8} parent=0
    _
  %s5 = ssub.s32 1, %s3
  %s6 = scalar_select 0, %s5, %s3
  loop: start=0, step=1, limit=4
  $region2: #{han_forward.8} parent=0 // loop_pre_header
    _
  $region3: #{han_forward.8} parent=0 // loop_header
    %s8 = sphi 0, %s12
    %p9 = scmp.ge.s32.totalorder %s8, 4
    %s18 = sphi 0, %s20
    %s21 = sphi 0, %s18
    %s22 = sphi 0, %s21
    %s38 = sphi 0, %s22
    %s42 = sphi 0, %s42
    %s44 = sphi 0, %s42
    %s45 = sphi 0, %s44
    %s59 = sphi 0, %s45
    %s65 = sphi 0, %s67
    %s68 = sphi 0, %s65
    %s69 = sphi 0, %s68
    %s85 = sphi 0, %s69
  $region4: #{han_forward.8} parent=0 // loop_header_branch
    %11 = sbr.rel (%p9) target = $region8
  $region5: #{han_forward.8} parent=0 // loop_body
    %s13 = ssub.s32 %s8, 1
    %s14 = ssub.s32 %s8, 2
    %s15 = sadd.s32 %s8, 1
    %s16 = ssub.s32 %s8, %s15
    %p17 = scmp.eq.s32.totalorder %s16, 0
    %s19 = sadd.s32 %s18, 1
    %s20 = scalar_select %p17, %s18, %s19
    %p23 = pneg %p17
    %p24 = scmp.eq.s32.totalorder %s8, 1
    %p25 = por %p23, %p24
    %p26 = scmp.ne.s32.totalorder %s18, %s21
    %p27 = scmp.eq.s32.totalorder %s8, 0
    %p28 = por %p26, %p27
    %p29 = scmp.ne.s32.totalorder %s18, %s21
    %p30 = scmp.eq.s32.totalorder %s13, 1
    %p31 = por %p29, %p30
    %p32 = scmp.ne.s32.totalorder %s21, %s22
    %p33 = scmp.eq.s32.totalorder %s13, 0
    %p34 = por %p32, %p33
    %p35 = scmp.ne.s32.totalorder %s21, %s22
    %p36 = scmp.eq.s32.totalorder %s14, 1
    %p37 = por %p35, %p36
    %p39 = scmp.ne.s32.totalorder %s22, %s38
    %p40 = scmp.eq.s32.totalorder %s14, 0
    %p41 = por %p39, %p40
    %s43 = sadd.s32 %s42, 1
    %p46 = scmp.eq.s32.totalorder %s8, 1
    %p47 = scmp.ne.s32.totalorder %s42, %s44
    %p48 = scmp.eq.s32.totalorder %s8, 0
    %p49 = por %p47, %p48
    %p50 = scmp.ne.s32.totalorder %s42, %s44
    %p51 = scmp.eq.s32.totalorder %s13, 1
    %p52 = por %p50, %p51
    %p53 = scmp.ne.s32.totalorder %s44, %s45
    %p54 = scmp.eq.s32.totalorder %s13, 0
    %p55 = por %p53, %p54
    %p56 = scmp.ne.s32.totalorder %s44, %s45
    %p57 = scmp.eq.s32.totalorder %s14, 1
    %p58 = por %p56, %p57
    %p60 = scmp.ne.s32.totalorder %s45, %s59
    %p61 = scmp.eq.s32.totalorder %s14, 0
    %p62 = por %p60, %p61
    %s63 = ssub.s32 %s8, %s15
    %p64 = scmp.eq.s32.totalorder %s63, 0
    %s66 = sadd.s32 %s65, 1
    %s67 = scalar_select %p64, %s65, %s66
    %p70 = pneg %p64
    %p71 = scmp.eq.s32.totalorder %s8, 1
    %p72 = por %p70, %p71
    %p73 = scmp.ne.s32.totalorder %s65, %s68
    %p74 = scmp.eq.s32.totalorder %s8, 0
    %p75 = por %p73, %p74
    %p76 = scmp.ne.s32.totalorder %s65, %s68
    %p77 = scmp.eq.s32.totalorder %s13, 1
    %p78 = por %p76, %p77
    %p79 = scmp.ne.s32.totalorder %s68, %s69
    %p80 = scmp.eq.s32.totalorder %s13, 0
    %p81 = por %p79, %p80
    %p82 = scmp.ne.s32.totalorder %s68, %s69
    %p83 = scmp.eq.s32.totalorder %s14, 1
    %p84 = por %p82, %p83
    %p86 = scmp.ne.s32.totalorder %s69, %s85
    %p87 = scmp.eq.s32.totalorder %s14, 0
    %p88 = por %p86, %p87
    %p89 = scmp.le.s32.totalorder 1, %s8
    %p90 = scmp.lt.s32.totalorder %s8, 3
    %p91 = pnand %p89, %p90
    %p92 = pneg %p91
    // Predicated region
    $region9: #{han_forward.8} parent=5 // pred_check
      _
    $region10: #{han_forward.8} parent=5 // pred_check_branch
      %94 = sbr.rel (%p91) target = $region12
    $region11: #{han_forward.8} parent=5 // pred_region
      %s95 = ssub.s32 %s8, 1
      // Predicated region
      $region13: #{han_forward.8} parent=11 // pred_check
        %p96 = pneg %p55
      $region14: #{han_forward.8} parent=11 // pred_check_branch
        %98 = sbr.rel (%p96) target = $region16
      $region15: #{han_forward.8} parent=11 // pred_region
        _
      $region16: #{han_forward.8} parent=11 // pred_fallthru
        _
    $region12: #{han_forward.8} parent=5 // pred_fallthru
      _
    %p99 = scmp.lt.s32.totalorder %s8, 2
    // Predicated region
    $region17: #{han_forward.8} parent=5 // pred_check
      %p100 = pneg %p99
    $region18: #{han_forward.8} parent=5 // pred_check_branch
      %102 = sbr.rel (%p100) target = $region20
    $region19: #{han_forward.8} parent=5 // pred_region
      // Predicated region
      $region21: #{han_forward.8} parent=19 // pred_check
        %p103 = pneg %p28
      $region22: #{han_forward.8} parent=19 // pred_check_branch
        %105 = sbr.rel (%p103) target = $region24
      $region23: #{han_forward.8} parent=19 // pred_region
        %s106 = smul.u32 16, %s8
        %p107 = scmp.lt.s32.totalorder %s106, 31
        %s108 = scalar_select %p107, %s106, 31
        %s109 = smul.addr %s108, 4
        %s110 = scalar_lea.vmem %s0, %s109
        %s111 = smul.u32 16, %s8
      $region24: #{han_forward.8} parent=19 // pred_fallthru
        _
    $region20: #{han_forward.8} parent=5 // pred_fallthru
      _
    %p112 = scmp.le.s32.totalorder 1, %s8
    %p113 = scmp.lt.s32.totalorder %s8, 3
    %p114 = pnand %p112, %p113
    %p115 = pneg %p114
    // Predicated region
    $region25: #{han_forward.8} parent=5 // pred_check
      _
    $region26: #{han_forward.8} parent=5 // pred_check_branch
      %117 = sbr.rel (%p114) target = $region28
    $region27: #{han_forward.8} parent=5 // pred_region
      %s118 = ssub.s32 %s8, 1
      %s119 = smul.u32 16, %s13
      %p120 = scmp.lt.s32.totalorder %s119, 31
      %s121 = scalar_select %p120, %s119, 31
      %s122 = smul.addr %s121, 4
      %s123 = scalar_lea.vmem %s0, %s122
      %p124 = pneg %p34
      %p125 = pneg %p31
      %p126 = pneg %p55
      %p127 = pneg %p52
      %p128 = pneg %p81
      %p129 = pneg %p78
      %s130 = smul.u32 16, %s13
      %p131 = scmp.lt.s32.totalorder %s130, 31
      %s132 = scalar_select %p131, %s130, 31
      %s133 = smul.addr %s132, 3
      %s134 = smul.addr %s133, 4
      %s135 = scalar_lea.vmem %s2, %s134
      %s136 = smul.u32 16, %s13
      %p137 = scmp.lt.s32.totalorder %s136, 31
      %s138 = scalar_select %p137, %s136, 31
      %s139 = smul.addr %s138, 4
      %s140 = scalar_lea.vmem %s0, %s139
      %s141 = smul.u32 16, %s13
      %s142 = smul.u32 16, %s13
      %p143 = scmp.lt.s32.totalorder %s142, 31
      %s144 = scalar_select %p143, %s142, 31
      %s145 = smul.addr %s144, 3
      %s146 = smul.addr %s145, 4
      %s147 = scalar_lea.vmem %s2, %s146
      %s148 = smul.u32 16, %s13
      %v150 = vld [vmem:[%s140] sm:$0xf]
      %v151 = vld [vmem:[%s140 + $0x4] sm:$0xf]
      %v152 = vld [vmem:[%s140 + $0x8] sm:$0xf]
      %v153 = vld [vmem:[%s140 + $0xc] sm:$0xf]
      %v154 = vld [vmem:[%s140 + $0x10] sm:$0xf]
      %v155 = vld [vmem:[%s140 + $0x14] sm:$0xf]
      %v156 = vld [vmem:[%s140 + $0x18] sm:$0xf]
      %v157 = vld [vmem:[%s140 + $0x1c] sm:$0xf]
      %v158 = vld [vmem:[%s140 + $0x20] sm:$0xf]
      %v159 = vld [vmem:[%s140 + $0x24] sm:$0xf]
      %v160 = vld [vmem:[%s140 + $0x28] sm:$0xf]
      %v161 = vld [vmem:[%s140 + $0x2c] sm:$0xf]
      %v162 = vld [vmem:[%s140 + $0x30] sm:$0xf]
      %v163 = vld [vmem:[%s140 + $0x34] sm:$0xf]
      %v164 = vld [vmem:[%s140 + $0x38] sm:$0xf]
      %v165 = vld [vmem:[%s140 + $0x3c] sm:$0xf]
      %v166 = vld [vmem:[%s1] sm:$0xff]
      %v167 = vld [vmem:[%s1 + $0x8] sm:$0xf]
      %v168 = vld [vmem:[%s1 + $0xc] sm:$0xff]
      %v169 = vld [vmem:[%s1 + $0x14] sm:$0xf]
      %v170 = vld [vmem:[%s1 + $0x18] sm:$0xff]
      %v171 = vld [vmem:[%s1 + $0x20] sm:$0xf]
      %v172 = vld [vmem:[%s1 + $0x24] sm:$0xff]
      %v173 = vld [vmem:[%s1 + $0x2c] sm:$0xf]
      %v174 = vld [vmem:[%s1 + $0x30] sm:$0xff]
      %v175 = vld [vmem:[%s1 + $0x38] sm:$0xf]
      %v176 = vld [vmem:[%s1 + $0x3c] sm:$0xff]
      %v177 = vld [vmem:[%s1 + $0x44] sm:$0xf]
      %v178 = vld [vmem:[%s1 + $0x48] sm:$0xff]
      %v179 = vld [vmem:[%s1 + $0x50] sm:$0xf]
      %v180 = vld [vmem:[%s1 + $0x54] sm:$0xff]
      %v181 = vld [vmem:[%s1 + $0x5c] sm:$0xf]
      %v182 = vld [vmem:[%s1 + $0x60] sm:$0xff]
      %v183 = vld [vmem:[%s1 + $0x68] sm:$0xf]
      %v184 = vld [vmem:[%s1 + $0x6c] sm:$0xff]
      %v185 = vld [vmem:[%s1 + $0x74] sm:$0xf]
      %v186 = vld [vmem:[%s1 + $0x78] sm:$0xff]
      %v187 = vld [vmem:[%s1 + $0x80] sm:$0xf]
      %v188 = vld [vmem:[%s1 + $0x84] sm:$0xff]
      %v189 = vld [vmem:[%s1 + $0x8c] sm:$0xf]
      %v190 = vld [vmem:[%s1 + $0x90] sm:$0xff]
      %v191 = vld [vmem:[%s1 + $0x98] sm:$0xf]
      %v192 = vld [vmem:[%s1 + $0x9c] sm:$0xff]
      %v193 = vld [vmem:[%s1 + $0xa4] sm:$0xf]
      %v194 = vld [vmem:[%s1 + $0xa8] sm:$0xff]
      %v195 = vld [vmem:[%s1 + $0xb0] sm:$0xf]
      %v196 = vld [vmem:[%s1 + $0xb4] sm:$0xff]
      %v197 = vld [vmem:[%s1 + $0xbc] sm:$0xf]
      %v214 = vunpack.c.l.b16 %v150
      %v215 = vunpack.c.l.b16 %v151
      %v216 = vunpack.c.l.b16 %v152
      %v217 = vunpack.c.l.b16 %v153
      %v218 = vunpack.c.l.b16 %v154
      %v219 = vunpack.c.l.b16 %v155
      %v220 = vunpack.c.l.b16 %v156
      %v221 = vunpack.c.l.b16 %v157
      %v222 = vunpack.c.l.b16 %v158
      %v223 = vunpack.c.l.b16 %v159
      %v224 = vunpack.c.l.b16 %v160
      %v225 = vunpack.c.l.b16 %v161
      %v226 = vunpack.c.l.b16 %v162
      %v227 = vunpack.c.l.b16 %v163
      %v228 = vunpack.c.l.b16 %v164
      %v229 = vunpack.c.l.b16 %v165
      %v230 = vpack.c.b16 %v215, %v214
      %v231 = vpack.c.b16 %v217, %v216
      %v232 = vpack.c.b16 %v219, %v218
      %v233 = vpack.c.b16 %v221, %v220
      %v234 = vpack.c.b16 %v223, %v222
      %v235 = vpack.c.b16 %v225, %v224
      %v236 = vpack.c.b16 %v227, %v226
      %v237 = vpack.c.b16 %v229, %v228
      %v278 = vunpack.c.l.b16 %v166
      %v279 = vunpack.c.h.b16 %v166
      %v280 = vunpack.c.l.b16 %v167
      %v281 = vunpack.c.l.b16 %v168
      %v282 = vunpack.c.h.b16 %v168
      %v283 = vunpack.c.l.b16 %v169
      %v284 = vunpack.c.l.b16 %v170
      %v285 = vunpack.c.h.b16 %v170
      %v286 = vunpack.c.l.b16 %v171
      %v287 = vunpack.c.l.b16 %v172
      %v288 = vunpack.c.h.b16 %v172
      %v289 = vunpack.c.l.b16 %v173
      %v290 = vunpack.c.l.b16 %v174
      %v291 = vunpack.c.h.b16 %v174
      %v292 = vunpack.c.l.b16 %v175
      %v293 = vunpack.c.l.b16 %v176
      %v294 = vunpack.c.h.b16 %v176
      %v295 = vunpack.c.l.b16 %v177
      %v296 = vunpack.c.l.b16 %v178
      %v297 = vunpack.c.h.b16 %v178
      %v298 = vunpack.c.l.b16 %v179
      %v299 = vunpack.c.l.b16 %v180
      %v300 = vunpack.c.h.b16 %v180
      %v301 = vunpack.c.l.b16 %v181
      %v302 = vunpack.c.l.b16 %v182
      %v303 = vunpack.c.h.b16 %v182
      %v304 = vunpack.c.l.b16 %v183
      %v305 = vunpack.c.l.b16 %v184
      %v306 = vunpack.c.h.b16 %v184
      %v307 = vunpack.c.l.b16 %v185
      %v308 = vunpack.c.l.b16 %v186
      %v309 = vunpack.c.h.b16 %v186
      %v310 = vunpack.c.l.b16 %v187
      %v311 = vunpack.c.l.b16 %v188
      %v312 = vunpack.c.h.b16 %v188
      %v313 = vunpack.c.l.b16 %v189
      %v314 = vunpack.c.l.b16 %v190
      %v315 = vunpack.c.h.b16 %v190
      %v316 = vunpack.c.l.b16 %v191
      %v317 = vunpack.c.l.b16 %v192
      %v318 = vunpack.c.h.b16 %v192
      %v319 = vunpack.c.l.b16 %v193
      %v320 = vunpack.c.l.b16 %v194
      %v321 = vunpack.c.h.b16 %v194
      %v322 = vunpack.c.l.b16 %v195
      %v323 = vunpack.c.l.b16 %v196
      %v324 = vunpack.c.h.b16 %v196
      %v325 = vunpack.c.l.b16 %v197
      %v326 = vpack.c.b16 %v281, %v278
      %v327 = vpack.c.b16 %v282, %v279
      %v328 = vpack.c.b16 %v283, %v280
      %v329 = vpack.c.b16 %v287, %v284
      %v330 = vpack.c.b16 %v288, %v285
      %v331 = vpack.c.b16 %v289, %v286
      %v332 = vpack.c.b16 %v293, %v290
      %v333 = vpack.c.b16 %v294, %v291
      %v334 = vpack.c.b16 %v295, %v292
      %v335 = vpack.c.b16 %v299, %v296
      %v336 = vpack.c.b16 %v300, %v297
      %v337 = vpack.c.b16 %v301, %v298
      %v338 = vpack.c.b16 %v305, %v302
      %v339 = vpack.c.b16 %v306, %v303
      %v340 = vpack.c.b16 %v307, %v304
      %v341 = vpack.c.b16 %v311, %v308
      %v342 = vpack.c.b16 %v312, %v309
      %v343 = vpack.c.b16 %v313, %v310
      %v344 = vpack.c.b16 %v317, %v314
      %v345 = vpack.c.b16 %v318, %v315
      %v346 = vpack.c.b16 %v319, %v316
      %v347 = vpack.c.b16 %v323, %v320
      %v348 = vpack.c.b16 %v324, %v321
      %v349 = vpack.c.b16 %v325, %v322
      %374 = vmatprep.subr.bf16.mxu0 %v327
      %375 = vmatpush1.bf16.msra.mxu0 %v326
      %376 = vmatprep.subr.bf16.mxu0 %v330
      %377 = vmatpush1.bf16.msra.mxu0 %v329
      %378 = vmatprep.subr.bf16.mxu0 %v333
      %379 = vmatpush1.bf16.msra.mxu0 %v332
      %380 = vmatprep.subr.bf16.mxu0 %v336
      %381 = vmatpush1.bf16.msra.mxu0 %v335
      %382 = vmatprep.subr.bf16.mxu0 %v339
      %383 = vmatpush1.bf16.msra.mxu0 %v338
      %384 = vmatprep.subr.bf16.mxu0 %v342
      %385 = vmatpush1.bf16.msra.mxu0 %v341
      %386 = vmatprep.subr.bf16.mxu0 %v345
      %387 = vmatpush1.bf16.msra.mxu0 %v344
      %388 = vmatprep.subr.bf16.mxu0 %v348
      %389 = vmatpush1.bf16.msra.mxu0 %v347
      %390 = vmatprep.subr.bf16.mxu0 0
      %391 = vmatpush1.bf16.msra.mxu0 0
      %392 = vmatprep.subr.bf16.mxu0 0
      %393 = vmatpush1.bf16.msra.mxu0 0
      %394 = vmatprep.subr.bf16.mxu0 0
      %395 = vmatpush1.bf16.msra.mxu0 0
      %396 = vmatprep.subr.bf16.mxu0 0
      %397 = vmatpush1.bf16.msra.mxu0 0
      %398 = vmatprep.subr.bf16.mxu0 0
      %399 = vmatpush1.bf16.msra.mxu0 0
      %400 = vmatprep.subr.bf16.mxu0 0
      %401 = vmatpush1.bf16.msra.mxu0 0
      %402 = vmatprep.subr.bf16.mxu0 0
      %403 = vmatpush1.bf16.msra.mxu0 0
      %404 = vmatprep.subr.bf16.mxu0 0
      %405 = vmatpush1.bf16.msra.mxu0 0
      %406 = vmatprep.mubr.bf16.mxu0 0
      %407 = vmatmul.mubr.bf16.gmra.mrb[0].mxu0 %v230
      %v408 = vpop.f32.mrb[0].mxu0
      %v409 = vadd.f32 0.0, %v408
      %v410 = vpop.f32.mrb[0].mxu0
      %v411 = vadd.f32 0.0, %v410
      %v412 = vpop.f32.mrb[0].mxu0
      %v413 = vadd.f32 0.0, %v412
      %v414 = vpop.f32.mrb[0].mxu0
      %v415 = vadd.f32 0.0, %v414
      %416 = vmatprep.mubr.bf16.mxu0 0
      %417 = vmatmul.mubr.bf16.gmra.mrb[0].mxu0 %v231
      %v418 = vpop.f32.mrb[0].mxu0
      %v419 = vadd.f32 0.0, %v418
      %v420 = vpop.f32.mrb[0].mxu0
      %v421 = vadd.f32 0.0, %v420
      %v422 = vpop.f32.mrb[0].mxu0
      %v423 = vadd.f32 0.0, %v422
      %v424 = vpop.f32.mrb[0].mxu0
      %v425 = vadd.f32 0.0, %v424
      %426 = vmatprep.mubr.bf16.mxu0 0
      %427 = vmatmul.mubr.bf16.gmra.mrb[0].mxu0 %v232
      %v428 = vpop.f32.mrb[0].mxu0
      %v429 = vadd.f32 0.0, %v428
      %v430 = vpop.f32.mrb[0].mxu0
      %v431 = vadd.f32 0.0, %v430
      %v432 = vpop.f32.mrb[0].mxu0
      %v433 = vadd.f32 0.0, %v432
      %v434 = vpop.f32.mrb[0].mxu0
      %v435 = vadd.f32 0.0, %v434
      %436 = vmatprep.mubr.bf16.mxu0 0
      %437 = vmatmul.mubr.bf16.gmra.mrb[0].mxu0 %v233
      %v438 = vpop.f32.mrb[0].mxu0
      %v439 = vadd.f32 0.0, %v438
      %v440 = vpop.f32.mrb[0].mxu0
      %v441 = vadd.f32 0.0, %v440
      %v442 = vpop.f32.mrb[0].mxu0
      %v443 = vadd.f32 0.0, %v442
      %v444 = vpop.f32.mrb[0].mxu0
      %v445 = vadd.f32 0.0, %v444
      %446 = vmatprep.mubr.bf16.mxu0 0
      %447 = vmatmul.mubr.bf16.gmra.mrb[0].mxu0 %v234
      %v448 = vpop.f32.mrb[0].mxu0
      %v449 = vadd.f32 0.0, %v448
      %v450 = vpop.f32.mrb[0].mxu0
      %v451 = vadd.f32 0.0, %v450
      %v452 = vpop.f32.mrb[0].mxu0
      %v453 = vadd.f32 0.0, %v452
      %v454 = vpop.f32.mrb[0].mxu0
      %v455 = vadd.f32 0.0, %v454
      %456 = vmatprep.mubr.bf16.mxu0 0
      %457 = vmatmul.mubr.bf16.gmra.mrb[0].mxu0 %v235
      %v458 = vpop.f32.mrb[0].mxu0
      %v459 = vadd.f32 0.0, %v458
      %v460 = vpop.f32.mrb[0].mxu0
      %v461 = vadd.f32 0.0, %v460
      %v462 = vpop.f32.mrb[0].mxu0
      %v463 = vadd.f32 0.0, %v462
      %v464 = vpop.f32.mrb[0].mxu0
      %v465 = vadd.f32 0.0, %v464
      %466 = vmatprep.mubr.bf16.mxu0 0
      %467 = vmatmul.mubr.bf16.gmra.mrb[0].mxu0 %v236
      %v468 = vpop.f32.mrb[0].mxu0
      %v469 = vadd.f32 0.0, %v468
      %v470 = vpop.f32.mrb[0].mxu0
      %v471 = vadd.f32 0.0, %v470
      %v472 = vpop.f32.mrb[0].mxu0
      %v473 = vadd.f32 0.0, %v472
      %v474 = vpop.f32.mrb[0].mxu0
      %v475 = vadd.f32 0.0, %v474
      %476 = vmatprep.mubr.bf16.mxu0 0
      %477 = vmatmul.mubr.bf16.gmra.mrb[0].mxu0 %v237
      %v478 = vpop.f32.mrb[0].mxu0
      %v479 = vadd.f32 0.0, %v478
      %v480 = vpop.f32.mrb[0].mxu0
      %v481 = vadd.f32 0.0, %v480
      %v482 = vpop.f32.mrb[0].mxu0
      %v483 = vadd.f32 0.0, %v482
      %v484 = vpop.f32.mrb[0].mxu0
      %v485 = vadd.f32 0.0, %v484
      %486 = vdwg.mxu0
      %487 = vmatprep.subr.bf16.mxu0 0
      %488 = vmatpush1.bf16.msra.mxu0 %v328
      %489 = vmatprep.subr.bf16.mxu0 0
      %490 = vmatpush1.bf16.msra.mxu0 %v331
      %491 = vmatprep.subr.bf16.mxu0 0
      %492 = vmatpush1.bf16.msra.mxu0 %v334
      %493 = vmatprep.subr.bf16.mxu0 0
      %494 = vmatpush1.bf16.msra.mxu0 %v337
      %495 = vmatprep.subr.bf16.mxu0 0
      %496 = vmatpush1.bf16.msra.mxu0 %v340
      %497 = vmatprep.subr.bf16.mxu0 0
      %498 = vmatpush1.bf16.msra.mxu0 %v343
      %499 = vmatprep.subr.bf16.mxu0 0
      %500 = vmatpush1.bf16.msra.mxu0 %v346
      %501 = vmatprep.subr.bf16.mxu0 0
      %502 = vmatpush1.bf16.msra.mxu0 %v349
      %503 = vmatprep.subr.bf16.mxu0 0
      %504 = vmatpush1.bf16.msra.mxu0 0
      %505 = vmatprep.subr.bf16.mxu0 0
      %506 = vmatpush1.bf16.msra.mxu0 0
      %507 = vmatprep.subr.bf16.mxu0 0
      %508 = vmatpush1.bf16.msra.mxu0 0
      %509 = vmatprep.subr.bf16.mxu0 0
      %510 = vmatpush1.bf16.msra.mxu0 0
      %511 = vmatprep.subr.bf16.mxu0 0
      %512 = vmatpush1.bf16.msra.mxu0 0
      %513 = vmatprep.subr.bf16.mxu0 0
      %514 = vmatpush1.bf16.msra.mxu0 0
      %515 = vmatprep.subr.bf16.mxu0 0
      %516 = vmatpush1.bf16.msra.mxu0 0
      %517 = vmatprep.subr.bf16.mxu0 0
      %518 = vmatpush1.bf16.msra.mxu0 0
      %519 = vmatprep.mubr.bf16.mxu0 0
      %520 = vmatmul.mubr.bf16.gmra.mrb[0].mxu0 %v230
      %v521 = vpop.f32.mrb[0].mxu0
      %v522 = vadd.f32 0.0, %v521
      %v523 = vpop.f32.mrb[0].mxu0
      %v524 = vpop.f32.mrb[0].mxu0
      %v525 = vadd.f32 0.0, %v524
      %v526 = vpop.f32.mrb[0].mxu0
      %527 = vmatprep.mubr.bf16.mxu0 0
      %528 = vmatmul.mubr.bf16.gmra.mrb[0].mxu0 %v231
      %v529 = vpop.f32.mrb[0].mxu0
      %v530 = vadd.f32 0.0, %v529
      %v531 = vpop.f32.mrb[0].mxu0
      %v532 = vpop.f32.mrb[0].mxu0
      %v533 = vadd.f32 0.0, %v532
      %v534 = vpop.f32.mrb[0].mxu0
      %535 = vmatprep.mubr.bf16.mxu0 0
      %536 = vmatmul.mubr.bf16.gmra.mrb[0].mxu0 %v232
      %v537 = vpop.f32.mrb[0].mxu0
      %v538 = vadd.f32 0.0, %v537
      %v539 = vpop.f32.mrb[0].mxu0
      %v540 = vpop.f32.mrb[0].mxu0
      %v541 = vadd.f32 0.0, %v540
      %v542 = vpop.f32.mrb[0].mxu0
      %543 = vmatprep.mubr.bf16.mxu0 0
      %544 = vmatmul.mubr.bf16.gmra.mrb[0].mxu0 %v233
      %v545 = vpop.f32.mrb[0].mxu0
      %v546 = vadd.f32 0.0, %v545
      %v547 = vpop.f32.mrb[0].mxu0
      %v548 = vpop.f32.mrb[0].mxu0
      %v549 = vadd.f32 0.0, %v548
      %v550 = vpop.f32.mrb[0].mxu0
      %551 = vmatprep.mubr.bf16.mxu0 0
      %552 = vmatmul.mubr.bf16.gmra.mrb[0].mxu0 %v234
      %v553 = vpop.f32.mrb[0].mxu0
      %v554 = vadd.f32 0.0, %v553
      %v555 = vpop.f32.mrb[0].mxu0
      %v556 = vpop.f32.mrb[0].mxu0
      %v557 = vadd.f32 0.0, %v556
      %v558 = vpop.f32.mrb[0].mxu0
      %559 = vmatprep.mubr.bf16.mxu0 0
      %560 = vmatmul.mubr.bf16.gmra.mrb[0].mxu0 %v235
      %v561 = vpop.f32.mrb[0].mxu0
      %v562 = vadd.f32 0.0, %v561
      %v563 = vpop.f32.mrb[0].mxu0
      %v564 = vpop.f32.mrb[0].mxu0
      %v565 = vadd.f32 0.0, %v564
      %v566 = vpop.f32.mrb[0].mxu0
      %567 = vmatprep.mubr.bf16.mxu0 0
      %568 = vmatmul.mubr.bf16.gmra.mrb[0].mxu0 %v236
      %v569 = vpop.f32.mrb[0].mxu0
      %v570 = vadd.f32 0.0, %v569
      %v571 = vpop.f32.mrb[0].mxu0
      %v572 = vpop.f32.mrb[0].mxu0
      %v573 = vadd.f32 0.0, %v572
      %v574 = vpop.f32.mrb[0].mxu0
      %575 = vmatprep.mubr.bf16.mxu0 0
      %576 = vmatmul.mubr.bf16.gmra.mrb[0].mxu0 %v237
      %v577 = vpop.f32.mrb[0].mxu0
      %v578 = vadd.f32 0.0, %v577
      %v579 = vpop.f32.mrb[0].mxu0
      %v580 = vpop.f32.mrb[0].mxu0
      %v581 = vadd.f32 0.0, %v580
      %v582 = vpop.f32.mrb[0].mxu0
      %583 = vdwg.mxu0
      %v584 = vpack.c.bf16 %v413, %v409
      %v585 = vpack.c.bf16 %v415, %v411
      %v586 = vpack.c.bf16 %v525, %v522
      %v587 = vpack.c.bf16 %v423, %v419
      %v588 = vpack.c.bf16 %v425, %v421
      %v589 = vpack.c.bf16 %v533, %v530
      %v590 = vpack.c.bf16 %v433, %v429
      %v591 = vpack.c.bf16 %v435, %v431
      %v592 = vpack.c.bf16 %v541, %v538
      %v593 = vpack.c.bf16 %v443, %v439
      %v594 = vpack.c.bf16 %v445, %v441
      %v595 = vpack.c.bf16 %v549, %v546
      %v596 = vpack.c.bf16 %v453, %v449
      %v597 = vpack.c.bf16 %v455, %v451
      %v598 = vpack.c.bf16 %v557, %v554
      %v599 = vpack.c.bf16 %v463, %v459
      %v600 = vpack.c.bf16 %v465, %v461
      %v601 = vpack.c.bf16 %v565, %v562
      %v602 = vpack.c.bf16 %v473, %v469
      %v603 = vpack.c.bf16 %v475, %v471
      %v604 = vpack.c.bf16 %v573, %v570
      %v605 = vpack.c.bf16 %v483, %v479
      %v606 = vpack.c.bf16 %v485, %v481
      %v607 = vpack.c.bf16 %v581, %v578
      %v632 = vunpack.c.l.b16 %v584
      %v633 = vunpack.c.l.b16 %v585
      %v634 = vunpack.c.l.b16 %v586
      %v635 = vunpack.c.h.b16 %v584
      %v636 = vunpack.c.h.b16 %v585
      %v637 = vunpack.c.h.b16 %v586
      %v638 = vunpack.c.l.b16 %v587
      %v639 = vunpack.c.l.b16 %v588
      %v640 = vunpack.c.l.b16 %v589
      %v641 = vunpack.c.h.b16 %v587
      %v642 = vunpack.c.h.b16 %v588
      %v643 = vunpack.c.h.b16 %v589
      %v644 = vunpack.c.l.b16 %v590
      %v645 = vunpack.c.l.b16 %v591
      %v646 = vunpack.c.l.b16 %v592
      %v647 = vunpack.c.h.b16 %v590
      %v648 = vunpack.c.h.b16 %v591
      %v649 = vunpack.c.h.b16 %v592
      %v650 = vunpack.c.l.b16 %v593
      %v651 = vunpack.c.l.b16 %v594
      %v652 = vunpack.c.l.b16 %v595
      %v653 = vunpack.c.h.b16 %v593
      %v654 = vunpack.c.h.b16 %v594
      %v655 = vunpack.c.h.b16 %v595
      %v656 = vunpack.c.l.b16 %v596
      %v657 = vunpack.c.l.b16 %v597
      %v658 = vunpack.c.l.b16 %v598
      %v659 = vunpack.c.h.b16 %v596
      %v660 = vunpack.c.h.b16 %v597
      %v661 = vunpack.c.h.b16 %v598
      %v662 = vunpack.c.l.b16 %v599
      %v663 = vunpack.c.l.b16 %v600
      %v664 = vunpack.c.l.b16 %v601
      %v665 = vunpack.c.h.b16 %v599
      %v666 = vunpack.c.h.b16 %v600
      %v667 = vunpack.c.h.b16 %v601
      %v668 = vunpack.c.l.b16 %v602
      %v669 = vunpack.c.l.b16 %v603
      %v670 = vunpack.c.l.b16 %v604
      %v671 = vunpack.c.h.b16 %v602
      %v672 = vunpack.c.h.b16 %v603
      %v673 = vunpack.c.h.b16 %v604
      %v674 = vunpack.c.l.b16 %v605
      %v675 = vunpack.c.l.b16 %v606
      %v676 = vunpack.c.l.b16 %v607
      %v677 = vunpack.c.h.b16 %v605
      %v678 = vunpack.c.h.b16 %v606
      %v679 = vunpack.c.h.b16 %v607
      %v680 = vpack.c.b16 %v633, %v632
      %v681 = vpack.c.b16 %v634, %v634
      %v682 = vpack.c.b16 %v636, %v635
      %v683 = vpack.c.b16 %v637, %v637
      %v684 = vpack.c.b16 %v639, %v638
      %v685 = vpack.c.b16 %v640, %v640
      %v686 = vpack.c.b16 %v642, %v641
      %v687 = vpack.c.b16 %v643, %v643
      %v688 = vpack.c.b16 %v645, %v644
      %v689 = vpack.c.b16 %v646, %v646
      %v690 = vpack.c.b16 %v648, %v647
      %v691 = vpack.c.b16 %v649, %v649
      %v692 = vpack.c.b16 %v651, %v650
      %v693 = vpack.c.b16 %v652, %v652
      %v694 = vpack.c.b16 %v654, %v653
      %v695 = vpack.c.b16 %v655, %v655
      %v696 = vpack.c.b16 %v657, %v656
      %v697 = vpack.c.b16 %v658, %v658
      %v698 = vpack.c.b16 %v660, %v659
      %v699 = vpack.c.b16 %v661, %v661
      %v700 = vpack.c.b16 %v663, %v662
      %v701 = vpack.c.b16 %v664, %v664
      %v702 = vpack.c.b16 %v666, %v665
      %v703 = vpack.c.b16 %v667, %v667
      %v704 = vpack.c.b16 %v669, %v668
      %v705 = vpack.c.b16 %v670, %v670
      %v706 = vpack.c.b16 %v672, %v671
      %v707 = vpack.c.b16 %v673, %v673
      %v708 = vpack.c.b16 %v675, %v674
      %v709 = vpack.c.b16 %v676, %v676
      %v710 = vpack.c.b16 %v678, %v677
      %v711 = vpack.c.b16 %v679, %v679
      %744 = vst [vmem:[%s147] sm:$0xff] %v680
      %745 = vst [vmem:[%s147 + $0x8] sm:$0xf] %v681
      %746 = vst [vmem:[%s147 + $0xc] sm:$0xff] %v682
      %747 = vst [vmem:[%s147 + $0x14] sm:$0xf] %v683
      %748 = vst [vmem:[%s147 + $0x18] sm:$0xff] %v684
      %749 = vst [vmem:[%s147 + $0x20] sm:$0xf] %v685
      %750 = vst [vmem:[%s147 + $0x24] sm:$0xff] %v686
      %751 = vst [vmem:[%s147 + $0x2c] sm:$0xf] %v687
      %752 = vst [vmem:[%s147 + $0x30] sm:$0xff] %v688
      %753 = vst [vmem:[%s147 + $0x38] sm:$0xf] %v689
      %754 = vst [vmem:[%s147 + $0x3c] sm:$0xff] %v690
      %755 = vst [vmem:[%s147 + $0x44] sm:$0xf] %v691
      %756 = vst [vmem:[%s147 + $0x48] sm:$0xff] %v692
      %757 = vst [vmem:[%s147 + $0x50] sm:$0xf] %v693
      %758 = vst [vmem:[%s147 + $0x54] sm:$0xff] %v694
      %759 = vst [vmem:[%s147 + $0x5c] sm:$0xf] %v695
      %760 = vst [vmem:[%s147 + $0x60] sm:$0xff] %v696
      %761 = vst [vmem:[%s147 + $0x68] sm:$0xf] %v697
      %762 = vst [vmem:[%s147 + $0x6c] sm:$0xff] %v698
      %763 = vst [vmem:[%s147 + $0x74] sm:$0xf] %v699
      %764 = vst [vmem:[%s147 + $0x78] sm:$0xff] %v700
      %765 = vst [vmem:[%s147 + $0x80] sm:$0xf] %v701
      %766 = vst [vmem:[%s147 + $0x84] sm:$0xff] %v702
      %767 = vst [vmem:[%s147 + $0x8c] sm:$0xf] %v703
      %768 = vst [vmem:[%s147 + $0x90] sm:$0xff] %v704
      %769 = vst [vmem:[%s147 + $0x98] sm:$0xf] %v705
      %770 = vst [vmem:[%s147 + $0x9c] sm:$0xff] %v706
      %771 = vst [vmem:[%s147 + $0xa4] sm:$0xf] %v707
      %772 = vst [vmem:[%s147 + $0xa8] sm:$0xff] %v708
      %773 = vst [vmem:[%s147 + $0xb0] sm:$0xf] %v709
      %774 = vst [vmem:[%s147 + $0xb4] sm:$0xff] %v710
      %775 = vst [vmem:[%s147 + $0xbc] sm:$0xf] %v711
      %s776 = smul.u32 16, %s13
      %p777 = scmp.lt.s32.totalorder %s776, 31
      %s778 = scalar_select %p777, %s776, 31
      %s779 = smul.addr %s778, 3
      %s780 = smul.addr %s779, 4
      %s781 = scalar_lea.vmem %s2, %s780
      // Predicated region
      $region29: #{han_forward.8} parent=27 // pred_check
        %p782 = pneg %p78
      $region30: #{han_forward.8} parent=27 // pred_check_branch
        %784 = sbr.rel (%p782) target = $region32
      $region31: #{han_forward.8} parent=27 // pred_region
        %s785 = smul.u32 16, %s13
      $region32: #{han_forward.8} parent=27 // pred_fallthru
        _
    $region28: #{han_forward.8} parent=5 // pred_fallthru
      _
    %p786 = scmp.le.s32.totalorder 2, %s8
    // Predicated region
    $region33: #{han_forward.8} parent=5 // pred_check
      %p787 = pneg %p786
    $region34: #{han_forward.8} parent=5 // pred_check_branch
      %789 = sbr.rel (%p787) target = $region36
    $region35: #{han_forward.8} parent=5 // pred_region
      %s790 = ssub.s32 %s8, 2
      // Predicated region
      $region37: #{han_forward.8} parent=35 // pred_check
        %p791 = pneg %p84
      $region38: #{han_forward.8} parent=35 // pred_check_branch
        %793 = sbr.rel (%p791) target = $region40
      $region39: #{han_forward.8} parent=35 // pred_region
        %s794 = smul.u32 16, %s14
        %p795 = scmp.lt.s32.totalorder %s794, 31
        %s796 = scalar_select %p795, %s794, 31
        %s797 = smul.addr %s796, 3
        %s798 = smul.addr %s797, 4
        %s799 = scalar_lea.vmem %s2, %s798
      $region40: #{han_forward.8} parent=35 // pred_fallthru
        _
    $region36: #{han_forward.8} parent=5 // pred_fallthru
      _
  $region6: #{han_forward.8} parent=0 // loop_footer
    %s12 = sadd.s32 1, %s8
  $region7: #{han_forward.8} parent=0 // loop_footer_branch
    %7 = sbr.rel target = $region3
  $region8: #{han_forward.8} parent=0 // loop_exit
    _

// kernel: han_forward.11
$region0: #{han_forward.11}
  #allocation0 [shape = 'u32[]', space=smem, size = 0x4, offset = 0x4, fixed_abs, tag = 'smem constant byte address 0x4 - core index']
  #allocation1 [shape = 'u32[144,128]{1,0:T(1,128)}', space=vmem, size = 0x12000, scoped, tag = 'internal scratch']
  #allocation2 [shape = 'f32[128,128]{1,0:T(8,128)}', space=vmem, size = 0x10000, scoped, tag = 'scratch operand']
  %s0 = inlined_call_operand.vmem [shape: bf16[3,256,256], index: 0, kind: input, shape index: {}]
  %s1 = inlined_call_operand.vmem [shape: bf16[256,384], index: 1, kind: input, shape index: {}]
  %s2 = inlined_call_operand.vmem [shape: f32[1,128], index: 2, kind: input, shape index: {}]
  %s3 = inlined_call_operand.vmem [shape: f32[256,128], index: 3, kind: output, shape index: {}]
  %s4 = sld [smem:[#allocation0]]
  $region94: #{han_forward.11} parent=0
    _
  %s6 = ssub.s32 1, %s4
  %s7 = scalar_select 0, %s6, %s4
  $region1: #{han_forward.11} parent=0
    #allocation3 [shape = 'u8[131072]{0}', space=vmem, size = 0x20000, scoped, tag = 'input window, operand 1']
    loop: start=0, step=1, limit=8
    $region2: #{han_forward.11} parent=1 // loop_pre_header
      _
    $region3: #{han_forward.11} parent=1 // loop_header
      %s9 = sphi 0, %s13
      %p10 = scmp.ge.s32.totalorder %s9, 8
      %s16 = sphi 0, %s35
      %s17 = sphi 0, %s31
      %s18 = sphi 0, %s27
      %s19 = sphi 0, %s16
      %s20 = sphi 0, %s17
      %s21 = sphi 0, %s18
      %s22 = sphi 0, %s19
      %s23 = sphi 0, %s20
      %s24 = sphi 0, %s21
      %s42 = sphi 0, %s44
      %s45 = sphi 0, %s42
      %s46 = sphi 0, %s45
      %s62 = sphi 0, %s46
      %s70 = sphi 0, %s72
      %s73 = sphi 0, %s70
      %s74 = sphi 0, %s73
      %s90 = sphi 0, %s74
      %s94 = sphi 0, %s94
      %s96 = sphi 0, %s94
      %s97 = sphi 0, %s96
      %s111 = sphi 0, %s97
      %s117 = sphi 0, %s119
      %s120 = sphi 0, %s117
      %s121 = sphi 0, %s120
      %s137 = sphi 0, %s121
    $region4: #{han_forward.11} parent=1 // loop_header_branch
      %12 = sbr.rel (%p10) target = $region8
    $region5: #{han_forward.11} parent=1 // loop_body
      %s14 = ssub.s32 %s9, 1
      %s15 = ssub.s32 %s9, 2
      %s25 = sadd.s32 1, %s18
      %p26 = scmp.ge.s32.totalorder %s25, 1
      %s27 = scalar_select %p26, 0, %s25
      %s28 = sadd.s32 1, %s17
      %s29 = scalar_select %p26, %s28, %s17
      %p30 = scmp.ge.s32.totalorder %s29, 3
      %s31 = scalar_select %p30, 0, %s29
      %s32 = sadd.s32 1, %s16
      %s33 = scalar_select %p30, %s32, %s16
      %p34 = scmp.ge.s32.totalorder %s33, 2
      %s35 = scalar_select %p34, 0, %s33
      %s36 = ssub.s32 %s17, %s31
      %s37 = ssub.s32 %s16, %s35
      %s38 = sor.u32 %s36, %s37
      %s39 = ssub.s32 %s18, %s27
      %s40 = sor.u32 %s38, %s39
      %p41 = scmp.eq.s32.totalorder %s40, 0
      %s43 = sadd.s32 %s42, 1
      %s44 = scalar_select %p41, %s42, %s43
      %p47 = pneg %p41
      %p48 = scmp.eq.s32.totalorder %s9, 5
      %p49 = por %p47, %p48
      %p50 = scmp.ne.s32.totalorder %s42, %s45
      %p51 = scmp.eq.s32.totalorder %s9, 0
      %p52 = por %p50, %p51
      %p53 = scmp.ne.s32.totalorder %s42, %s45
      %p54 = scmp.eq.s32.totalorder %s14, 5
      %p55 = por %p53, %p54
      %p56 = scmp.ne.s32.totalorder %s45, %s46
      %p57 = scmp.eq.s32.totalorder %s14, 0
      %p58 = por %p56, %p57
      %p59 = scmp.ne.s32.totalorder %s45, %s46
      %p60 = scmp.eq.s32.totalorder %s15, 5
      %p61 = por %p59, %p60
      %p63 = scmp.ne.s32.totalorder %s46, %s62
      %p64 = scmp.eq.s32.totalorder %s15, 0
      %p65 = por %p63, %p64
      %s66 = ssub.s32 %s18, %s27
      %s67 = ssub.s32 %s17, %s31
      %s68 = sor.u32 %s66, %s67
      %p69 = scmp.eq.s32.totalorder %s68, 0
      %s71 = sadd.s32 %s70, 1
      %s72 = scalar_select %p69, %s70, %s71
      %p75 = pneg %p69
      %p76 = scmp.eq.s32.totalorder %s9, 5
      %p77 = por %p75, %p76
      %p78 = scmp.ne.s32.totalorder %s70, %s73
      %p79 = scmp.eq.s32.totalorder %s9, 0
      %p80 = por %p78, %p79
      %p81 = scmp.ne.s32.totalorder %s70, %s73
      %p82 = scmp.eq.s32.totalorder %s14, 5
      %p83 = por %p81, %p82
      %p84 = scmp.ne.s32.totalorder %s73, %s74
      %p85 = scmp.eq.s32.totalorder %s14, 0
      %p86 = por %p84, %p85
      %p87 = scmp.ne.s32.totalorder %s73, %s74
      %p88 = scmp.eq.s32.totalorder %s15, 5
      %p89 = por %p87, %p88
      %p91 = scmp.ne.s32.totalorder %s74, %s90
      %p92 = scmp.eq.s32.totalorder %s15, 0
      %p93 = por %p91, %p92
      %s95 = sadd.s32 %s94, 1
      %p98 = scmp.eq.s32.totalorder %s9, 5
      %p99 = scmp.ne.s32.totalorder %s94, %s96
      %p100 = scmp.eq.s32.totalorder %s9, 0
      %p101 = por %p99, %p100
      %p102 = scmp.ne.s32.totalorder %s94, %s96
      %p103 = scmp.eq.s32.totalorder %s14, 5
      %p104 = por %p102, %p103
      %p105 = scmp.ne.s32.totalorder %s96, %s97
      %p106 = scmp.eq.s32.totalorder %s14, 0
      %p107 = por %p105, %p106
      %p108 = scmp.ne.s32.totalorder %s96, %s97
      %p109 = scmp.eq.s32.totalorder %s15, 5
      %p110 = por %p108, %p109
      %p112 = scmp.ne.s32.totalorder %s97, %s111
      %p113 = scmp.eq.s32.totalorder %s15, 0
      %p114 = por %p112, %p113
      %s115 = ssub.s32 %s16, %s35
      %p116 = scmp.eq.s32.totalorder %s115, 0
      %s118 = sadd.s32 %s117, 1
      %s119 = scalar_select %p116, %s117, %s118
      %p122 = pneg %p116
      %p123 = scmp.eq.s32.totalorder %s9, 5
      %p124 = por %p122, %p123
      %p125 = scmp.ne.s32.totalorder %s117, %s120
      %p126 = scmp.eq.s32.totalorder %s9, 0
      %p127 = por %p125, %p126
      %p128 = scmp.ne.s32.totalorder %s117, %s120
      %p129 = scmp.eq.s32.totalorder %s14, 5
      %p130 = por %p128, %p129
      %p131 = scmp.ne.s32.totalorder %s120, %s121
      %p132 = scmp.eq.s32.totalorder %s14, 0
      %p133 = por %p131, %p132
      %p134 = scmp.ne.s32.totalorder %s120, %s121
      %p135 = scmp.eq.s32.totalorder %s15, 5
      %p136 = por %p134, %p135
      %p138 = scmp.ne.s32.totalorder %s121, %s137
      %p139 = scmp.eq.s32.totalorder %s15, 0
      %p140 = por %p138, %p139
      %p141 = scmp.le.s32.totalorder 1, %s9
      %p142 = scmp.lt.s32.totalorder %s9, 7
      %p143 = pnand %p141, %p142
      %p144 = pneg %p143
      // Predicated region
      $region9: #{han_forward.11} parent=5 // pred_check
        _
      $region10: #{han_forward.11} parent=5 // pred_check_branch
        %146 = sbr.rel (%p143) target = $region12
      $region11: #{han_forward.11} parent=5 // pred_region
        %s147 = ssub.s32 %s9, 1
        // Predicated region
        $region13: #{han_forward.11} parent=11 // pred_check
          %p148 = pneg %p107
        $region14: #{han_forward.11} parent=11 // pred_check_branch
          %150 = sbr.rel (%p148) target = $region16
        $region15: #{han_forward.11} parent=11 // pred_region
          _
        $region16: #{han_forward.11} parent=11 // pred_fallthru
          _
      $region12: #{han_forward.11} parent=5 // pred_fallthru
        _
      %p151 = scmp.lt.s32.totalorder %s9, 6
      // Predicated region
      $region17: #{han_forward.11} parent=5 // pred_check
        %p152 = pneg %p151
      $region18: #{han_forward.11} parent=5 // pred_check_branch
        %154 = sbr.rel (%p152) target = $region20
      $region19: #{han_forward.11} parent=5 // pred_region
        // Predicated region
        $region21: #{han_forward.11} parent=19 // pred_check
          %p155 = pneg %p52
        $region22: #{han_forward.11} parent=19 // pred_check_branch
          %157 = sbr.rel (%p155) target = $region24
        $region23: #{han_forward.11} parent=19 // pred_region
          %s158 = smul.u32 16, %s16
          %s159 = smul.u32 2, %s18
          %p160 = scmp.lt.s32.totalorder %s17, 2
          %s161 = scalar_select %p160, %s17, 2
          %p162 = scmp.lt.s32.totalorder %s158, 31
          %s163 = scalar_select %p162, %s158, 31
          %p164 = scmp.lt.s32.totalorder %s159, 1
          %s165 = scalar_select %p164, %s159, 1
          %s166 = smul.addr %s163, 2
          %s167 = sadd.s32 %s165, %s166
          %s168 = smul.addr %s161, 64
          %s169 = sadd.s32 %s167, %s168
          %s170 = smul.addr %s169, 4
          %s171 = scalar_lea.vmem %s0, %s170
          %s172 = smul.u32 16, %s16
          %s173 = smul.u32 2, %s18
        $region24: #{han_forward.11} parent=19 // pred_fallthru
          _
        // Predicated region
        $region25: #{han_forward.11} parent=19 // pred_check
          %p174 = pneg %p80
        $region26: #{han_forward.11} parent=19 // pred_check_branch
          %176 = sbr.rel (%p174) target = $region28
        $region27: #{han_forward.11} parent=19 // pred_region
          %s177 = sand.u32 %s70, 1
          %s178 = sand.u32 %s70, 1
          %s179 = smul.addr %s178, 128
          %s180 = scalar_lea.vmem [#allocation3], %s179
          %s181 = smul.u32 32, %s18
          %s182 = smul.addr %s181, 3
          %s183 = sadd.s32 %s17, %s182
          %s184 = smul.addr %s183, 4
          %s185 = scalar_lea.vmem %s1, %s184
          // Predicated region
          $region29: #{han_forward.11} parent=27 // pred_check
            _
          $region30: #{han_forward.11} parent=27 // pred_check_branch
            %187 = sbr.rel (0) target = $region32
          $region31: #{han_forward.11} parent=27 // pred_region
            // Predicated region
            $region33: #{han_forward.11} parent=31 // pred_check
              _
            $region34: #{han_forward.11} parent=31 // pred_check_branch
              %189 = sbr.rel target = $region36
            $region35: #{han_forward.11} parent=31 // pred_region
              // Predicated region
              $region48: #{han_forward.11} parent=35 // pred_check
                _
              $region49: #{han_forward.11} parent=35 // pred_check_branch
                %266 = sbr.rel (0) target = $region51
              $region50: #{han_forward.11} parent=35 // pred_region
                loop: start=0, step=1, limit=1
                $region52: #{han_forward.11} parent=50 // loop_pre_header
                  _
                $region53: #{han_forward.11} parent=50 // loop_header
                  %s268 = sphi 0, %s272
                  %p269 = scmp.ge.s32.totalorder %s268, 1
                  %s273 = sphi %s185, %s185
                  %s274 = sphi %s180, %s180
                $region54: #{han_forward.11} parent=50 // loop_header_branch
                  %271 = sbr.rel (%p269) target = $region58
                $region55: #{han_forward.11} parent=50 // loop_body
                  _
                $region56: #{han_forward.11} parent=50 // loop_footer
                  %s272 = sadd.s32 1, %s268
                $region57: #{han_forward.11} parent=50 // loop_footer_branch
                  %267 = sbr.rel target = $region53
                $region58: #{han_forward.11} parent=50 // loop_exit
                  _
                loop: start=0, step=1, limit=1
                $region59: #{han_forward.11} parent=50 // loop_pre_header
                  _
                $region60: #{han_forward.11} parent=50 // loop_header
                  %s277 = sphi 0, %s281
                  %p278 = scmp.ge.s32.totalorder %s277, 1
                  %s282 = sphi %s185, %s185
                  %s283 = sphi %s180, %s180
                $region61: #{han_forward.11} parent=50 // loop_header_branch
                  %280 = sbr.rel (%p278) target = $region65
                $region62: #{han_forward.11} parent=50 // loop_body
                  %v284 = vld [vmem:[%s282] sm:$0xf]
                  %285 = vst [vmem:[%s283] sm:$0xf] %v284
                  %v286 = vld [vmem:[%s282 + $0xc] sm:$0xf]
                  %287 = vst [vmem:[%s283 + $0x4] sm:$0xf] %v286
                  %v288 = vld [vmem:[%s282 + $0x18] sm:$0xf]
                  %289 = vst [vmem:[%s283 + $0x8] sm:$0xf] %v288
                  %v290 = vld [vmem:[%s282 + $0x24] sm:$0xf]
                  %291 = vst [vmem:[%s283 + $0xc] sm:$0xf] %v290
                  %v292 = vld [vmem:[%s282 + $0x30] sm:$0xf]
                  %293 = vst [vmem:[%s283 + $0x10] sm:$0xf] %v292
                  %v294 = vld [vmem:[%s282 + $0x3c] sm:$0xf]
                  %295 = vst [vmem:[%s283 + $0x14] sm:$0xf] %v294
                  %v296 = vld [vmem:[%s282 + $0x48] sm:$0xf]
                  %297 = vst [vmem:[%s283 + $0x18] sm:$0xf] %v296
                  %v298 = vld [vmem:[%s282 + $0x54] sm:$0xf]
                  %299 = vst [vmem:[%s283 + $0x1c] sm:$0xf] %v298
                  %v300 = vld [vmem:[%s282 + $0x60] sm:$0xf]
                  %301 = vst [vmem:[%s283 + $0x20] sm:$0xf] %v300
                  %v302 = vld [vmem:[%s282 + $0x6c] sm:$0xf]
                  %303 = vst [vmem:[%s283 + $0x24] sm:$0xf] %v302
                  %v304 = vld [vmem:[%s282 + $0x78] sm:$0xf]
                  %305 = vst [vmem:[%s283 + $0x28] sm:$0xf] %v304
                  %v306 = vld [vmem:[%s282 + $0x84] sm:$0xf]
                  %307 = vst [vmem:[%s283 + $0x2c] sm:$0xf] %v306
                  %v308 = vld [vmem:[%s282 + $0x90] sm:$0xf]
                  %309 = vst [vmem:[%s283 + $0x30] sm:$0xf] %v308
                  %v310 = vld [vmem:[%s282 + $0x9c] sm:$0xf]
                  %311 = vst [vmem:[%s283 + $0x34] sm:$0xf] %v310
                  %v312 = vld [vmem:[%s282 + $0xa8] sm:$0xf]
                  %313 = vst [vmem:[%s283 + $0x38] sm:$0xf] %v312
                  %v314 = vld [vmem:[%s282 + $0xb4] sm:$0xf]
                  %315 = vst [vmem:[%s283 + $0x3c] sm:$0xf] %v314
                  %v316 = vld [vmem:[%s282 + $0xc0] sm:$0xf]
                  %317 = vst [vmem:[%s283 + $0x40] sm:$0xf] %v316
                  %v318 = vld [vmem:[%s282 + $0xcc] sm:$0xf]
                  %319 = vst [vmem:[%s283 + $0x44] sm:$0xf] %v318
                  %v320 = vld [vmem:[%s282 + $0xd8] sm:$0xf]
                  %321 = vst [vmem:[%s283 + $0x48] sm:$0xf] %v320
                  %v322 = vld [vmem:[%s282 + $0xe4] sm:$0xf]
                  %323 = vst [vmem:[%s283 + $0x4c] sm:$0xf] %v322
                  %v324 = vld [vmem:[%s282 + $0xf0] sm:$0xf]
                  %325 = vst [vmem:[%s283 + $0x50] sm:$0xf] %v324
                  %v326 = vld [vmem:[%s282 + $0xfc] sm:$0xf]
                  %327 = vst [vmem:[%s283 + $0x54] sm:$0xf] %v326
                  %v328 = vld [vmem:[%s282 + $0x108] sm:$0xf]
                  %329 = vst [vmem:[%s283 + $0x58] sm:$0xf] %v328
                  %v330 = vld [vmem:[%s282 + $0x114] sm:$0xf]
                  %331 = vst [vmem:[%s283 + $0x5c] sm:$0xf] %v330
                  %v332 = vld [vmem:[%s282 + $0x120] sm:$0xf]
                  %333 = vst [vmem:[%s283 + $0x60] sm:$0xf] %v332
                  %v334 = vld [vmem:[%s282 + $0x12c] sm:$0xf]
                  %335 = vst [vmem:[%s283 + $0x64] sm:$0xf] %v334
                  %v336 = vld [vmem:[%s282 + $0x138] sm:$0xf]
                  %337 = vst [vmem:[%s283 + $0x68] sm:$0xf] %v336
                  %v338 = vld [vmem:[%s282 + $0x144] sm:$0xf]
                  %339 = vst [vmem:[%s283 + $0x6c] sm:$0xf] %v338
                  %v340 = vld [vmem:[%s282 + $0x150] sm:$0xf]
                  %341 = vst [vmem:[%s283 + $0x70] sm:$0xf] %v340
                  %v342 = vld [vmem:[%s282 + $0x15c] sm:$0xf]
                  %343 = vst [vmem:[%s283 + $0x74] sm:$0xf] %v342
                  %v344 = vld [vmem:[%s282 + $0x168] sm:$0xf]
                  %345 = vst [vmem:[%s283 + $0x78] sm:$0xf] %v344
                  %v346 = vld [vmem:[%s282 + $0x174] sm:$0xf]
                  %347 = vst [vmem:[%s283 + $0x7c] sm:$0xf] %v346
                $region63: #{han_forward.11} parent=50 // loop_footer
                  %s281 = sadd.s32 1, %s277
                $region64: #{han_forward.11} parent=50 // loop_footer_branch
                  %276 = sbr.rel target = $region60
                $region65: #{han_forward.11} parent=50 // loop_exit
                  _
              $region51: #{han_forward.11} parent=35 // pred_fallthru
                _
            $region36: #{han_forward.11} parent=31 // pred_fallthru
              _
            // Predicated region
            $region37: #{han_forward.11} parent=31 // pred_check
              _
            $region38: #{han_forward.11} parent=31 // pred_check_branch
              %191 = sbr.rel (0) target = $region40
            $region39: #{han_forward.11} parent=31 // pred_region
              loop: start=0, step=1, limit=1
              $region41: #{han_forward.11} parent=39 // loop_pre_header
                _
              $region42: #{han_forward.11} parent=39 // loop_header
                %s194 = sphi 0, %s198
                %p195 = scmp.ge.s32.totalorder %s194, 1
                %s199 = sphi %s185, %s185
                %s200 = sphi %s180, %s180
              $region43: #{han_forward.11} parent=39 // loop_header_branch
                %197 = sbr.rel (%p195) target = $region47
              $region44: #{han_forward.11} parent=39 // loop_body
                %v201 = vld [vmem:[%s199] sm:$0xf]
                %202 = vst [vmem:[%s200] sm:$0xf] %v201
                %v203 = vld [vmem:[%s199 + $0xc] sm:$0xf]
                %204 = vst [vmem:[%s200 + $0x4] sm:$0xf] %v203
                %v205 = vld [vmem:[%s199 + $0x18] sm:$0xf]
                %206 = vst [vmem:[%s200 + $0x8] sm:$0xf] %v205
                %v207 = vld [vmem:[%s199 + $0x24] sm:$0xf]
                %208 = vst [vmem:[%s200 + $0xc] sm:$0xf] %v207
                %v209 = vld [vmem:[%s199 + $0x30] sm:$0xf]
                %210 = vst [vmem:[%s200 + $0x10] sm:$0xf] %v209
                %v211 = vld [vmem:[%s199 + $0x3c] sm:$0xf]
                %212 = vst [vmem:[%s200 + $0x14] sm:$0xf] %v211
                %v213 = vld [vmem:[%s199 + $0x48] sm:$0xf]
                %214 = vst [vmem:[%s200 + $0x18] sm:$0xf] %v213
                %v215 = vld [vmem:[%s199 + $0x54] sm:$0xf]
                %216 = vst [vmem:[%s200 + $0x1c] sm:$0xf] %v215
                %v217 = vld [vmem:[%s199 + $0x60] sm:$0xf]
                %218 = vst [vmem:[%s200 + $0x20] sm:$0xf] %v217
                %v219 = vld [vmem:[%s199 + $0x6c] sm:$0xf]
                %220 = vst [vmem:[%s200 + $0x24] sm:$0xf] %v219
                %v221 = vld [vmem:[%s199 + $0x78] sm:$0xf]
                %222 = vst [vmem:[%s200 + $0x28] sm:$0xf] %v221
                %v223 = vld [vmem:[%s199 + $0x84] sm:$0xf]
                %224 = vst [vmem:[%s200 + $0x2c] sm:$0xf] %v223
                %v225 = vld [vmem:[%s199 + $0x90] sm:$0xf]
                %226 = vst [vmem:[%s200 + $0x30] sm:$0xf] %v225
                %v227 = vld [vmem:[%s199 + $0x9c] sm:$0xf]
                %228 = vst [vmem:[%s200 + $0x34] sm:$0xf] %v227
                %v229 = vld [vmem:[%s199 + $0xa8] sm:$0xf]
                %230 = vst [vmem:[%s200 + $0x38] sm:$0xf] %v229
                %v231 = vld [vmem:[%s199 + $0xb4] sm:$0xf]
                %232 = vst [vmem:[%s200 + $0x3c] sm:$0xf] %v231
                %v233 = vld [vmem:[%s199 + $0xc0] sm:$0xf]
                %234 = vst [vmem:[%s200 + $0x40] sm:$0xf] %v233
                %v235 = vld [vmem:[%s199 + $0xcc] sm:$0xf]
                %236 = vst [vmem:[%s200 + $0x44] sm:$0xf] %v235
                %v237 = vld [vmem:[%s199 + $0xd8] sm:$0xf]
                %238 = vst [vmem:[%s200 + $0x48] sm:$0xf] %v237
                %v239 = vld [vmem:[%s199 + $0xe4] sm:$0xf]
                %240 = vst [vmem:[%s200 + $0x4c] sm:$0xf] %v239
                %v241 = vld [vmem:[%s199 + $0xf0] sm:$0xf]
                %242 = vst [vmem:[%s200 + $0x50] sm:$0xf] %v241
                %v243 = vld [vmem:[%s199 + $0xfc] sm:$0xf]
                %244 = vst [vmem:[%s200 + $0x54] sm:$0xf] %v243
                %v245 = vld [vmem:[%s199 + $0x108] sm:$0xf]
                %246 = vst [vmem:[%s200 + $0x58] sm:$0xf] %v245
                %v247 = vld [vmem:[%s199 + $0x114] sm:$0xf]
                %248 = vst [vmem:[%s200 + $0x5c] sm:$0xf] %v247
                %v249 = vld [vmem:[%s199 + $0x120] sm:$0xf]
                %250 = vst [vmem:[%s200 + $0x60] sm:$0xf] %v249
                %v251 = vld [vmem:[%s199 + $0x12c] sm:$0xf]
                %252 = vst [vmem:[%s200 + $0x64] sm:$0xf] %v251
                %v253 = vld [vmem:[%s199 + $0x138] sm:$0xf]
                %254 = vst [vmem:[%s200 + $0x68] sm:$0xf] %v253
                %v255 = vld [vmem:[%s199 + $0x144] sm:$0xf]
                %256 = vst [vmem:[%s200 + $0x6c] sm:$0xf] %v255
                %v257 = vld [vmem:[%s199 + $0x150] sm:$0xf]
                %258 = vst [vmem:[%s200 + $0x70] sm:$0xf] %v257
                %v259 = vld [vmem:[%s199 + $0x15c] sm:$0xf]
                %260 = vst [vmem:[%s200 + $0x74] sm:$0xf] %v259
                %v261 = vld [vmem:[%s199 + $0x168] sm:$0xf]
                %262 = vst [vmem:[%s200 + $0x78] sm:$0xf] %v261
                %v263 = vld [vmem:[%s199 + $0x174] sm:$0xf]
                %264 = vst [vmem:[%s200 + $0x7c] sm:$0xf] %v263
              $region45: #{han_forward.11} parent=39 // loop_footer
                %s198 = sadd.s32 1, %s194
              $region46: #{han_forward.11} parent=39 // loop_footer_branch
                %193 = sbr.rel target = $region42
              $region47: #{han_forward.11} parent=39 // loop_exit
                _
            $region40: #{han_forward.11} parent=31 // pred_fallthru
              _
          $region32: #{han_forward.11} parent=27 // pred_fallthru
            _
          %348 = vnop
        $region28: #{han_forward.11} parent=19 // pred_fallthru
          _
      $region20: #{han_forward.11} parent=5 // pred_fallthru
        _
      %p349 = scmp.le.s32.totalorder 1, %s9
      %p350 = scmp.lt.s32.totalorder %s9, 7
      %p351 = pnand %p349, %p350
      %p352 = pneg %p351
      // Predicated region
      $region66: #{han_forward.11} parent=5 // pred_check
        _
      $region67: #{han_forward.11} parent=5 // pred_check_branch
        %354 = sbr.rel (%p351) target = $region69
      $region68: #{han_forward.11} parent=5 // pred_region
        %s355 = ssub.s32 %s9, 1
        %s356 = sand.u32 %s73, 1
        %s357 = sand.u32 %s73, 1
        %s358 = smul.addr %s357, 128
        %s359 = scalar_lea.vmem [#allocation3], %s358
        // Predicated region
        $region70: #{han_forward.11} parent=68 // pred_check
          %p360 = pneg %p86
        $region71: #{han_forward.11} parent=68 // pred_check_branch
          %362 = sbr.rel (%p360) target = $region73
        $region72: #{han_forward.11} parent=68 // pred_region
          _
        $region73: #{han_forward.11} parent=68 // pred_fallthru
          _
        %s363 = smul.u32 16, %s19
        %s364 = smul.u32 2, %s21
        %p365 = scmp.lt.s32.totalorder %s20, 2
        %s366 = scalar_select %p365, %s20, 2
        %p367 = scmp.lt.s32.totalorder %s363, 31
        %s368 = scalar_select %p367, %s363, 31
        %p369 = scmp.lt.s32.totalorder %s364, 1
        %s370 = scalar_select %p369, %s364, 1
        %s371 = smul.addr %s368, 2
        %s372 = sadd.s32 %s370, %s371
        %s373 = smul.addr %s366, 64
        %s374 = sadd.s32 %s372, %s373
        %s375 = smul.addr %s374, 4
        %s376 = scalar_lea.vmem %s0, %s375
        %p377 = pneg %p58
        %p378 = pneg %p55
        %s379 = sand.u32 %s73, 1
        %s380 = sand.u32 %s73, 1
        %s381 = smul.addr %s380, 128
        %s382 = scalar_lea.vmem [#allocation3], %s381
        %p383 = pneg %p86
        %p384 = pneg %p83
        %p385 = pneg %p107
        %p386 = pneg %p104
        %p387 = pneg %p133
        %p388 = pneg %p130
        %s389 = smul.u32 16, %s19
        %p390 = scmp.lt.s32.totalorder %s389, 31
        %s391 = scalar_select %p390, %s389, 31
        %s392 = smul.addr %s391, 8
        %s393 = scalar_lea.vmem %s3, %s392
        %s394 = smul.u32 16, %s19
        %s395 = smul.u32 2, %s21
        %p396 = scmp.lt.s32.totalorder %s20, 2
        %s397 = scalar_select %p396, %s20, 2
        %p398 = scmp.lt.s32.totalorder %s394, 31
        %s399 = scalar_select %p398, %s394, 31
        %p400 = scmp.lt.s32.totalorder %s395, 1
        %s401 = scalar_select %p400, %s395, 1
        %s402 = smul.addr %s399, 2
        %s403 = sadd.s32 %s401, %s402
        %s404 = smul.addr %s397, 64
        %s405 = sadd.s32 %s403, %s404
        %s406 = smul.addr %s405, 4
        %s407 = scalar_lea.vmem %s0, %s406
        %s408 = smul.u32 16, %s19
        %s409 = smul.u32 2, %s21
        %s410 = smul.u32 32, %s21
        %s411 = smul.u32 16, %s19
        %p412 = scmp.lt.s32.totalorder %s411, 31
        %s413 = scalar_select %p412, %s411, 31
        %s414 = smul.addr %s413, 8
        %s415 = scalar_lea.vmem %s3, %s414
        %s416 = smul.u32 16, %s19
        %p418 = scmp.eq.s32.totalorder %s20, 0
        %p419 = scmp.eq.s32.totalorder %s21, 0
        %p420 = pnand %p418, %p419
        %p421 = pneg %p420
        // Predicated region
        $region74: #{han_forward.11} parent=68 // pred_check
          _
        $region75: #{han_forward.11} parent=68 // pred_check_branch
          %423 = sbr.rel (%p420) target = $region77
        $region76: #{han_forward.11} parent=68 // pred_region
          %424 = vst [vmem:[#allocation2] sm:$0xff] 0.0
          %425 = vst [vmem:[#allocation2 + $0x8] sm:$0xff] 0.0
          %426 = vst [vmem:[#allocation2 + $0x10] sm:$0xff] 0.0
          %427 = vst [vmem:[#allocation2 + $0x18] sm:$0xff] 0.0
          %428 = vst [vmem:[#allocation2 + $0x20] sm:$0xff] 0.0
          %429 = vst [vmem:[#allocation2 + $0x28] sm:$0xff] 0.0
          %430 = vst [vmem:[#allocation2 + $0x30] sm:$0xff] 0.0
          %431 = vst [vmem:[#allocation2 + $0x38] sm:$0xff] 0.0
          %432 = vst [vmem:[#allocation2 + $0x40] sm:$0xff] 0.0
          %433 = vst [vmem:[#allocation2 + $0x48] sm:$0xff] 0.0
          %434 = vst [vmem:[#allocation2 + $0x50] sm:$0xff] 0.0
          %435 = vst [vmem:[#allocation2 + $0x58] sm:$0xff] 0.0
          %436 = vst [vmem:[#allocation2 + $0x60] sm:$0xff] 0.0
          %437 = vst [vmem:[#allocation2 + $0x68] sm:$0xff] 0.0
          %438 = vst [vmem:[#allocation2 + $0x70] sm:$0xff] 0.0
          %439 = vst [vmem:[#allocation2 + $0x78] sm:$0xff] 0.0
        $region77: #{han_forward.11} parent=68 // pred_fallthru
          _
        %v440 = vld [vmem:[#allocation2] sm:$0xff]
        %v441 = vld [vmem:[#allocation2 + $0x8] sm:$0xff]
        %v442 = vld [vmem:[#allocation2 + $0x10] sm:$0xff]
        %v443 = vld [vmem:[#allocation2 + $0x18] sm:$0xff]
        %v444 = vld [vmem:[#allocation2 + $0x20] sm:$0xff]
        %v445 = vld [vmem:[#allocation2 + $0x28] sm:$0xff]
        %v446 = vld [vmem:[#allocation2 + $0x30] sm:$0xff]
        %v447 = vld [vmem:[#allocation2 + $0x38] sm:$0xff]
        %v448 = vld [vmem:[#allocation2 + $0x40] sm:$0xff]
        %v449 = vld [vmem:[#allocation2 + $0x48] sm:$0xff]
        %v450 = vld [vmem:[#allocation2 + $0x50] sm:$0xff]
        %v451 = vld [vmem:[#allocation2 + $0x58] sm:$0xff]
        %v452 = vld [vmem:[#allocation2 + $0x60] sm:$0xff]
        %v453 = vld [vmem:[#allocation2 + $0x68] sm:$0xff]
        %v454 = vld [vmem:[#allocation2 + $0x70] sm:$0xff]
        %v455 = vld [vmem:[#allocation2 + $0x78] sm:$0xff]
        %v456 = vld [vmem:[%s407] sm:$0xff]
        %v457 = vld [vmem:[%s407 + $0x8] sm:$0xff]
        %v458 = vld [vmem:[%s407 + $0x10] sm:$0xff]
        %v459 = vld [vmem:[%s407 + $0x18] sm:$0xff]
        %v460 = vld [vmem:[%s407 + $0x20] sm:$0xff]
        %v461 = vld [vmem:[%s407 + $0x28] sm:$0xff]
        %v462 = vld [vmem:[%s407 + $0x30] sm:$0xff]
        %v463 = vld [vmem:[%s407 + $0x38] sm:$0xff]
        %v464 = vld [vmem:[%s407 + $0x40] sm:$0xff]
        %v465 = vld [vmem:[%s407 + $0x48] sm:$0xff]
        %v466 = vld [vmem:[%s407 + $0x50] sm:$0xff]
        %v467 = vld [vmem:[%s407 + $0x58] sm:$0xff]
        %v468 = vld [vmem:[%s407 + $0x60] sm:$0xff]
        %v469 = vld [vmem:[%s407 + $0x68] sm:$0xff]
        %v470 = vld [vmem:[%s407 + $0x70] sm:$0xff]
        %v471 = vld [vmem:[%s407 + $0x78] sm:$0xff]
        %v472 = vld [vmem:[%s359] sm:$0xf]
        %v473 = vld [vmem:[%s359 + $0x4] sm:$0xf]
        %v474 = vld [vmem:[%s359 + $0x8] sm:$0xf]
        %v475 = vld [vmem:[%s359 + $0xc] sm:$0xf]
        %v476 = vld [vmem:[%s359 + $0x10] sm:$0xf]
        %v477 = vld [vmem:[%s359 + $0x14] sm:$0xf]
        %v478 = vld [vmem:[%s359 + $0x18] sm:$0xf]
        %v479 = vld [vmem:[%s359 + $0x1c] sm:$0xf]
        %v480 = vld [vmem:[%s359 + $0x20] sm:$0xf]
        %v481 = vld [vmem:[%s359 + $0x24] sm:$0xf]
        %v482 = vld [vmem:[%s359 + $0x28] sm:$0xf]
        %v483 = vld [vmem:[%s359 + $0x2c] sm:$0xf]
        %v484 = vld [vmem:[%s359 + $0x30] sm:$0xf]
        %v485 = vld [vmem:[%s359 + $0x34] sm:$0xf]
        %v486 = vld [vmem:[%s359 + $0x38] sm:$0xf]
        %v487 = vld [vmem:[%s359 + $0x3c] sm:$0xf]
        %v488 = vld [vmem:[%s359 + $0x40] sm:$0xf]
        %v489 = vld [vmem:[%s359 + $0x44] sm:$0xf]
        %v490 = vld [vmem:[%s359 + $0x48] sm:$0xf]
        %v491 = vld [vmem:[%s359 + $0x4c] sm:$0xf]
        %v492 = vld [vmem:[%s359 + $0x50] sm:$0xf]
        %v493 = vld [vmem:[%s359 + $0x54] sm:$0xf]
        %v494 = vld [vmem:[%s359 + $0x58] sm:$0xf]
        %v495 = vld [vmem:[%s359 + $0x5c] sm:$0xf]
        %v496 = vld [vmem:[%s359 + $0x60] sm:$0xf]
        %v497 = vld [vmem:[%s359 + $0x64] sm:$0xf]
        %v498 = vld [vmem:[%s359 + $0x68] sm:$0xf]
        %v499 = vld [vmem:[%s359 + $0x6c] sm:$0xf]
        %v500 = vld [vmem:[%s359 + $0x70] sm:$0xf]
        %v501 = vld [vmem:[%s359 + $0x74] sm:$0xf]
        %v502 = vld [vmem:[%s359 + $0x78] sm:$0xf]
        %v503 = vld [vmem:[%s359 + $0x7c] sm:$0xf]
        %v520 = vunpack.c.l.b16 %v456
        %v521 = vunpack.c.h.b16 %v456
        %v522 = vunpack.c.l.b16 %v457
        %v523 = vunpack.c.h.b16 %v457
        %v524 = vunpack.c.l.b16 %v458
        %v525 = vunpack.c.h.b16 %v458
        %v526 = vunpack.c.l.b16 %v459
        %v527 = vunpack.c.h.b16 %v459
        %v528 = vunpack.c.l.b16 %v460
        %v529 = vunpack.c.h.b16 %v460
        %v530 = vunpack.c.l.b16 %v461
        %v531 = vunpack.c.h.b16 %v461
        %v532 = vunpack.c.l.b16 %v462
        %v533 = vunpack.c.h.b16 %v462
        %v534 = vunpack.c.l.b16 %v463
        %v535 = vunpack.c.h.b16 %v463
        %v536 = vunpack.c.l.b16 %v464
        %v537 = vunpack.c.h.b16 %v464
        %v538 = vunpack.c.l.b16 %v465
        %v539 = vunpack.c.h.b16 %v465
        %v540 = vunpack.c.l.b16 %v466
        %v541 = vunpack.c.h.b16 %v466
        %v542 = vunpack.c.l.b16 %v467
        %v543 = vunpack.c.h.b16 %v467
        %v544 = vunpack.c.l.b16 %v468
        %v545 = vunpack.c.h.b16 %v468
        %v546 = vunpack.c.l.b16 %v469
        %v547 = vunpack.c.h.b16 %v469
        %v548 = vunpack.c.l.b16 %v470
        %v549 = vunpack.c.h.b16 %v470
        %v550 = vunpack.c.l.b16 %v471
        %v551 = vunpack.c.h.b16 %v471
        %v552 = vpack.c.b16 %v522, %v520
        %v553 = vpack.c.b16 %v523, %v521
        %v554 = vpack.c.b16 %v526, %v524
        %v555 = vpack.c.b16 %v527, %v525
        %v556 = vpack.c.b16 %v530, %v528
        %v557 = vpack.c.b16 %v531, %v529
        %v558 = vpack.c.b16 %v534, %v532
        %v559 = vpack.c.b16 %v535, %v533
        %v560 = vpack.c.b16 %v538, %v536
        %v561 = vpack.c.b16 %v539, %v537
        %v562 = vpack.c.b16 %v542, %v540
        %v563 = vpack.c.b16 %v543, %v541
        %v564 = vpack.c.b16 %v546, %v544
        %v565 = vpack.c.b16 %v547, %v545
        %v566 = vpack.c.b16 %v550, %v548
        %v567 = vpack.c.b16 %v551, %v549
        %v616 = vunpack.c.l.b16 %v472
        %v617 = vunpack.c.l.b16 %v473
        %v618 = vunpack.c.l.b16 %v474
        %v619 = vunpack.c.l.b16 %v475
        %v620 = vunpack.c.l.b16 %v476
        %v621 = vunpack.c.l.b16 %v477
        %v622 = vunpack.c.l.b16 %v478
        %v623 = vunpack.c.l.b16 %v479
        %v624 = vunpack.c.l.b16 %v480
        %v625 = vunpack.c.l.b16 %v481
        %v626 = vunpack.c.l.b16 %v482
        %v627 = vunpack.c.l.b16 %v483
        %v628 = vunpack.c.l.b16 %v484
        %v629 = vunpack.c.l.b16 %v485
        %v630 = vunpack.c.l.b16 %v486
        %v631 = vunpack.c.l.b16 %v487
        %v632 = vunpack.c.l.b16 %v488
        %v633 = vunpack.c.l.b16 %v489
        %v634 = vunpack.c.l.b16 %v490
        %v635 = vunpack.c.l.b16 %v491
        %v636 = vunpack.c.l.b16 %v492
        %v637 = vunpack.c.l.b16 %v493
        %v638 = vunpack.c.l.b16 %v494
        %v639 = vunpack.c.l.b16 %v495
        %v640 = vunpack.c.l.b16 %v496
        %v641 = vunpack.c.l.b16 %v497
        %v642 = vunpack.c.l.b16 %v498
        %v643 = vunpack.c.l.b16 %v499
        %v644 = vunpack.c.l.b16 %v500
        %v645 = vunpack.c.l.b16 %v501
        %v646 = vunpack.c.l.b16 %v502
        %v647 = vunpack.c.l.b16 %v503
        %v648 = vpack.c.b16 %v617, %v616
        %v649 = vpack.c.b16 %v619, %v618
        %v650 = vpack.c.b16 %v621, %v620
        %v651 = vpack.c.b16 %v623, %v622
        %v652 = vpack.c.b16 %v625, %v624
        %v653 = vpack.c.b16 %v627, %v626
        %v654 = vpack.c.b16 %v629, %v628
        %v655 = vpack.c.b16 %v631, %v630
        %v656 = vpack.c.b16 %v633, %v632
        %v657 = vpack.c.b16 %v635, %v634
        %v658 = vpack.c.b16 %v637, %v636
        %v659 = vpack.c.b16 %v639, %v638
        %v660 = vpack.c.b16 %v641, %v640
        %v661 = vpack.c.b16 %v643, %v642
        %v662 = vpack.c.b16 %v645, %v644
        %v663 = vpack.c.b16 %v647, %v646
        %680 = vmatprep.subr.bf16.mxu0 0
        %681 = vmatpush1.bf16.msra.mxu0 %v648
        %682 = vmatprep.subr.bf16.mxu0 0
        %683 = vmatpush1.bf16.msra.mxu0 %v649
        %684 = vmatprep.subr.bf16.mxu0 0
        %685 = vmatpush1.bf16.msra.mxu0 %v650
        %686 = vmatprep.subr.bf16.mxu0 0
        %687 = vmatpush1.bf16.msra.mxu0 %v651
        %688 = vmatprep.subr.bf16.mxu0 0
        %689 = vmatpush1.bf16.msra.mxu0 %v652
        %690 = vmatprep.subr.bf16.mxu0 0
        %691 = vmatpush1.bf16.msra.mxu0 %v653
        %692 = vmatprep.subr.bf16.mxu0 0
        %693 = vmatpush1.bf16.msra.mxu0 %v654
        %694 = vmatprep.subr.bf16.mxu0 0
        %695 = vmatpush1.bf16.msra.mxu0 %v655
        %696 = vmatprep.subr.bf16.mxu0 0
        %697 = vmatpush1.bf16.msra.mxu0 %v656
        %698 = vmatprep.subr.bf16.mxu0 0
        %699 = vmatpush1.bf16.msra.mxu0 %v657
        %700 = vmatprep.subr.bf16.mxu0 0
        %701 = vmatpush1.bf16.msra.mxu0 %v658
        %702 = vmatprep.subr.bf16.mxu0 0
        %703 = vmatpush1.bf16.msra.mxu0 %v659
        %704 = vmatprep.subr.bf16.mxu0 0
        %705 = vmatpush1.bf16.msra.mxu0 %v660
        %706 = vmatprep.subr.bf16.mxu0 0
        %707 = vmatpush1.bf16.msra.mxu0 %v661
        %708 = vmatprep.subr.bf16.mxu0 0
        %709 = vmatpush1.bf16.msra.mxu0 %v662
        %710 = vmatprep.subr.bf16.mxu0 0
        %711 = vmatpush1.bf16.msra.mxu0 %v663
        %712 = vmatprep.mubr.bf16.mxu0 %v553
        %713 = vmatmul.mubr.bf16.gmra.mrb[0].mxu0 %v552
        %v714 = vpop.f32.mrb[0].mxu0
        %v715 = vadd.f32 0.0, %v714
        %v716 = vpop.f32.mrb[0].mxu0
        %v717 = vpop.f32.mrb[0].mxu0
        %v718 = vadd.f32 0.0, %v717
        %v719 = vpop.f32.mrb[0].mxu0
        %720 = vmatprep.mubr.bf16.mxu0 %v555
        %721 = vmatmul.mubr.bf16.gmra.mrb[0].mxu0 %v554
        %v722 = vpop.f32.mrb[0].mxu0
        %v723 = vadd.f32 0.0, %v722
        %v724 = vpop.f32.mrb[0].mxu0
        %v725 = vpop.f32.mrb[0].mxu0
        %v726 = vadd.f32 0.0, %v725
        %v727 = vpop.f32.mrb[0].mxu0
        %728 = vmatprep.mubr.bf16.mxu0 %v557
        %729 = vmatmul.mubr.bf16.gmra.mrb[0].mxu0 %v556
        %v730 = vpop.f32.mrb[0].mxu0
        %v731 = vadd.f32 0.0, %v730
        %v732 = vpop.f32.mrb[0].mxu0
        %v733 = vpop.f32.mrb[0].mxu0
        %v734 = vadd.f32 0.0, %v733
        %v735 = vpop.f32.mrb[0].mxu0
        %736 = vmatprep.mubr.bf16.mxu0 %v559
        %737 = vmatmul.mubr.bf16.gmra.mrb[0].mxu0 %v558
        %v738 = vpop.f32.mrb[0].mxu0
        %v739 = vadd.f32 0.0, %v738
        %v740 = vpop.f32.mrb[0].mxu0
        %v741 = vpop.f32.mrb[0].mxu0
        %v742 = vadd.f32 0.0, %v741
        %v743 = vpop.f32.mrb[0].mxu0
        %744 = vmatprep.mubr.bf16.mxu0 %v561
        %745 = vmatmul.mubr.bf16.gmra.mrb[0].mxu0 %v560
        %v746 = vpop.f32.mrb[0].mxu0
        %v747 = vadd.f32 0.0, %v746
        %v748 = vpop.f32.mrb[0].mxu0
        %v749 = vpop.f32.mrb[0].mxu0
        %v750 = vadd.f32 0.0, %v749
        %v751 = vpop.f32.mrb[0].mxu0
        %752 = vmatprep.mubr.bf16.mxu0 %v563
        %753 = vmatmul.mubr.bf16.gmra.mrb[0].mxu0 %v562
        %v754 = vpop.f32.mrb[0].mxu0
        %v755 = vadd.f32 0.0, %v754
        %v756 = vpop.f32.mrb[0].mxu0
        %v757 = vpop.f32.mrb[0].mxu0
        %v758 = vadd.f32 0.0, %v757
        %v759 = vpop.f32.mrb[0].mxu0
        %760 = vmatprep.mubr.bf16.mxu0 %v565
        %761 = vmatmul.mubr.bf16.gmra.mrb[0].mxu0 %v564
        %v762 = vpop.f32.mrb[0].mxu0
        %v763 = vadd.f32 0.0, %v762
        %v764 = vpop.f32.mrb[0].mxu0
        %v765 = vpop.f32.mrb[0].mxu0
        %v766 = vadd.f32 0.0, %v765
        %v767 = vpop.f32.mrb[0].mxu0
        %768 = vmatprep.mubr.bf16.mxu0 %v567
        %769 = vmatmul.mubr.bf16.gmra.mrb[0].mxu0 %v566
        %v770 = vpop.f32.mrb[0].mxu0
        %v771 = vadd.f32 0.0, %v770
        %v772 = vpop.f32.mrb[0].mxu0
        %v773 = vpop.f32.mrb[0].mxu0
        %v774 = vadd.f32 0.0, %v773
        %v775 = vpop.f32.mrb[0].mxu0
        %776 = vdwg.mxu0
        %v777 = vadd.f32 %v440, %v715
        %v778 = vadd.f32 %v441, %v718
        %v779 = vadd.f32 %v442, %v723
        %v780 = vadd.f32 %v443, %v726
        %v781 = vadd.f32 %v444, %v731
        %v782 = vadd.f32 %v445, %v734
        %v783 = vadd.f32 %v446, %v739
        %v784 = vadd.f32 %v447, %v742
        %v785 = vadd.f32 %v448, %v747
        %v786 = vadd.f32 %v449, %v750
        %v787 = vadd.f32 %v450, %v755
        %v788 = vadd.f32 %v451, %v758
        %v789 = vadd.f32 %v452, %v763
        %v790 = vadd.f32 %v453, %v766
        %v791 = vadd.f32 %v454, %v771
        %v792 = vadd.f32 %v455, %v774
        %793 = vst [vmem:[#allocation2] sm:$0xff] %v777
        %794 = vst [vmem:[#allocation2 + $0x8] sm:$0xff] %v778
        %795 = vst [vmem:[#allocation2 + $0x10] sm:$0xff] %v779
        %796 = vst [vmem:[#allocation2 + $0x18] sm:$0xff] %v780
        %797 = vst [vmem:[#allocation2 + $0x20] sm:$0xff] %v781
        %798 = vst [vmem:[#allocation2 + $0x28] sm:$0xff] %v782
        %799 = vst [vmem:[#allocation2 + $0x30] sm:$0xff] %v783
        %800 = vst [vmem:[#allocation2 + $0x38] sm:$0xff] %v784
        %801 = vst [vmem:[#allocation2 + $0x40] sm:$0xff] %v785
        %802 = vst [vmem:[#allocation2 + $0x48] sm:$0xff] %v786
        %803 = vst [vmem:[#allocation2 + $0x50] sm:$0xff] %v787
        %804 = vst [vmem:[#allocation2 + $0x58] sm:$0xff] %v788
        %805 = vst [vmem:[#allocation2 + $0x60] sm:$0xff] %v789
        %806 = vst [vmem:[#allocation2 + $0x68] sm:$0xff] %v790
        %807 = vst [vmem:[#allocation2 + $0x70] sm:$0xff] %v791
        %808 = vst [vmem:[#allocation2 + $0x78] sm:$0xff] %v792
        %p809 = scmp.eq.s32.totalorder %s20, 2
        %p810 = pnand %p809, %p419
        %p811 = pneg %p810
        // Predicated region
        $region78: #{han_forward.11} parent=68 // pred_check
          _
        $region79: #{han_forward.11} parent=68 // pred_check_branch
          %813 = sbr.rel (%p810) target = $region81
        $region80: #{han_forward.11} parent=68 // pred_region
          %v814 = vld [vmem:[#allocation2] sm:$0xff]
          %v815 = vld [vmem:[#allocation2 + $0x8] sm:$0xff]
          %v816 = vld [vmem:[#allocation2 + $0x10] sm:$0xff]
          %v817 = vld [vmem:[#allocation2 + $0x18] sm:$0xff]
          %v818 = vld [vmem:[#allocation2 + $0x20] sm:$0xff]
          %v819 = vld [vmem:[#allocation2 + $0x28] sm:$0xff]
          %v820 = vld [vmem:[#allocation2 + $0x30] sm:$0xff]
          %v821 = vld [vmem:[#allocation2 + $0x38] sm:$0xff]
          %v822 = vld [vmem:[#allocation2 + $0x40] sm:$0xff]
          %v823 = vld [vmem:[#allocation2 + $0x48] sm:$0xff]
          %v824 = vld [vmem:[#allocation2 + $0x50] sm:$0xff]
          %v825 = vld [vmem:[#allocation2 + $0x58] sm:$0xff]
          %v826 = vld [vmem:[#allocation2 + $0x60] sm:$0xff]
          %v827 = vld [vmem:[#allocation2 + $0x68] sm:$0xff]
          %v828 = vld [vmem:[#allocation2 + $0x70] sm:$0xff]
          %v829 = vld [vmem:[#allocation2 + $0x78] sm:$0xff]
          %v830 = vmul.f32 %v814, 0.33333334
          %v831 = vmul.f32 %v815, 0.33333334
          %v832 = vmul.f32 %v816, 0.33333334
          %v833 = vmul.f32 %v817, 0.33333334
          %v834 = vmul.f32 %v818, 0.33333334
          %v835 = vmul.f32 %v819, 0.33333334
          %v836 = vmul.f32 %v820, 0.33333334
          %v837 = vmul.f32 %v821, 0.33333334
          %v838 = vmul.f32 %v822, 0.33333334
          %v839 = vmul.f32 %v823, 0.33333334
          %v840 = vmul.f32 %v824, 0.33333334
          %v841 = vmul.f32 %v825, 0.33333334
          %v842 = vmul.f32 %v826, 0.33333334
          %v843 = vmul.f32 %v827, 0.33333334
          %v844 = vmul.f32 %v828, 0.33333334
          %v845 = vmul.f32 %v829, 0.33333334
          %v846 = vld [vmem:[%s2] sm:$0x1]
          %v848 = vlaneseq
          %v849 = vshrl.u32 %v848, 7
          %v850 = vsub.s32 0, %v849
          %v851 = vrot.slane %v846, %v850
          %v853 = vadd.f32 %v830, %v851
          %v854 = vadd.f32 %v831, %v851
          %v855 = vadd.f32 %v832, %v851
          %v856 = vadd.f32 %v833, %v851
          %v857 = vadd.f32 %v834, %v851
          %v858 = vadd.f32 %v835, %v851
          %v859 = vadd.f32 %v836, %v851
          %v860 = vadd.f32 %v837, %v851
          %v861 = vadd.f32 %v838, %v851
          %v862 = vadd.f32 %v839, %v851
          %v863 = vadd.f32 %v840, %v851
          %v864 = vadd.f32 %v841, %v851
          %v865 = vadd.f32 %v842, %v851
          %v866 = vadd.f32 %v843, %v851
          %v867 = vadd.f32 %v844, %v851
          %v868 = vadd.f32 %v845, %v851
          %869 = vst [vmem:[%s415] sm:$0xff] %v853
          %870 = vst [vmem:[%s415 + $0x8] sm:$0xff] %v854
          %871 = vst [vmem:[%s415 + $0x10] sm:$0xff] %v855
          %872 = vst [vmem:[%s415 + $0x18] sm:$0xff] %v856
          %873 = vst [vmem:[%s415 + $0x20] sm:$0xff] %v857
          %874 = vst [vmem:[%s415 + $0x28] sm:$0xff] %v858
          %875 = vst [vmem:[%s415 + $0x30] sm:$0xff] %v859
          %876 = vst [vmem:[%s415 + $0x38] sm:$0xff] %v860
          %877 = vst [vmem:[%s415 + $0x40] sm:$0xff] %v861
          %878 = vst [vmem:[%s415 + $0x48] sm:$0xff] %v862
          %879 = vst [vmem:[%s415 + $0x50] sm:$0xff] %v863
          %880 = vst [vmem:[%s415 + $0x58] sm:$0xff] %v864
          %881 = vst [vmem:[%s415 + $0x60] sm:$0xff] %v865
          %882 = vst [vmem:[%s415 + $0x68] sm:$0xff] %v866
          %883 = vst [vmem:[%s415 + $0x70] sm:$0xff] %v867
          %884 = vst [vmem:[%s415 + $0x78] sm:$0xff] %v868
        $region81: #{han_forward.11} parent=68 // pred_fallthru
          _
        %s885 = smul.u32 16, %s19
        %p886 = scmp.lt.s32.totalorder %s885, 31
        %s887 = scalar_select %p886, %s885, 31
        %s888 = smul.addr %s887, 8
        %s889 = scalar_lea.vmem %s3, %s888
        // Predicated region
        $region82: #{han_forward.11} parent=68 // pred_check
          %p890 = pneg %p130
        $region83: #{han_forward.11} parent=68 // pred_check_branch
          %892 = sbr.rel (%p890) target = $region85
        $region84: #{han_forward.11} parent=68 // pred_region
          %s893 = smul.u32 16, %s19
        $region85: #{han_forward.11} parent=68 // pred_fallthru
          _
      $region69: #{han_forward.11} parent=5 // pred_fallthru
        _
      %p894 = scmp.le.s32.totalorder 2, %s9
      // Predicated region
      $region86: #{han_forward.11} parent=5 // pred_check
        %p895 = pneg %p894
      $region87: #{han_forward.11} parent=5 // pred_check_branch
        %897 = sbr.rel (%p895) target = $region89
      $region88: #{han_forward.11} parent=5 // pred_region
        %s898 = ssub.s32 %s9, 2
        // Predicated region
        $region90: #{han_forward.11} parent=88 // pred_check
          %p899 = pneg %p136
        $region91: #{han_forward.11} parent=88 // pred_check_branch
          %901 = sbr.rel (%p899) target = $region93
        $region92: #{han_forward.11} parent=88 // pred_region
          %s902 = smul.u32 16, %s22
          %p903 = scmp.lt.s32.totalorder %s902, 31
          %s904 = scalar_select %p903, %s902, 31
          %s905 = smul.addr %s904, 8
          %s906 = scalar_lea.vmem %s3, %s905
        $region93: #{han_forward.11} parent=88 // pred_fallthru
          _
      $region89: #{han_forward.11} parent=5 // pred_fallthru
        _
    $region6: #{han_forward.11} parent=1 // loop_footer
      %s13 = sadd.s32 1, %s9
    $region7: #{han_forward.11} parent=1 // loop_footer_branch
      %8 = sbr.rel target = $region3
    $region8: #{han_forward.11} parent=1 // loop_exit
      _

</llo_original>
